<compile_context>
chip_gen: v7x
topology: tpu7x:2x2x1
jax: 0.10.0
libtpu: 0.0.40
codegen_flags: <defaults>
</compile_context>

<pallas_src>
import functools
import math

import jax
import jax.numpy as jnp
from jax.experimental import pallas as pl
from jax.experimental.pallas import tpu as pltpu


# --------------------------------------------------------------------------------------
# Kernel
# --------------------------------------------------------------------------------------
def _encoder_layer_kernel(src_ref, pos_ref,           # (M, D) = (Bt*S, D)
                          wqk_ref, bqk_ref,           # (D, 2D) bf16, (1, 2D) f32
                          wv_ref, bv_ref,             # (D, D)  bf16, (1, D)  f32
                          wo_ref, bo_ref,             # (D, D)  bf16, (1, D)  f32
                          ln1_g_ref, ln1_b_ref,       # (1, D), (1, D) f32
                          wff1_ref, bff1_ref,         # (D, F)  bf16, (1, F)  f32
                          wff2_ref, bff2_ref,         # (F, D)  bf16, (1, D)  f32
                          ln2_g_ref, ln2_b_ref,       # (1, D), (1, D) f32
                          o_ref,                      # (M, D)
                          *, nhead: int, seq_len: int, eps: float = 1e-5):
    M, D = src_ref.shape
    S = seq_len
    Bt = M // S
    H = nhead
    Dh = D // H

    # residual base stays f32; q/k input formed directly in bf16 (feeds bf16 matmul anyway)
    src = src_ref[...]                                              # (M, D) f32
    qk_in = src.astype(jnp.bfloat16) + pos_ref[...].astype(jnp.bfloat16)

    # ---- fused Q/K projection (scale pre-folded into Q) + V projection --------------
    qk = jnp.dot(qk_in, wqk_ref[...],
                 preferred_element_type=jnp.float32) + bqk_ref[0]   # (M, 2D) f32
    v = jnp.dot(src.astype(jnp.bfloat16), wv_ref[...],
                preferred_element_type=jnp.float32) + bv_ref[0]     # (M, D) f32

    q = qk[:, :D].astype(jnp.bfloat16)
    k = qk[:, D:].astype(jnp.bfloat16)
    vb = v.astype(jnp.bfloat16)

    # ---- attention, one head at a time (only one (Bt,S,S) score buffer live) ----------
    # TODO(synk): KV-tiled online softmax for very long S.
    head_out = []
    for h in range(H):
        lo, hi = h * Dh, (h + 1) * Dh
        # lane slice + free leading-dim reshape (no per-(b,h) stacking)
        qh = q[:, lo:hi].reshape(Bt, S, Dh)
        kh = k[:, lo:hi].reshape(Bt, S, Dh)
        vh = vb[:, lo:hi].reshape(Bt, S, Dh)

        s = jnp.einsum('bqd,bkd->bqk', qh, kh,
                       preferred_element_type=jnp.float32)          # (Bt, S, S) f32
        s = s - jnp.max(s, axis=-1, keepdims=True)
        p = jnp.exp(s)
        l = jnp.sum(p, axis=-1, keepdims=True)                      # (Bt, S, 1) f32
        ao = jnp.einsum('bqk,bkd->bqd', p.astype(jnp.bfloat16), vh,
                        preferred_element_type=jnp.float32)         # (Bt, S, Dh) f32
        # normalize AFTER the PV matmul (S/Dh x fewer VALU ops, EUP reciprocal)
        ao = ao * pl.reciprocal(l, approx=True)
        head_out.append(ao.reshape(M, Dh))

    attn = jnp.concatenate(head_out, axis=-1) if H > 1 else head_out[0]   # (M, D) f32

    # ---- output projection -----------------------------------------------------------
    attn = jnp.dot(attn.astype(jnp.bfloat16), wo_ref[...],
                   preferred_element_type=jnp.float32) + bo_ref[0]

    # ---- residual + LayerNorm1 (dropout1 = identity) ----------------------------------
    x = src + attn
    mu = jnp.mean(x, axis=-1, keepdims=True)
    var = jnp.mean((x - mu) ** 2, axis=-1, keepdims=True)
    x = (x - mu) * jax.lax.rsqrt(var + eps) * ln1_g_ref[0] + ln1_b_ref[0]

    # ---- FFN: linear2(relu(linear1(x))) (dropout = identity) --------------------------
    h1 = jnp.dot(x.astype(jnp.bfloat16), wff1_ref[...],
                 preferred_element_type=jnp.float32) + bff1_ref[0]
    h1 = jnp.maximum(h1, 0.0)
    h2 = jnp.dot(h1.astype(jnp.bfloat16), wff2_ref[...],
                 preferred_element_type=jnp.float32) + bff2_ref[0]

    # ---- residual + LayerNorm2 (dropout2 = identity) ----------------------------------
    y = x + h2
    mu2 = jnp.mean(y, axis=-1, keepdims=True)
    var2 = jnp.mean((y - mu2) ** 2, axis=-1, keepdims=True)
    y = (y - mu2) * jax.lax.rsqrt(var2 + eps) * ln2_g_ref[0] + ln2_b_ref[0]

    o_ref[...] = y.astype(o_ref.dtype)          # single lane-dense contiguous store


# --------------------------------------------------------------------------------------
# Generation-aware VMEM budgeting / batch-tile selection
# --------------------------------------------------------------------------------------
def _vmem_bytes_estimate(Bt, S, D, F, single_buf_weights=True):
    M = Bt * S
    wbytes = 2 * (4 * D * D + 2 * D * F) * (1 if single_buf_weights else 2)  # bf16 weights
    pbytes = 2 * 4 * (2 * D + F + 8 * D)                                     # biases / LN (f32)
    io = 4 * 2 * (2 * M * D + M * D)            # double-buffered f32 src+pos in + out tile
    f32_tmp = 4 * (7 * M * D + M * F)           # src, qk(2D), v, attn, x, y + h1
    bf16_tmp = 2 * (4 * M * D + M * F)          # bf16 casts of qk_in, q, k, v, h1
    attn_tmp = 12 * Bt * S * S                  # one head's scores/probs (f32 + bf16, slack)
    return wbytes + pbytes + io + f32_tmp + bf16_tmp + attn_tmp + (6 << 20)


def _vmem_budget_and_cores():
    try:
        cap = int(pltpu.get_tpu_info().vmem_capacity_bytes)
    except Exception:
        cap = 64 << 20
    try:
        kind = jax.devices()[0].device_kind.lower()
    except Exception:
        kind = ""
    # v7x: 64 MiB VMEM / 2 TensorCores per chip; v5e/v6e: 128 MiB / 1 TC.
    two_tc = ("v7" in kind) or (cap <= (64 << 20) + 1)
    budget = max(min(int(cap * 0.75), cap - (16 << 20)), 32 << 20)
    return cap, budget, two_tc


def _pick_bt(B, S, D, F, budget, two_tc, max_rows=2048):
    cands = []
    for bt in range(1, B + 1):
        if B % bt:
            continue
        if bt * S > max_rows and bt != 1:
            continue
        if bt < B and (bt * S) % 8 != 0:        # block row dim must stay sublane-aligned
            continue
        if two_tc and B >= 2 and bt > B // 2:   # keep >=2 grid steps for both TensorCores
            continue
        cands.append(bt)
    if not cands:
        cands = [B]                             # single full-batch step is always layout-legal
    fit = [bt for bt in cands if _vmem_bytes_estimate(bt, S, D, F) <= budget]
    return max(fit) if fit else min(cands)


# --------------------------------------------------------------------------------------
# Wrapper
# --------------------------------------------------------------------------------------
def transformer_encoder_layer(src, pos, params, *, nhead):
    """src, pos: (S, B, D) float32 (PyTorch MultiheadAttention layout). Returns (S, B, D)."""
    S, B, D = src.shape
    F = params["ff1_w"].shape[0]
    assert D % nhead == 0

    # --- one-time host-side parameter preprocessing (transpose, fuse, fold scale, bf16) ---
    scale = 1.0 / math.sqrt(D // nhead)
    in_w = params["in_w"]                   # (3D, D), PyTorch in_proj_weight
    in_b = params["in_b"].reshape(-1)       # (3D,)
    w_qk = jnp.concatenate([in_w[:D] * scale, in_w[D:2 * D]], axis=0).T.astype(jnp.bfloat16)
    b_qk = jnp.concatenate([in_b[:D] * scale, in_b[D:2 * D]])[None, :].astype(jnp.float32)
    w_v = in_w[2 * D:].T.astype(jnp.bfloat16)
    b_v = in_b[2 * D:][None, :].astype(jnp.float32)
    w_o = params["out_w"].T.astype(jnp.bfloat16)
    b_o = params["out_b"].reshape(1, D).astype(jnp.float32)
    w_f1 = params["ff1_w"].T.astype(jnp.bfloat16)
    b_f1 = params["ff1_b"].reshape(1, F).astype(jnp.float32)
    w_f2 = params["ff2_w"].T.astype(jnp.bfloat16)
    b_f2 = params["ff2_b"].reshape(1, D).astype(jnp.float32)
    ln1_g = params["ln1_g"].reshape(1, D).astype(jnp.float32)
    ln1_b = params["ln1_b"].reshape(1, D).astype(jnp.float32)
    ln2_g = params["ln2_g"].reshape(1, D).astype(jnp.float32)
    ln2_b = params["ln2_b"].reshape(1, D).astype(jnp.float32)

    # host-side batch-major flatten: kernel sees plain (Bt*S, D) row slabs.
    # TODO(synk): these two transposes (one HBM pass each) disappear if the caller can
    #             provide batch-major (B, S, D) activations directly.
    src2d = jnp.transpose(src, (1, 0, 2)).reshape(B * S, D)
    pos2d = jnp.transpose(pos, (1, 0, 2)).reshape(B * S, D)

    cap, budget, two_tc = _vmem_budget_and_cores()
    Bt = _pick_bt(B, S, D, F, budget, two_tc)
    grid = (B // Bt,)
    Mrows = Bt * S
    vmem_limit = int(min(max(budget, _vmem_bytes_estimate(Bt, S, D, F)), cap - (2 << 20)))

    kernel = functools.partial(_encoder_layer_kernel, nhead=nhead, seq_len=S)

    def _const_spec(shape, wmode):
        idx = lambda i: tuple(0 for _ in shape)
        if wmode is None:
            return pl.BlockSpec(shape, idx)
        return pl.BlockSpec(shape, idx, pipeline_mode=wmode)

    def build(single_buffer_weights):
        # constant-index weights: single buffering halves their VMEM footprint
        wmode = pl.Buffered(1) if single_buffer_weights else None
        row_spec = pl.BlockSpec((Mrows, D), lambda i: (i, 0))
        in_specs = [
            row_spec, row_spec,
            _const_spec((D, 2 * D), wmode), _const_spec((1, 2 * D), wmode),
            _const_spec((D, D), wmode), _const_spec((1, D), wmode),
            _const_spec((D, D), wmode), _const_spec((1, D), wmode),
            _const_spec((1, D), wmode), _const_spec((1, D), wmode),
            _const_spec((D, F), wmode), _const_spec((1, F), wmode),
            _const_spec((F, D), wmode), _const_spec((1, D), wmode),
            _const_spec((1, D), wmode), _const_spec((1, D), wmode),
        ]
        return pl.pallas_call(
            kernel,
            out_shape=jax.ShapeDtypeStruct((B * S, D), src.dtype),
            grid=grid,
            in_specs=in_specs,
            out_specs=pl.BlockSpec((Mrows, D), lambda i: (i, 0)),
            compiler_params=pltpu.CompilerParams(
                dimension_semantics=("parallel",),
                vmem_limit_bytes=vmem_limit),
        )

    args = (src2d, pos2d, w_qk, b_qk, w_v, b_v, w_o, b_o,
            ln1_g, ln1_b, w_f1, b_f1, w_f2, b_f2, ln2_g, ln2_b)
    try:
        out2d = build(True)(*args)
    except Exception:
        # pipeline_mode=pl.Buffered(1) unsupported on this JAX build -> default buffering
        out2d = build(False)(*args)

    return jnp.transpose(out2d.reshape(B, S, D), (1, 0, 2))     # back to (S, B, D)


# --------------------------------------------------------------------------------------
# Pure-JAX reference + test
# --------------------------------------------------------------------------------------
def _reference(src, pos, params, *, nhead):
    S, B, D = src.shape
    head_dim = D // nhead
    scale = 1.0 / math.sqrt(head_dim)
    x = jnp.transpose(src, (1, 0, 2))
    p = jnp.transpose(pos, (1, 0, 2))
    qk = x + p
    in_w, in_b = params["in_w"], params["in_b"][0]
    q = qk @ in_w[:D].T + in_b[:D]
    k = qk @ in_w[D:2 * D].T + in_b[D:2 * D]
    v = x @ in_w[2 * D:].T + in_b[2 * D:]
    q = q.reshape(B, S, nhead, head_dim).transpose(0, 2, 1, 3) * scale
    k = k.reshape(B, S, nhead, head_dim).transpose(0, 2, 1, 3)
    v = v.reshape(B, S, nhead, head_dim).transpose(0, 2, 1, 3)
    s = jnp.einsum("bhqd,bhkd->bhqk", q, k)
    pattn = jax.nn.softmax(s, axis=-1)
    a = jnp.einsum("bhqk,bhkd->bhqd", pattn, v).transpose(0, 2, 1, 3).reshape(B, S, D)
    a = a @ params["out_w"].T + params["out_b"][0]
    x = x + a
    ln = lambda t, g, b: (t - t.mean(-1, keepdims=True)) / jnp.sqrt(t.var(-1, keepdims=True) + 1e-5) * g + b
    x = ln(x, params["ln1_g"][0], params["ln1_b"][0])
    h = jnp.maximum(x @ params["ff1_w"].T + params["ff1_b"][0], 0.0)
    h = h @ params["ff2_w"].T + params["ff2_b"][0]
    x = ln(x + h, params["ln2_g"][0], params["ln2_b"][0])
    return x.transpose(1, 0, 2)


if __name__ == "__main__":
    S, B, D, H, F = 8, 2, 32, 4, 64   # seq, batch, d_model, nhead, dim_feedforward

    key = jax.random.PRNGKey(0)
    ks = jax.random.split(key, 12)

    def init(k, shape, scale=0.1):
        return (scale * jax.random.normal(k, shape)).astype(jnp.float32)

    params = {
        "in_w": init(ks[0], (3 * D, D)),
        "in_b": init(ks[1], (1, 3 * D)),
        "out_w": init(ks[2], (D, D)),
        "out_b": init(ks[3], (1, D)),
        "ln1_g": jnp.ones((1, D), jnp.float32),
        "ln1_b": jnp.zeros((1, D), jnp.float32),
        "ff1_w": init(ks[4], (F, D)),
        "ff1_b": init(ks[5], (1, F)),
        "ff2_w": init(ks[6], (D, F)),
        "ff2_b": init(ks[7], (1, D)),
        "ln2_g": jnp.ones((1, D), jnp.float32),
        "ln2_b": jnp.zeros((1, D), jnp.float32),
    }

    src = jax.random.normal(ks[8], (S, B, D), jnp.float32)
    pos = jax.random.normal(ks[9], (S, B, D), jnp.float32)

    out = transformer_encoder_layer(src, pos, params, nhead=H)
    out = jax.block_until_ready(out)

    ref = _reference(src, pos, params, nhead=H)
    assert out.shape == (S, B, D)
    # bf16 matmul inputs (f32 accumulation / f32 norm & softmax stats) -> relaxed tolerance
    assert jnp.allclose(out, ref, atol=2e-2, rtol=2e-2), (
        "mismatch vs JAX reference, max abs diff = %e" % float(jnp.max(jnp.abs(out - ref))))

    print("KERNEL_OK")
</pallas_src>

<mosaic_0001>
module attributes {stable_mosaic.version = 11 : i64} {
  func.func @_encoder_layer_kernel(%arg0: i32, %arg1: memref<8x32xf32, #tpu.memory_space<vmem>>, %arg2: memref<8x32xf32, #tpu.memory_space<vmem>>, %arg3: memref<32x64xbf16, #tpu.memory_space<vmem>>, %arg4: memref<1x64xf32, #tpu.memory_space<vmem>>, %arg5: memref<32x32xbf16, #tpu.memory_space<vmem>>, %arg6: memref<1x32xf32, #tpu.memory_space<vmem>>, %arg7: memref<32x32xbf16, #tpu.memory_space<vmem>>, %arg8: memref<1x32xf32, #tpu.memory_space<vmem>>, %arg9: memref<1x32xf32, #tpu.memory_space<vmem>>, %arg10: memref<1x32xf32, #tpu.memory_space<vmem>>, %arg11: memref<32x64xbf16, #tpu.memory_space<vmem>>, %arg12: memref<1x64xf32, #tpu.memory_space<vmem>>, %arg13: memref<64x32xbf16, #tpu.memory_space<vmem>>, %arg14: memref<1x32xf32, #tpu.memory_space<vmem>>, %arg15: memref<1x32xf32, #tpu.memory_space<vmem>>, %arg16: memref<1x32xf32, #tpu.memory_space<vmem>>, %arg17: memref<8x32xf32, #tpu.memory_space<vmem>>) attributes {dimension_semantics = [#tpu.dimension_semantics<parallel>], iteration_bounds = array<i64: 2>, scalar_prefetch = 0 : i64, scratch_operands = 0 : i64, tpu.core_type = #tpu.core_type<tc>, window_params = [{transform_indices = @transform_0, window_bounds = array<i64: 8, 32>}, {transform_indices = @transform_1, window_bounds = array<i64: 8, 32>}, {pipeline_mode = #tpu.pipeline_mode<synchronous>, transform_indices = @transform_2, window_bounds = array<i64: 32, 64>}, {pipeline_mode = #tpu.pipeline_mode<synchronous>, transform_indices = @transform_3, window_bounds = array<i64: 1, 64>}, {pipeline_mode = #tpu.pipeline_mode<synchronous>, transform_indices = @transform_4, window_bounds = array<i64: 32, 32>}, {pipeline_mode = #tpu.pipeline_mode<synchronous>, transform_indices = @transform_5, window_bounds = array<i64: 1, 32>}, {pipeline_mode = #tpu.pipeline_mode<synchronous>, transform_indices = @transform_6, window_bounds = array<i64: 32, 32>}, {pipeline_mode = #tpu.pipeline_mode<synchronous>, transform_indices = @transform_7, window_bounds = array<i64: 1, 32>}, {pipeline_mode = #tpu.pipeline_mode<synchronous>, transform_indices = @transform_8, window_bounds = array<i64: 1, 32>}, {pipeline_mode = #tpu.pipeline_mode<synchronous>, transform_indices = @transform_9, window_bounds = array<i64: 1, 32>}, {pipeline_mode = #tpu.pipeline_mode<synchronous>, transform_indices = @transform_10, window_bounds = array<i64: 32, 64>}, {pipeline_mode = #tpu.pipeline_mode<synchronous>, transform_indices = @transform_11, window_bounds = array<i64: 1, 64>}, {pipeline_mode = #tpu.pipeline_mode<synchronous>, transform_indices = @transform_12, window_bounds = array<i64: 64, 32>}, {pipeline_mode = #tpu.pipeline_mode<synchronous>, transform_indices = @transform_13, window_bounds = array<i64: 1, 32>}, {pipeline_mode = #tpu.pipeline_mode<synchronous>, transform_indices = @transform_14, window_bounds = array<i64: 1, 32>}, {pipeline_mode = #tpu.pipeline_mode<synchronous>, transform_indices = @transform_15, window_bounds = array<i64: 1, 32>}, {transform_indices = @transform_16, window_bounds = array<i64: 8, 32>}]} {
    %c0 = arith.constant 0 : index
    %c0_0 = arith.constant 0 : index
    %0 = vector.load %arg1[%c0, %c0_0] : memref<8x32xf32, #tpu.memory_space<vmem>>, vector<8x32xf32>
    %1 = arith.truncf %0 : vector<8x32xf32> to vector<8x32xbf16>
    %c0_1 = arith.constant 0 : index
    %c0_2 = arith.constant 0 : index
    %2 = vector.load %arg2[%c0_1, %c0_2] : memref<8x32xf32, #tpu.memory_space<vmem>>, vector<8x32xf32>
    %3 = arith.truncf %2 : vector<8x32xf32> to vector<8x32xbf16>
    %4 = arith.addf %1, %3 : vector<8x32xbf16>
    %c0_3 = arith.constant 0 : index
    %c0_4 = arith.constant 0 : index
    %5 = vector.load %arg3[%c0_3, %c0_4] : memref<32x64xbf16, #tpu.memory_space<vmem>>, vector<32x64xbf16>
    %cst = arith.constant dense<0.000000e+00> : vector<8x64xf32>
    %6 = tpu.matmul %4, %5, %cst {dimension_numbers = #tpu.dot_dimension_numbers<[1], [0], [0], [1], [0, 0, 1, 1], [], []>} : vector<8x32xbf16>, vector<32x64xbf16>, vector<8x64xf32> -> vector<8x64xf32>
    %c0_5 = arith.constant 0 : index
    %c0_6 = arith.constant 0 : index
    %7 = vector.load %arg4[%c0_5, %c0_6] : memref<1x64xf32, #tpu.memory_space<vmem>>, vector<1x64xf32>
    %8 = vector.shape_cast %7 : vector<1x64xf32> to vector<64xf32>
    %9 = vector.shape_cast %8 : vector<64xf32> to vector<1x64xf32>
    %10 = vector.broadcast %9 : vector<1x64xf32> to vector<8x64xf32>
    %11 = arith.addf %6, %10 : vector<8x64xf32>
    %12 = arith.truncf %0 : vector<8x32xf32> to vector<8x32xbf16>
    %c0_7 = arith.constant 0 : index
    %c0_8 = arith.constant 0 : index
    %13 = vector.load %arg5[%c0_7, %c0_8] : memref<32x32xbf16, #tpu.memory_space<vmem>>, vector<32x32xbf16>
    %cst_9 = arith.constant dense<0.000000e+00> : vector<8x32xf32>
    %14 = tpu.matmul %12, %13, %cst_9 {dimension_numbers = #tpu.dot_dimension_numbers<[1], [0], [0], [1], [0, 0, 1, 1], [], []>} : vector<8x32xbf16>, vector<32x32xbf16>, vector<8x32xf32> -> vector<8x32xf32>
    %c0_10 = arith.constant 0 : index
    %c0_11 = arith.constant 0 : index
    %15 = vector.load %arg6[%c0_10, %c0_11] : memref<1x32xf32, #tpu.memory_space<vmem>>, vector<1x32xf32>
    %16 = vector.shape_cast %15 : vector<1x32xf32> to vector<32xf32>
    %17 = vector.shape_cast %16 : vector<32xf32> to vector<1x32xf32>
    %18 = vector.broadcast %17 : vector<1x32xf32> to vector<8x32xf32>
    %19 = arith.addf %14, %18 : vector<8x32xf32>
    %20 = vector.extract_strided_slice %11 {offsets = [0, 0], sizes = [8, 32], strides = [1, 1]} : vector<8x64xf32> to vector<8x32xf32>
    %21 = arith.truncf %20 : vector<8x32xf32> to vector<8x32xbf16>
    %22 = vector.extract_strided_slice %11 {offsets = [0, 32], sizes = [8, 32], strides = [1, 1]} : vector<8x64xf32> to vector<8x32xf32>
    %23 = arith.truncf %22 : vector<8x32xf32> to vector<8x32xbf16>
    %24 = arith.truncf %19 : vector<8x32xf32> to vector<8x32xbf16>
    %25 = vector.extract_strided_slice %21 {offsets = [0, 0], sizes = [8, 8], strides = [1, 1]} : vector<8x32xbf16> to vector<8x8xbf16>
    %26 = vector.shape_cast %25 : vector<8x8xbf16> to vector<1x8x8xbf16>
    %27 = vector.extract_strided_slice %23 {offsets = [0, 0], sizes = [8, 8], strides = [1, 1]} : vector<8x32xbf16> to vector<8x8xbf16>
    %28 = vector.shape_cast %27 : vector<8x8xbf16> to vector<1x8x8xbf16>
    %29 = vector.extract_strided_slice %24 {offsets = [0, 0], sizes = [8, 8], strides = [1, 1]} : vector<8x32xbf16> to vector<8x8xbf16>
    %30 = vector.shape_cast %29 : vector<8x8xbf16> to vector<1x8x8xbf16>
    "tpu.trace_start"() <{level = 10 : i32, message = "bqd,bkd->bqk"}> : () -> ()
    %cst_12 = arith.constant dense<0.000000e+00> : vector<1x8x8xf32>
    %31 = tpu.matmul %26, %28, %cst_12 {dimension_numbers = #tpu.dot_dimension_numbers<[2], [2], [1], [1], [0, 0, 0, 1, 1, 1], [0], [0]>} : vector<1x8x8xbf16>, vector<1x8x8xbf16>, vector<1x8x8xf32> -> vector<1x8x8xf32>
    "tpu.trace_stop"() : () -> ()
    %cst_13 = arith.constant dense<0xFF800000> : vector<1x8xf32>
    %32 = vector.multi_reduction <maximumf>, %31, %cst_13 [2] : vector<1x8x8xf32> to vector<1x8xf32>
    %33 = vector.shape_cast %32 : vector<1x8xf32> to vector<1x8x1xf32>
    %34 = vector.broadcast %33 : vector<1x8x1xf32> to vector<1x8x8xf32>
    %35 = arith.subf %31, %34 : vector<1x8x8xf32>
    %36 = math.exp %35 : vector<1x8x8xf32>
    %cst_14 = arith.constant dense<0.000000e+00> : vector<1x8xf32>
    %37 = vector.multi_reduction <add>, %36, %cst_14 [2] : vector<1x8x8xf32> to vector<1x8xf32>
    %38 = vector.shape_cast %37 : vector<1x8xf32> to vector<1x8x1xf32>
    %39 = arith.truncf %36 : vector<1x8x8xf32> to vector<1x8x8xbf16>
    "tpu.trace_start"() <{level = 10 : i32, message = "bqk,bkd->bqd"}> : () -> ()
    %cst_15 = arith.constant dense<0.000000e+00> : vector<1x8x8xf32>
    %40 = tpu.matmul %39, %30, %cst_15 {dimension_numbers = #tpu.dot_dimension_numbers<[2], [1], [1], [2], [0, 0, 0, 1, 1, 2], [0], [0]>} : vector<1x8x8xbf16>, vector<1x8x8xbf16>, vector<1x8x8xf32> -> vector<1x8x8xf32>
    "tpu.trace_stop"() : () -> ()
    %41 = tpu.reciprocal %38 {approx = true} : vector<1x8x1xf32> -> vector<1x8x1xf32>
    %42 = vector.broadcast %41 : vector<1x8x1xf32> to vector<1x8x8xf32>
    %43 = arith.mulf %40, %42 : vector<1x8x8xf32>
    %44 = vector.shape_cast %43 : vector<1x8x8xf32> to vector<8x8xf32>
    %45 = vector.extract_strided_slice %21 {offsets = [0, 8], sizes = [8, 8], strides = [1, 1]} : vector<8x32xbf16> to vector<8x8xbf16>
    %46 = vector.shape_cast %45 : vector<8x8xbf16> to vector<1x8x8xbf16>
    %47 = vector.extract_strided_slice %23 {offsets = [0, 8], sizes = [8, 8], strides = [1, 1]} : vector<8x32xbf16> to vector<8x8xbf16>
    %48 = vector.shape_cast %47 : vector<8x8xbf16> to vector<1x8x8xbf16>
    %49 = vector.extract_strided_slice %24 {offsets = [0, 8], sizes = [8, 8], strides = [1, 1]} : vector<8x32xbf16> to vector<8x8xbf16>
    %50 = vector.shape_cast %49 : vector<8x8xbf16> to vector<1x8x8xbf16>
    "tpu.trace_start"() <{level = 10 : i32, message = "bqd,bkd->bqk"}> : () -> ()
    %cst_16 = arith.constant dense<0.000000e+00> : vector<1x8x8xf32>
    %51 = tpu.matmul %46, %48, %cst_16 {dimension_numbers = #tpu.dot_dimension_numbers<[2], [2], [1], [1], [0, 0, 0, 1, 1, 1], [0], [0]>} : vector<1x8x8xbf16>, vector<1x8x8xbf16>, vector<1x8x8xf32> -> vector<1x8x8xf32>
    "tpu.trace_stop"() : () -> ()
    %cst_17 = arith.constant dense<0xFF800000> : vector<1x8xf32>
    %52 = vector.multi_reduction <maximumf>, %51, %cst_17 [2] : vector<1x8x8xf32> to vector<1x8xf32>
    %53 = vector.shape_cast %52 : vector<1x8xf32> to vector<1x8x1xf32>
    %54 = vector.broadcast %53 : vector<1x8x1xf32> to vector<1x8x8xf32>
    %55 = arith.subf %51, %54 : vector<1x8x8xf32>
    %56 = math.exp %55 : vector<1x8x8xf32>
    %cst_18 = arith.constant dense<0.000000e+00> : vector<1x8xf32>
    %57 = vector.multi_reduction <add>, %56, %cst_18 [2] : vector<1x8x8xf32> to vector<1x8xf32>
    %58 = vector.shape_cast %57 : vector<1x8xf32> to vector<1x8x1xf32>
    %59 = arith.truncf %56 : vector<1x8x8xf32> to vector<1x8x8xbf16>
    "tpu.trace_start"() <{level = 10 : i32, message = "bqk,bkd->bqd"}> : () -> ()
    %cst_19 = arith.constant dense<0.000000e+00> : vector<1x8x8xf32>
    %60 = tpu.matmul %59, %50, %cst_19 {dimension_numbers = #tpu.dot_dimension_numbers<[2], [1], [1], [2], [0, 0, 0, 1, 1, 2], [0], [0]>} : vector<1x8x8xbf16>, vector<1x8x8xbf16>, vector<1x8x8xf32> -> vector<1x8x8xf32>
    "tpu.trace_stop"() : () -> ()
    %61 = tpu.reciprocal %58 {approx = true} : vector<1x8x1xf32> -> vector<1x8x1xf32>
    %62 = vector.broadcast %61 : vector<1x8x1xf32> to vector<1x8x8xf32>
    %63 = arith.mulf %60, %62 : vector<1x8x8xf32>
    %64 = vector.shape_cast %63 : vector<1x8x8xf32> to vector<8x8xf32>
    %65 = vector.extract_strided_slice %21 {offsets = [0, 16], sizes = [8, 8], strides = [1, 1]} : vector<8x32xbf16> to vector<8x8xbf16>
    %66 = vector.shape_cast %65 : vector<8x8xbf16> to vector<1x8x8xbf16>
    %67 = vector.extract_strided_slice %23 {offsets = [0, 16], sizes = [8, 8], strides = [1, 1]} : vector<8x32xbf16> to vector<8x8xbf16>
    %68 = vector.shape_cast %67 : vector<8x8xbf16> to vector<1x8x8xbf16>
    %69 = vector.extract_strided_slice %24 {offsets = [0, 16], sizes = [8, 8], strides = [1, 1]} : vector<8x32xbf16> to vector<8x8xbf16>
    %70 = vector.shape_cast %69 : vector<8x8xbf16> to vector<1x8x8xbf16>
    "tpu.trace_start"() <{level = 10 : i32, message = "bqd,bkd->bqk"}> : () -> ()
    %cst_20 = arith.constant dense<0.000000e+00> : vector<1x8x8xf32>
    %71 = tpu.matmul %66, %68, %cst_20 {dimension_numbers = #tpu.dot_dimension_numbers<[2], [2], [1], [1], [0, 0, 0, 1, 1, 1], [0], [0]>} : vector<1x8x8xbf16>, vector<1x8x8xbf16>, vector<1x8x8xf32> -> vector<1x8x8xf32>
    "tpu.trace_stop"() : () -> ()
    %cst_21 = arith.constant dense<0xFF800000> : vector<1x8xf32>
    %72 = vector.multi_reduction <maximumf>, %71, %cst_21 [2] : vector<1x8x8xf32> to vector<1x8xf32>
    %73 = vector.shape_cast %72 : vector<1x8xf32> to vector<1x8x1xf32>
    %74 = vector.broadcast %73 : vector<1x8x1xf32> to vector<1x8x8xf32>
    %75 = arith.subf %71, %74 : vector<1x8x8xf32>
    %76 = math.exp %75 : vector<1x8x8xf32>
    %cst_22 = arith.constant dense<0.000000e+00> : vector<1x8xf32>
    %77 = vector.multi_reduction <add>, %76, %cst_22 [2] : vector<1x8x8xf32> to vector<1x8xf32>
    %78 = vector.shape_cast %77 : vector<1x8xf32> to vector<1x8x1xf32>
    %79 = arith.truncf %76 : vector<1x8x8xf32> to vector<1x8x8xbf16>
    "tpu.trace_start"() <{level = 10 : i32, message = "bqk,bkd->bqd"}> : () -> ()
    %cst_23 = arith.constant dense<0.000000e+00> : vector<1x8x8xf32>
    %80 = tpu.matmul %79, %70, %cst_23 {dimension_numbers = #tpu.dot_dimension_numbers<[2], [1], [1], [2], [0, 0, 0, 1, 1, 2], [0], [0]>} : vector<1x8x8xbf16>, vector<1x8x8xbf16>, vector<1x8x8xf32> -> vector<1x8x8xf32>
    "tpu.trace_stop"() : () -> ()
    %81 = tpu.reciprocal %78 {approx = true} : vector<1x8x1xf32> -> vector<1x8x1xf32>
    %82 = vector.broadcast %81 : vector<1x8x1xf32> to vector<1x8x8xf32>
    %83 = arith.mulf %80, %82 : vector<1x8x8xf32>
    %84 = vector.shape_cast %83 : vector<1x8x8xf32> to vector<8x8xf32>
    %85 = vector.extract_strided_slice %21 {offsets = [0, 24], sizes = [8, 8], strides = [1, 1]} : vector<8x32xbf16> to vector<8x8xbf16>
    %86 = vector.shape_cast %85 : vector<8x8xbf16> to vector<1x8x8xbf16>
    %87 = vector.extract_strided_slice %23 {offsets = [0, 24], sizes = [8, 8], strides = [1, 1]} : vector<8x32xbf16> to vector<8x8xbf16>
    %88 = vector.shape_cast %87 : vector<8x8xbf16> to vector<1x8x8xbf16>
    %89 = vector.extract_strided_slice %24 {offsets = [0, 24], sizes = [8, 8], strides = [1, 1]} : vector<8x32xbf16> to vector<8x8xbf16>
    %90 = vector.shape_cast %89 : vector<8x8xbf16> to vector<1x8x8xbf16>
    "tpu.trace_start"() <{level = 10 : i32, message = "bqd,bkd->bqk"}> : () -> ()
    %cst_24 = arith.constant dense<0.000000e+00> : vector<1x8x8xf32>
    %91 = tpu.matmul %86, %88, %cst_24 {dimension_numbers = #tpu.dot_dimension_numbers<[2], [2], [1], [1], [0, 0, 0, 1, 1, 1], [0], [0]>} : vector<1x8x8xbf16>, vector<1x8x8xbf16>, vector<1x8x8xf32> -> vector<1x8x8xf32>
    "tpu.trace_stop"() : () -> ()
    %cst_25 = arith.constant dense<0xFF800000> : vector<1x8xf32>
    %92 = vector.multi_reduction <maximumf>, %91, %cst_25 [2] : vector<1x8x8xf32> to vector<1x8xf32>
    %93 = vector.shape_cast %92 : vector<1x8xf32> to vector<1x8x1xf32>
    %94 = vector.broadcast %93 : vector<1x8x1xf32> to vector<1x8x8xf32>
    %95 = arith.subf %91, %94 : vector<1x8x8xf32>
    %96 = math.exp %95 : vector<1x8x8xf32>
    %cst_26 = arith.constant dense<0.000000e+00> : vector<1x8xf32>
    %97 = vector.multi_reduction <add>, %96, %cst_26 [2] : vector<1x8x8xf32> to vector<1x8xf32>
    %98 = vector.shape_cast %97 : vector<1x8xf32> to vector<1x8x1xf32>
    %99 = arith.truncf %96 : vector<1x8x8xf32> to vector<1x8x8xbf16>
    "tpu.trace_start"() <{level = 10 : i32, message = "bqk,bkd->bqd"}> : () -> ()
    %cst_27 = arith.constant dense<0.000000e+00> : vector<1x8x8xf32>
    %100 = tpu.matmul %99, %90, %cst_27 {dimension_numbers = #tpu.dot_dimension_numbers<[2], [1], [1], [2], [0, 0, 0, 1, 1, 2], [0], [0]>} : vector<1x8x8xbf16>, vector<1x8x8xbf16>, vector<1x8x8xf32> -> vector<1x8x8xf32>
    "tpu.trace_stop"() : () -> ()
    %101 = tpu.reciprocal %98 {approx = true} : vector<1x8x1xf32> -> vector<1x8x1xf32>
    %102 = vector.broadcast %101 : vector<1x8x1xf32> to vector<1x8x8xf32>
    %103 = arith.mulf %100, %102 : vector<1x8x8xf32>
    %104 = vector.shape_cast %103 : vector<1x8x8xf32> to vector<8x8xf32>
    %105 = tpu.concatenate %44, %64, %84, %104 in 1 : vector<8x8xf32>, vector<8x8xf32>, vector<8x8xf32>, vector<8x8xf32> -> vector<8x32xf32>
    %106 = arith.truncf %105 : vector<8x32xf32> to vector<8x32xbf16>
    %c0_28 = arith.constant 0 : index
    %c0_29 = arith.constant 0 : index
    %107 = vector.load %arg7[%c0_28, %c0_29] : memref<32x32xbf16, #tpu.memory_space<vmem>>, vector<32x32xbf16>
    %cst_30 = arith.constant dense<0.000000e+00> : vector<8x32xf32>
    %108 = tpu.matmul %106, %107, %cst_30 {dimension_numbers = #tpu.dot_dimension_numbers<[1], [0], [0], [1], [0, 0, 1, 1], [], []>} : vector<8x32xbf16>, vector<32x32xbf16>, vector<8x32xf32> -> vector<8x32xf32>
    %c0_31 = arith.constant 0 : index
    %c0_32 = arith.constant 0 : index
    %109 = vector.load %arg8[%c0_31, %c0_32] : memref<1x32xf32, #tpu.memory_space<vmem>>, vector<1x32xf32>
    %110 = vector.shape_cast %109 : vector<1x32xf32> to vector<32xf32>
    %111 = vector.shape_cast %110 : vector<32xf32> to vector<1x32xf32>
    %112 = vector.broadcast %111 : vector<1x32xf32> to vector<8x32xf32>
    %113 = arith.addf %108, %112 : vector<8x32xf32>
    %114 = arith.addf %0, %113 : vector<8x32xf32>
    %cst_33 = arith.constant dense<0.000000e+00> : vector<8xf32>
    %115 = vector.multi_reduction <add>, %114, %cst_33 [1] : vector<8x32xf32> to vector<8xf32>
    %116 = vector.shape_cast %115 : vector<8xf32> to vector<8x1xf32>
    %cst_34 = arith.constant 3.200000e+01 : f32
    %117 = vector.broadcast %cst_34 : f32 to vector<8x1xf32>
    %118 = arith.divf %116, %117 : vector<8x1xf32>
    %119 = vector.broadcast %118 : vector<8x1xf32> to vector<8x32xf32>
    %120 = arith.subf %114, %119 : vector<8x32xf32>
    %121 = arith.mulf %120, %120 : vector<8x32xf32>
    %cst_35 = arith.constant dense<0.000000e+00> : vector<8xf32>
    %122 = vector.multi_reduction <add>, %121, %cst_35 [1] : vector<8x32xf32> to vector<8xf32>
    %123 = vector.shape_cast %122 : vector<8xf32> to vector<8x1xf32>
    %cst_36 = arith.constant 3.200000e+01 : f32
    %124 = vector.broadcast %cst_36 : f32 to vector<8x1xf32>
    %125 = arith.divf %123, %124 : vector<8x1xf32>
    %126 = vector.broadcast %118 : vector<8x1xf32> to vector<8x32xf32>
    %127 = arith.subf %114, %126 : vector<8x32xf32>
    %cst_37 = arith.constant 9.99999974E-6 : f32
    %128 = vector.broadcast %cst_37 : f32 to vector<8x1xf32>
    %129 = arith.addf %125, %128 : vector<8x1xf32>
    %130 = math.rsqrt %129 : vector<8x1xf32>
    %131 = vector.broadcast %130 : vector<8x1xf32> to vector<8x32xf32>
    %132 = arith.mulf %127, %131 : vector<8x32xf32>
    %c0_38 = arith.constant 0 : index
    %c0_39 = arith.constant 0 : index
    %133 = vector.load %arg9[%c0_38, %c0_39] : memref<1x32xf32, #tpu.memory_space<vmem>>, vector<1x32xf32>
    %134 = vector.shape_cast %133 : vector<1x32xf32> to vector<32xf32>
    %135 = vector.shape_cast %134 : vector<32xf32> to vector<1x32xf32>
    %136 = vector.broadcast %135 : vector<1x32xf32> to vector<8x32xf32>
    %137 = arith.mulf %132, %136 : vector<8x32xf32>
    %c0_40 = arith.constant 0 : index
    %c0_41 = arith.constant 0 : index
    %138 = vector.load %arg10[%c0_40, %c0_41] : memref<1x32xf32, #tpu.memory_space<vmem>>, vector<1x32xf32>
    %139 = vector.shape_cast %138 : vector<1x32xf32> to vector<32xf32>
    %140 = vector.shape_cast %139 : vector<32xf32> to vector<1x32xf32>
    %141 = vector.broadcast %140 : vector<1x32xf32> to vector<8x32xf32>
    %142 = arith.addf %137, %141 : vector<8x32xf32>
    %143 = arith.truncf %142 : vector<8x32xf32> to vector<8x32xbf16>
    %c0_42 = arith.constant 0 : index
    %c0_43 = arith.constant 0 : index
    %144 = vector.load %arg11[%c0_42, %c0_43] : memref<32x64xbf16, #tpu.memory_space<vmem>>, vector<32x64xbf16>
    %cst_44 = arith.constant dense<0.000000e+00> : vector<8x64xf32>
    %145 = tpu.matmul %143, %144, %cst_44 {dimension_numbers = #tpu.dot_dimension_numbers<[1], [0], [0], [1], [0, 0, 1, 1], [], []>} : vector<8x32xbf16>, vector<32x64xbf16>, vector<8x64xf32> -> vector<8x64xf32>
    %c0_45 = arith.constant 0 : index
    %c0_46 = arith.constant 0 : index
    %146 = vector.load %arg12[%c0_45, %c0_46] : memref<1x64xf32, #tpu.memory_space<vmem>>, vector<1x64xf32>
    %147 = vector.shape_cast %146 : vector<1x64xf32> to vector<64xf32>
    %148 = vector.shape_cast %147 : vector<64xf32> to vector<1x64xf32>
    %149 = vector.broadcast %148 : vector<1x64xf32> to vector<8x64xf32>
    %150 = arith.addf %145, %149 : vector<8x64xf32>
    %cst_47 = arith.constant 0.000000e+00 : f32
    %151 = vector.broadcast %cst_47 : f32 to vector<8x64xf32>
    %152 = arith.maximumf %150, %151 : vector<8x64xf32>
    %153 = arith.truncf %152 : vector<8x64xf32> to vector<8x64xbf16>
    %c0_48 = arith.constant 0 : index
    %c0_49 = arith.constant 0 : index
    %154 = vector.load %arg13[%c0_48, %c0_49] : memref<64x32xbf16, #tpu.memory_space<vmem>>, vector<64x32xbf16>
    %cst_50 = arith.constant dense<0.000000e+00> : vector<8x32xf32>
    %155 = tpu.matmul %153, %154, %cst_50 {dimension_numbers = #tpu.dot_dimension_numbers<[1], [0], [0], [1], [0, 0, 1, 1], [], []>} : vector<8x64xbf16>, vector<64x32xbf16>, vector<8x32xf32> -> vector<8x32xf32>
    %c0_51 = arith.constant 0 : index
    %c0_52 = arith.constant 0 : index
    %156 = vector.load %arg14[%c0_51, %c0_52] : memref<1x32xf32, #tpu.memory_space<vmem>>, vector<1x32xf32>
    %157 = vector.shape_cast %156 : vector<1x32xf32> to vector<32xf32>
    %158 = vector.shape_cast %157 : vector<32xf32> to vector<1x32xf32>
    %159 = vector.broadcast %158 : vector<1x32xf32> to vector<8x32xf32>
    %160 = arith.addf %155, %159 : vector<8x32xf32>
    %161 = arith.addf %142, %160 : vector<8x32xf32>
    %cst_53 = arith.constant dense<0.000000e+00> : vector<8xf32>
    %162 = vector.multi_reduction <add>, %161, %cst_53 [1] : vector<8x32xf32> to vector<8xf32>
    %163 = vector.shape_cast %162 : vector<8xf32> to vector<8x1xf32>
    %cst_54 = arith.constant 3.200000e+01 : f32
    %164 = vector.broadcast %cst_54 : f32 to vector<8x1xf32>
    %165 = arith.divf %163, %164 : vector<8x1xf32>
    %166 = vector.broadcast %165 : vector<8x1xf32> to vector<8x32xf32>
    %167 = arith.subf %161, %166 : vector<8x32xf32>
    %168 = arith.mulf %167, %167 : vector<8x32xf32>
    %cst_55 = arith.constant dense<0.000000e+00> : vector<8xf32>
    %169 = vector.multi_reduction <add>, %168, %cst_55 [1] : vector<8x32xf32> to vector<8xf32>
    %170 = vector.shape_cast %169 : vector<8xf32> to vector<8x1xf32>
    %cst_56 = arith.constant 3.200000e+01 : f32
    %171 = vector.broadcast %cst_56 : f32 to vector<8x1xf32>
    %172 = arith.divf %170, %171 : vector<8x1xf32>
    %173 = vector.broadcast %165 : vector<8x1xf32> to vector<8x32xf32>
    %174 = arith.subf %161, %173 : vector<8x32xf32>
    %cst_57 = arith.constant 9.99999974E-6 : f32
    %175 = vector.broadcast %cst_57 : f32 to vector<8x1xf32>
    %176 = arith.addf %172, %175 : vector<8x1xf32>
    %177 = math.rsqrt %176 : vector<8x1xf32>
    %178 = vector.broadcast %177 : vector<8x1xf32> to vector<8x32xf32>
    %179 = arith.mulf %174, %178 : vector<8x32xf32>
    %c0_58 = arith.constant 0 : index
    %c0_59 = arith.constant 0 : index
    %180 = vector.load %arg15[%c0_58, %c0_59] : memref<1x32xf32, #tpu.memory_space<vmem>>, vector<1x32xf32>
    %181 = vector.shape_cast %180 : vector<1x32xf32> to vector<32xf32>
    %182 = vector.shape_cast %181 : vector<32xf32> to vector<1x32xf32>
    %183 = vector.broadcast %182 : vector<1x32xf32> to vector<8x32xf32>
    %184 = arith.mulf %179, %183 : vector<8x32xf32>
    %c0_60 = arith.constant 0 : index
    %c0_61 = arith.constant 0 : index
    %185 = vector.load %arg16[%c0_60, %c0_61] : memref<1x32xf32, #tpu.memory_space<vmem>>, vector<1x32xf32>
    %186 = vector.shape_cast %185 : vector<1x32xf32> to vector<32xf32>
    %187 = vector.shape_cast %186 : vector<32xf32> to vector<1x32xf32>
    %188 = vector.broadcast %187 : vector<1x32xf32> to vector<8x32xf32>
    %189 = arith.addf %184, %188 : vector<8x32xf32>
    %c0_62 = arith.constant 0 : index
    %c0_63 = arith.constant 0 : index
    %190 = vector.load %arg17[%c0_62, %c0_63] : memref<8x32xf32, #tpu.memory_space<vmem>>, vector<8x32xf32>
    tpu.vector_store %arg17[%c0_62, %c0_63], %189 {strides = array<i32>} : memref<8x32xf32, #tpu.memory_space<vmem>>, vector<8x32xf32>,
    return
  }
  func.func @transform_0(%arg0: i32) -> (i32, i32) {
    %c0_i32 = arith.constant 0 : i32
    %c0_i32_0 = arith.constant 0 : i32
    return %arg0, %c0_i32 : i32, i32
  }
  func.func @transform_1(%arg0: i32) -> (i32, i32) {
    %c0_i32 = arith.constant 0 : i32
    %c0_i32_0 = arith.constant 0 : i32
    return %arg0, %c0_i32 : i32, i32
  }
  func.func @transform_2(%arg0: i32) -> (i32, i32) {
    %c0_i32 = arith.constant 0 : i32
    %c0_i32_0 = arith.constant 0 : i32
    %c0_i32_1 = arith.constant 0 : i32
    return %c0_i32, %c0_i32_0 : i32, i32
  }
  func.func @transform_3(%arg0: i32) -> (i32, i32) {
    %c0_i32 = arith.constant 0 : i32
    %c0_i32_0 = arith.constant 0 : i32
    %c0_i32_1 = arith.constant 0 : i32
    return %c0_i32, %c0_i32_0 : i32, i32
  }
  func.func @transform_4(%arg0: i32) -> (i32, i32) {
    %c0_i32 = arith.constant 0 : i32
    %c0_i32_0 = arith.constant 0 : i32
    %c0_i32_1 = arith.constant 0 : i32
    return %c0_i32, %c0_i32_0 : i32, i32
  }
  func.func @transform_5(%arg0: i32) -> (i32, i32) {
    %c0_i32 = arith.constant 0 : i32
    %c0_i32_0 = arith.constant 0 : i32
    %c0_i32_1 = arith.constant 0 : i32
    return %c0_i32, %c0_i32_0 : i32, i32
  }
  func.func @transform_6(%arg0: i32) -> (i32, i32) {
    %c0_i32 = arith.constant 0 : i32
    %c0_i32_0 = arith.constant 0 : i32
    %c0_i32_1 = arith.constant 0 : i32
    return %c0_i32, %c0_i32_0 : i32, i32
  }
  func.func @transform_7(%arg0: i32) -> (i32, i32) {
    %c0_i32 = arith.constant 0 : i32
    %c0_i32_0 = arith.constant 0 : i32
    %c0_i32_1 = arith.constant 0 : i32
    return %c0_i32, %c0_i32_0 : i32, i32
  }
  func.func @transform_8(%arg0: i32) -> (i32, i32) {
    %c0_i32 = arith.constant 0 : i32
    %c0_i32_0 = arith.constant 0 : i32
    %c0_i32_1 = arith.constant 0 : i32
    return %c0_i32, %c0_i32_0 : i32, i32
  }
  func.func @transform_9(%arg0: i32) -> (i32, i32) {
    %c0_i32 = arith.constant 0 : i32
    %c0_i32_0 = arith.constant 0 : i32
    %c0_i32_1 = arith.constant 0 : i32
    return %c0_i32, %c0_i32_0 : i32, i32
  }
  func.func @transform_10(%arg0: i32) -> (i32, i32) {
    %c0_i32 = arith.constant 0 : i32
    %c0_i32_0 = arith.constant 0 : i32
    %c0_i32_1 = arith.constant 0 : i32
    return %c0_i32, %c0_i32_0 : i32, i32
  }
  func.func @transform_11(%arg0: i32) -> (i32, i32) {
    %c0_i32 = arith.constant 0 : i32
    %c0_i32_0 = arith.constant 0 : i32
    %c0_i32_1 = arith.constant 0 : i32
    return %c0_i32, %c0_i32_0 : i32, i32
  }
  func.func @transform_12(%arg0: i32) -> (i32, i32) {
    %c0_i32 = arith.constant 0 : i32
    %c0_i32_0 = arith.constant 0 : i32
    %c0_i32_1 = arith.constant 0 : i32
    return %c0_i32, %c0_i32_0 : i32, i32
  }
  func.func @transform_13(%arg0: i32) -> (i32, i32) {
    %c0_i32 = arith.constant 0 : i32
    %c0_i32_0 = arith.constant 0 : i32
    %c0_i32_1 = arith.constant 0 : i32
    return %c0_i32, %c0_i32_0 : i32, i32
  }
  func.func @transform_14(%arg0: i32) -> (i32, i32) {
    %c0_i32 = arith.constant 0 : i32
    %c0_i32_0 = arith.constant 0 : i32
    %c0_i32_1 = arith.constant 0 : i32
    return %c0_i32, %c0_i32_0 : i32, i32
  }
  func.func @transform_15(%arg0: i32) -> (i32, i32) {
    %c0_i32 = arith.constant 0 : i32
    %c0_i32_0 = arith.constant 0 : i32
    %c0_i32_1 = arith.constant 0 : i32
    return %c0_i32, %c0_i32_0 : i32, i32
  }
  func.func @transform_16(%arg0: i32) -> (i32, i32) {
    %c0_i32 = arith.constant 0 : i32
    %c0_i32_0 = arith.constant 0 : i32
    return %arg0, %c0_i32 : i32, i32
  }
}

module attributes {stable_mosaic.version = 11 : i64} {
  func.func @_encoder_layer_kernel(%arg0: i32, %arg1: memref<8x32xf32, #tpu.memory_space<vmem>>, %arg2: memref<8x32xf32, #tpu.memory_space<vmem>>, %arg3: memref<32x64xbf16, #tpu.memory_space<vmem>>, %arg4: memref<1x64xf32, #tpu.memory_space<vmem>>, %arg5: memref<32x32xbf16, #tpu.memory_space<vmem>>, %arg6: memref<1x32xf32, #tpu.memory_space<vmem>>, %arg7: memref<32x32xbf16, #tpu.memory_space<vmem>>, %arg8: memref<1x32xf32, #tpu.memory_space<vmem>>, %arg9: memref<1x32xf32, #tpu.memory_space<vmem>>, %arg10: memref<1x32xf32, #tpu.memory_space<vmem>>, %arg11: memref<32x64xbf16, #tpu.memory_space<vmem>>, %arg12: memref<1x64xf32, #tpu.memory_space<vmem>>, %arg13: memref<64x32xbf16, #tpu.memory_space<vmem>>, %arg14: memref<1x32xf32, #tpu.memory_space<vmem>>, %arg15: memref<1x32xf32, #tpu.memory_space<vmem>>, %arg16: memref<1x32xf32, #tpu.memory_space<vmem>>, %arg17: memref<8x32xf32, #tpu.memory_space<vmem>>) attributes {dimension_semantics = [#tpu.dimension_semantics<parallel>], iteration_bounds = array<i64: 2>, scalar_prefetch = 0 : i64, scratch_operands = 0 : i64, tpu.core_type = #tpu.core_type<tc>, window_params = [{transform_indices = @transform_0, window_bounds = array<i64: 8, 32>}, {transform_indices = @transform_1, window_bounds = array<i64: 8, 32>}, {pipeline_mode = #tpu.pipeline_mode<synchronous>, transform_indices = @transform_2, window_bounds = array<i64: 32, 64>}, {pipeline_mode = #tpu.pipeline_mode<synchronous>, transform_indices = @transform_3, window_bounds = array<i64: 1, 64>}, {pipeline_mode = #tpu.pipeline_mode<synchronous>, transform_indices = @transform_4, window_bounds = array<i64: 32, 32>}, {pipeline_mode = #tpu.pipeline_mode<synchronous>, transform_indices = @transform_5, window_bounds = array<i64: 1, 32>}, {pipeline_mode = #tpu.pipeline_mode<synchronous>, transform_indices = @transform_6, window_bounds = array<i64: 32, 32>}, {pipeline_mode = #tpu.pipeline_mode<synchronous>, transform_indices = @transform_7, window_bounds = array<i64: 1, 32>}, {pipeline_mode = #tpu.pipeline_mode<synchronous>, transform_indices = @transform_8, window_bounds = array<i64: 1, 32>}, {pipeline_mode = #tpu.pipeline_mode<synchronous>, transform_indices = @transform_9, window_bounds = array<i64: 1, 32>}, {pipeline_mode = #tpu.pipeline_mode<synchronous>, transform_indices = @transform_10, window_bounds = array<i64: 32, 64>}, {pipeline_mode = #tpu.pipeline_mode<synchronous>, transform_indices = @transform_11, window_bounds = array<i64: 1, 64>}, {pipeline_mode = #tpu.pipeline_mode<synchronous>, transform_indices = @transform_12, window_bounds = array<i64: 64, 32>}, {pipeline_mode = #tpu.pipeline_mode<synchronous>, transform_indices = @transform_13, window_bounds = array<i64: 1, 32>}, {pipeline_mode = #tpu.pipeline_mode<synchronous>, transform_indices = @transform_14, window_bounds = array<i64: 1, 32>}, {pipeline_mode = #tpu.pipeline_mode<synchronous>, transform_indices = @transform_15, window_bounds = array<i64: 1, 32>}, {transform_indices = @transform_16, window_bounds = array<i64: 8, 32>}]} {
    %c0 = arith.constant 0 : index
    %c0_0 = arith.constant 0 : index
    %0 = vector.load %arg1[%c0, %c0_0] : memref<8x32xf32, #tpu.memory_space<vmem>>, vector<8x32xf32>
    %1 = arith.truncf %0 : vector<8x32xf32> to vector<8x32xbf16>
    %c0_1 = arith.constant 0 : index
    %c0_2 = arith.constant 0 : index
    %2 = vector.load %arg2[%c0_1, %c0_2] : memref<8x32xf32, #tpu.memory_space<vmem>>, vector<8x32xf32>
    %3 = arith.truncf %2 : vector<8x32xf32> to vector<8x32xbf16>
    %4 = arith.addf %1, %3 : vector<8x32xbf16>
    %c0_3 = arith.constant 0 : index
    %c0_4 = arith.constant 0 : index
    %5 = vector.load %arg3[%c0_3, %c0_4] : memref<32x64xbf16, #tpu.memory_space<vmem>>, vector<32x64xbf16>
    %cst = arith.constant dense<0.000000e+00> : vector<8x64xf32>
    %6 = tpu.matmul %4, %5, %cst {dimension_numbers = #tpu.dot_dimension_numbers<[1], [0], [0], [1], [0, 0, 1, 1], [], []>} : vector<8x32xbf16>, vector<32x64xbf16>, vector<8x64xf32> -> vector<8x64xf32>
    %c0_5 = arith.constant 0 : index
    %c0_6 = arith.constant 0 : index
    %7 = vector.load %arg4[%c0_5, %c0_6] : memref<1x64xf32, #tpu.memory_space<vmem>>, vector<1x64xf32>
    %8 = vector.shape_cast %7 : vector<1x64xf32> to vector<64xf32>
    %9 = vector.shape_cast %8 : vector<64xf32> to vector<1x64xf32>
    %10 = vector.broadcast %9 : vector<1x64xf32> to vector<8x64xf32>
    %11 = arith.addf %6, %10 : vector<8x64xf32>
    %12 = arith.truncf %0 : vector<8x32xf32> to vector<8x32xbf16>
    %c0_7 = arith.constant 0 : index
    %c0_8 = arith.constant 0 : index
    %13 = vector.load %arg5[%c0_7, %c0_8] : memref<32x32xbf16, #tpu.memory_space<vmem>>, vector<32x32xbf16>
    %cst_9 = arith.constant dense<0.000000e+00> : vector<8x32xf32>
    %14 = tpu.matmul %12, %13, %cst_9 {dimension_numbers = #tpu.dot_dimension_numbers<[1], [0], [0], [1], [0, 0, 1, 1], [], []>} : vector<8x32xbf16>, vector<32x32xbf16>, vector<8x32xf32> -> vector<8x32xf32>
    %c0_10 = arith.constant 0 : index
    %c0_11 = arith.constant 0 : index
    %15 = vector.load %arg6[%c0_10, %c0_11] : memref<1x32xf32, #tpu.memory_space<vmem>>, vector<1x32xf32>
    %16 = vector.shape_cast %15 : vector<1x32xf32> to vector<32xf32>
    %17 = vector.shape_cast %16 : vector<32xf32> to vector<1x32xf32>
    %18 = vector.broadcast %17 : vector<1x32xf32> to vector<8x32xf32>
    %19 = arith.addf %14, %18 : vector<8x32xf32>
    %20 = vector.extract_strided_slice %11 {offsets = [0, 0], sizes = [8, 32], strides = [1, 1]} : vector<8x64xf32> to vector<8x32xf32>
    %21 = arith.truncf %20 : vector<8x32xf32> to vector<8x32xbf16>
    %22 = vector.extract_strided_slice %11 {offsets = [0, 32], sizes = [8, 32], strides = [1, 1]} : vector<8x64xf32> to vector<8x32xf32>
    %23 = arith.truncf %22 : vector<8x32xf32> to vector<8x32xbf16>
    %24 = arith.truncf %19 : vector<8x32xf32> to vector<8x32xbf16>
    %25 = vector.extract_strided_slice %21 {offsets = [0, 0], sizes = [8, 8], strides = [1, 1]} : vector<8x32xbf16> to vector<8x8xbf16>
    %26 = vector.shape_cast %25 : vector<8x8xbf16> to vector<1x8x8xbf16>
    %27 = vector.extract_strided_slice %23 {offsets = [0, 0], sizes = [8, 8], strides = [1, 1]} : vector<8x32xbf16> to vector<8x8xbf16>
    %28 = vector.shape_cast %27 : vector<8x8xbf16> to vector<1x8x8xbf16>
    %29 = vector.extract_strided_slice %24 {offsets = [0, 0], sizes = [8, 8], strides = [1, 1]} : vector<8x32xbf16> to vector<8x8xbf16>
    %30 = vector.shape_cast %29 : vector<8x8xbf16> to vector<1x8x8xbf16>
    "tpu.trace_start"() <{level = 10 : i32, message = "bqd,bkd->bqk"}> : () -> ()
    %cst_12 = arith.constant dense<0.000000e+00> : vector<1x8x8xf32>
    %31 = tpu.matmul %26, %28, %cst_12 {dimension_numbers = #tpu.dot_dimension_numbers<[2], [2], [1], [1], [0, 0, 0, 1, 1, 1], [0], [0]>} : vector<1x8x8xbf16>, vector<1x8x8xbf16>, vector<1x8x8xf32> -> vector<1x8x8xf32>
    "tpu.trace_stop"() : () -> ()
    %cst_13 = arith.constant dense<0xFF800000> : vector<1x8xf32>
    %32 = vector.multi_reduction <maximumf>, %31, %cst_13 [2] : vector<1x8x8xf32> to vector<1x8xf32>
    %33 = vector.shape_cast %32 : vector<1x8xf32> to vector<1x8x1xf32>
    %34 = vector.broadcast %33 : vector<1x8x1xf32> to vector<1x8x8xf32>
    %35 = arith.subf %31, %34 : vector<1x8x8xf32>
    %36 = math.exp %35 : vector<1x8x8xf32>
    %cst_14 = arith.constant dense<0.000000e+00> : vector<1x8xf32>
    %37 = vector.multi_reduction <add>, %36, %cst_14 [2] : vector<1x8x8xf32> to vector<1x8xf32>
    %38 = vector.shape_cast %37 : vector<1x8xf32> to vector<1x8x1xf32>
    %39 = arith.truncf %36 : vector<1x8x8xf32> to vector<1x8x8xbf16>
    "tpu.trace_start"() <{level = 10 : i32, message = "bqk,bkd->bqd"}> : () -> ()
    %cst_15 = arith.constant dense<0.000000e+00> : vector<1x8x8xf32>
    %40 = tpu.matmul %39, %30, %cst_15 {dimension_numbers = #tpu.dot_dimension_numbers<[2], [1], [1], [2], [0, 0, 0, 1, 1, 2], [0], [0]>} : vector<1x8x8xbf16>, vector<1x8x8xbf16>, vector<1x8x8xf32> -> vector<1x8x8xf32>
    "tpu.trace_stop"() : () -> ()
    %41 = tpu.reciprocal %38 {approx = true} : vector<1x8x1xf32> -> vector<1x8x1xf32>
    %42 = vector.broadcast %41 : vector<1x8x1xf32> to vector<1x8x8xf32>
    %43 = arith.mulf %40, %42 : vector<1x8x8xf32>
    %44 = vector.shape_cast %43 : vector<1x8x8xf32> to vector<8x8xf32>
    %45 = vector.extract_strided_slice %21 {offsets = [0, 8], sizes = [8, 8], strides = [1, 1]} : vector<8x32xbf16> to vector<8x8xbf16>
    %46 = vector.shape_cast %45 : vector<8x8xbf16> to vector<1x8x8xbf16>
    %47 = vector.extract_strided_slice %23 {offsets = [0, 8], sizes = [8, 8], strides = [1, 1]} : vector<8x32xbf16> to vector<8x8xbf16>
    %48 = vector.shape_cast %47 : vector<8x8xbf16> to vector<1x8x8xbf16>
    %49 = vector.extract_strided_slice %24 {offsets = [0, 8], sizes = [8, 8], strides = [1, 1]} : vector<8x32xbf16> to vector<8x8xbf16>
    %50 = vector.shape_cast %49 : vector<8x8xbf16> to vector<1x8x8xbf16>
    "tpu.trace_start"() <{level = 10 : i32, message = "bqd,bkd->bqk"}> : () -> ()
    %cst_16 = arith.constant dense<0.000000e+00> : vector<1x8x8xf32>
    %51 = tpu.matmul %46, %48, %cst_16 {dimension_numbers = #tpu.dot_dimension_numbers<[2], [2], [1], [1], [0, 0, 0, 1, 1, 1], [0], [0]>} : vector<1x8x8xbf16>, vector<1x8x8xbf16>, vector<1x8x8xf32> -> vector<1x8x8xf32>
    "tpu.trace_stop"() : () -> ()
    %cst_17 = arith.constant dense<0xFF800000> : vector<1x8xf32>
    %52 = vector.multi_reduction <maximumf>, %51, %cst_17 [2] : vector<1x8x8xf32> to vector<1x8xf32>
    %53 = vector.shape_cast %52 : vector<1x8xf32> to vector<1x8x1xf32>
    %54 = vector.broadcast %53 : vector<1x8x1xf32> to vector<1x8x8xf32>
    %55 = arith.subf %51, %54 : vector<1x8x8xf32>
    %56 = math.exp %55 : vector<1x8x8xf32>
    %cst_18 = arith.constant dense<0.000000e+00> : vector<1x8xf32>
    %57 = vector.multi_reduction <add>, %56, %cst_18 [2] : vector<1x8x8xf32> to vector<1x8xf32>
    %58 = vector.shape_cast %57 : vector<1x8xf32> to vector<1x8x1xf32>
    %59 = arith.truncf %56 : vector<1x8x8xf32> to vector<1x8x8xbf16>
    "tpu.trace_start"() <{level = 10 : i32, message = "bqk,bkd->bqd"}> : () -> ()
    %cst_19 = arith.constant dense<0.000000e+00> : vector<1x8x8xf32>
    %60 = tpu.matmul %59, %50, %cst_19 {dimension_numbers = #tpu.dot_dimension_numbers<[2], [1], [1], [2], [0, 0, 0, 1, 1, 2], [0], [0]>} : vector<1x8x8xbf16>, vector<1x8x8xbf16>, vector<1x8x8xf32> -> vector<1x8x8xf32>
    "tpu.trace_stop"() : () -> ()
    %61 = tpu.reciprocal %58 {approx = true} : vector<1x8x1xf32> -> vector<1x8x1xf32>
    %62 = vector.broadcast %61 : vector<1x8x1xf32> to vector<1x8x8xf32>
    %63 = arith.mulf %60, %62 : vector<1x8x8xf32>
    %64 = vector.shape_cast %63 : vector<1x8x8xf32> to vector<8x8xf32>
    %65 = vector.extract_strided_slice %21 {offsets = [0, 16], sizes = [8, 8], strides = [1, 1]} : vector<8x32xbf16> to vector<8x8xbf16>
    %66 = vector.shape_cast %65 : vector<8x8xbf16> to vector<1x8x8xbf16>
    %67 = vector.extract_strided_slice %23 {offsets = [0, 16], sizes = [8, 8], strides = [1, 1]} : vector<8x32xbf16> to vector<8x8xbf16>
    %68 = vector.shape_cast %67 : vector<8x8xbf16> to vector<1x8x8xbf16>
    %69 = vector.extract_strided_slice %24 {offsets = [0, 16], sizes = [8, 8], strides = [1, 1]} : vector<8x32xbf16> to vector<8x8xbf16>
    %70 = vector.shape_cast %69 : vector<8x8xbf16> to vector<1x8x8xbf16>
    "tpu.trace_start"() <{level = 10 : i32, message = "bqd,bkd->bqk"}> : () -> ()
    %cst_20 = arith.constant dense<0.000000e+00> : vector<1x8x8xf32>
    %71 = tpu.matmul %66, %68, %cst_20 {dimension_numbers = #tpu.dot_dimension_numbers<[2], [2], [1], [1], [0, 0, 0, 1, 1, 1], [0], [0]>} : vector<1x8x8xbf16>, vector<1x8x8xbf16>, vector<1x8x8xf32> -> vector<1x8x8xf32>
    "tpu.trace_stop"() : () -> ()
    %cst_21 = arith.constant dense<0xFF800000> : vector<1x8xf32>
    %72 = vector.multi_reduction <maximumf>, %71, %cst_21 [2] : vector<1x8x8xf32> to vector<1x8xf32>
    %73 = vector.shape_cast %72 : vector<1x8xf32> to vector<1x8x1xf32>
    %74 = vector.broadcast %73 : vector<1x8x1xf32> to vector<1x8x8xf32>
    %75 = arith.subf %71, %74 : vector<1x8x8xf32>
    %76 = math.exp %75 : vector<1x8x8xf32>
    %cst_22 = arith.constant dense<0.000000e+00> : vector<1x8xf32>
    %77 = vector.multi_reduction <add>, %76, %cst_22 [2] : vector<1x8x8xf32> to vector<1x8xf32>
    %78 = vector.shape_cast %77 : vector<1x8xf32> to vector<1x8x1xf32>
    %79 = arith.truncf %76 : vector<1x8x8xf32> to vector<1x8x8xbf16>
    "tpu.trace_start"() <{level = 10 : i32, message = "bqk,bkd->bqd"}> : () -> ()
    %cst_23 = arith.constant dense<0.000000e+00> : vector<1x8x8xf32>
    %80 = tpu.matmul %79, %70, %cst_23 {dimension_numbers = #tpu.dot_dimension_numbers<[2], [1], [1], [2], [0, 0, 0, 1, 1, 2], [0], [0]>} : vector<1x8x8xbf16>, vector<1x8x8xbf16>, vector<1x8x8xf32> -> vector<1x8x8xf32>
    "tpu.trace_stop"() : () -> ()
    %81 = tpu.reciprocal %78 {approx = true} : vector<1x8x1xf32> -> vector<1x8x1xf32>
    %82 = vector.broadcast %81 : vector<1x8x1xf32> to vector<1x8x8xf32>
    %83 = arith.mulf %80, %82 : vector<1x8x8xf32>
    %84 = vector.shape_cast %83 : vector<1x8x8xf32> to vector<8x8xf32>
    %85 = vector.extract_strided_slice %21 {offsets = [0, 24], sizes = [8, 8], strides = [1, 1]} : vector<8x32xbf16> to vector<8x8xbf16>
    %86 = vector.shape_cast %85 : vector<8x8xbf16> to vector<1x8x8xbf16>
    %87 = vector.extract_strided_slice %23 {offsets = [0, 24], sizes = [8, 8], strides = [1, 1]} : vector<8x32xbf16> to vector<8x8xbf16>
    %88 = vector.shape_cast %87 : vector<8x8xbf16> to vector<1x8x8xbf16>
    %89 = vector.extract_strided_slice %24 {offsets = [0, 24], sizes = [8, 8], strides = [1, 1]} : vector<8x32xbf16> to vector<8x8xbf16>
    %90 = vector.shape_cast %89 : vector<8x8xbf16> to vector<1x8x8xbf16>
    "tpu.trace_start"() <{level = 10 : i32, message = "bqd,bkd->bqk"}> : () -> ()
    %cst_24 = arith.constant dense<0.000000e+00> : vector<1x8x8xf32>
    %91 = tpu.matmul %86, %88, %cst_24 {dimension_numbers = #tpu.dot_dimension_numbers<[2], [2], [1], [1], [0, 0, 0, 1, 1, 1], [0], [0]>} : vector<1x8x8xbf16>, vector<1x8x8xbf16>, vector<1x8x8xf32> -> vector<1x8x8xf32>
    "tpu.trace_stop"() : () -> ()
    %cst_25 = arith.constant dense<0xFF800000> : vector<1x8xf32>
    %92 = vector.multi_reduction <maximumf>, %91, %cst_25 [2] : vector<1x8x8xf32> to vector<1x8xf32>
    %93 = vector.shape_cast %92 : vector<1x8xf32> to vector<1x8x1xf32>
    %94 = vector.broadcast %93 : vector<1x8x1xf32> to vector<1x8x8xf32>
    %95 = arith.subf %91, %94 : vector<1x8x8xf32>
    %96 = math.exp %95 : vector<1x8x8xf32>
    %cst_26 = arith.constant dense<0.000000e+00> : vector<1x8xf32>
    %97 = vector.multi_reduction <add>, %96, %cst_26 [2] : vector<1x8x8xf32> to vector<1x8xf32>
    %98 = vector.shape_cast %97 : vector<1x8xf32> to vector<1x8x1xf32>
    %99 = arith.truncf %96 : vector<1x8x8xf32> to vector<1x8x8xbf16>
    "tpu.trace_start"() <{level = 10 : i32, message = "bqk,bkd->bqd"}> : () -> ()
    %cst_27 = arith.constant dense<0.000000e+00> : vector<1x8x8xf32>
    %100 = tpu.matmul %99, %90, %cst_27 {dimension_numbers = #tpu.dot_dimension_numbers<[2], [1], [1], [2], [0, 0, 0, 1, 1, 2], [0], [0]>} : vector<1x8x8xbf16>, vector<1x8x8xbf16>, vector<1x8x8xf32> -> vector<1x8x8xf32>
    "tpu.trace_stop"() : () -> ()
    %101 = tpu.reciprocal %98 {approx = true} : vector<1x8x1xf32> -> vector<1x8x1xf32>
    %102 = vector.broadcast %101 : vector<1x8x1xf32> to vector<1x8x8xf32>
    %103 = arith.mulf %100, %102 : vector<1x8x8xf32>
    %104 = vector.shape_cast %103 : vector<1x8x8xf32> to vector<8x8xf32>
    %105 = tpu.concatenate %44, %64, %84, %104 in 1 : vector<8x8xf32>, vector<8x8xf32>, vector<8x8xf32>, vector<8x8xf32> -> vector<8x32xf32>
    %106 = arith.truncf %105 : vector<8x32xf32> to vector<8x32xbf16>
    %c0_28 = arith.constant 0 : index
    %c0_29 = arith.constant 0 : index
    %107 = vector.load %arg7[%c0_28, %c0_29] : memref<32x32xbf16, #tpu.memory_space<vmem>>, vector<32x32xbf16>
    %cst_30 = arith.constant dense<0.000000e+00> : vector<8x32xf32>
    %108 = tpu.matmul %106, %107, %cst_30 {dimension_numbers = #tpu.dot_dimension_numbers<[1], [0], [0], [1], [0, 0, 1, 1], [], []>} : vector<8x32xbf16>, vector<32x32xbf16>, vector<8x32xf32> -> vector<8x32xf32>
    %c0_31 = arith.constant 0 : index
    %c0_32 = arith.constant 0 : index
    %109 = vector.load %arg8[%c0_31, %c0_32] : memref<1x32xf32, #tpu.memory_space<vmem>>, vector<1x32xf32>
    %110 = vector.shape_cast %109 : vector<1x32xf32> to vector<32xf32>
    %111 = vector.shape_cast %110 : vector<32xf32> to vector<1x32xf32>
    %112 = vector.broadcast %111 : vector<1x32xf32> to vector<8x32xf32>
    %113 = arith.addf %108, %112 : vector<8x32xf32>
    %114 = arith.addf %0, %113 : vector<8x32xf32>
    %cst_33 = arith.constant dense<0.000000e+00> : vector<8xf32>
    %115 = vector.multi_reduction <add>, %114, %cst_33 [1] : vector<8x32xf32> to vector<8xf32>
    %116 = vector.shape_cast %115 : vector<8xf32> to vector<8x1xf32>
    %cst_34 = arith.constant 3.200000e+01 : f32
    %117 = vector.broadcast %cst_34 : f32 to vector<8x1xf32>
    %118 = arith.divf %116, %117 : vector<8x1xf32>
    %119 = vector.broadcast %118 : vector<8x1xf32> to vector<8x32xf32>
    %120 = arith.subf %114, %119 : vector<8x32xf32>
    %121 = arith.mulf %120, %120 : vector<8x32xf32>
    %cst_35 = arith.constant dense<0.000000e+00> : vector<8xf32>
    %122 = vector.multi_reduction <add>, %121, %cst_35 [1] : vector<8x32xf32> to vector<8xf32>
    %123 = vector.shape_cast %122 : vector<8xf32> to vector<8x1xf32>
    %cst_36 = arith.constant 3.200000e+01 : f32
    %124 = vector.broadcast %cst_36 : f32 to vector<8x1xf32>
    %125 = arith.divf %123, %124 : vector<8x1xf32>
    %126 = vector.broadcast %118 : vector<8x1xf32> to vector<8x32xf32>
    %127 = arith.subf %114, %126 : vector<8x32xf32>
    %cst_37 = arith.constant 9.99999974E-6 : f32
    %128 = vector.broadcast %cst_37 : f32 to vector<8x1xf32>
    %129 = arith.addf %125, %128 : vector<8x1xf32>
    %130 = math.rsqrt %129 : vector<8x1xf32>
    %131 = vector.broadcast %130 : vector<8x1xf32> to vector<8x32xf32>
    %132 = arith.mulf %127, %131 : vector<8x32xf32>
    %c0_38 = arith.constant 0 : index
    %c0_39 = arith.constant 0 : index
    %133 = vector.load %arg9[%c0_38, %c0_39] : memref<1x32xf32, #tpu.memory_space<vmem>>, vector<1x32xf32>
    %134 = vector.shape_cast %133 : vector<1x32xf32> to vector<32xf32>
    %135 = vector.shape_cast %134 : vector<32xf32> to vector<1x32xf32>
    %136 = vector.broadcast %135 : vector<1x32xf32> to vector<8x32xf32>
    %137 = arith.mulf %132, %136 : vector<8x32xf32>
    %c0_40 = arith.constant 0 : index
    %c0_41 = arith.constant 0 : index
    %138 = vector.load %arg10[%c0_40, %c0_41] : memref<1x32xf32, #tpu.memory_space<vmem>>, vector<1x32xf32>
    %139 = vector.shape_cast %138 : vector<1x32xf32> to vector<32xf32>
    %140 = vector.shape_cast %139 : vector<32xf32> to vector<1x32xf32>
    %141 = vector.broadcast %140 : vector<1x32xf32> to vector<8x32xf32>
    %142 = arith.addf %137, %141 : vector<8x32xf32>
    %143 = arith.truncf %142 : vector<8x32xf32> to vector<8x32xbf16>
    %c0_42 = arith.constant 0 : index
    %c0_43 = arith.constant 0 : index
    %144 = vector.load %arg11[%c0_42, %c0_43] : memref<32x64xbf16, #tpu.memory_space<vmem>>, vector<32x64xbf16>
    %cst_44 = arith.constant dense<0.000000e+00> : vector<8x64xf32>
    %145 = tpu.matmul %143, %144, %cst_44 {dimension_numbers = #tpu.dot_dimension_numbers<[1], [0], [0], [1], [0, 0, 1, 1], [], []>} : vector<8x32xbf16>, vector<32x64xbf16>, vector<8x64xf32> -> vector<8x64xf32>
    %c0_45 = arith.constant 0 : index
    %c0_46 = arith.constant 0 : index
    %146 = vector.load %arg12[%c0_45, %c0_46] : memref<1x64xf32, #tpu.memory_space<vmem>>, vector<1x64xf32>
    %147 = vector.shape_cast %146 : vector<1x64xf32> to vector<64xf32>
    %148 = vector.shape_cast %147 : vector<64xf32> to vector<1x64xf32>
    %149 = vector.broadcast %148 : vector<1x64xf32> to vector<8x64xf32>
    %150 = arith.addf %145, %149 : vector<8x64xf32>
    %cst_47 = arith.constant 0.000000e+00 : f32
    %151 = vector.broadcast %cst_47 : f32 to vector<8x64xf32>
    %152 = arith.maximumf %150, %151 : vector<8x64xf32>
    %153 = arith.truncf %152 : vector<8x64xf32> to vector<8x64xbf16>
    %c0_48 = arith.constant 0 : index
    %c0_49 = arith.constant 0 : index
    %154 = vector.load %arg13[%c0_48, %c0_49] : memref<64x32xbf16, #tpu.memory_space<vmem>>, vector<64x32xbf16>
    %cst_50 = arith.constant dense<0.000000e+00> : vector<8x32xf32>
    %155 = tpu.matmul %153, %154, %cst_50 {dimension_numbers = #tpu.dot_dimension_numbers<[1], [0], [0], [1], [0, 0, 1, 1], [], []>} : vector<8x64xbf16>, vector<64x32xbf16>, vector<8x32xf32> -> vector<8x32xf32>
    %c0_51 = arith.constant 0 : index
    %c0_52 = arith.constant 0 : index
    %156 = vector.load %arg14[%c0_51, %c0_52] : memref<1x32xf32, #tpu.memory_space<vmem>>, vector<1x32xf32>
    %157 = vector.shape_cast %156 : vector<1x32xf32> to vector<32xf32>
    %158 = vector.shape_cast %157 : vector<32xf32> to vector<1x32xf32>
    %159 = vector.broadcast %158 : vector<1x32xf32> to vector<8x32xf32>
    %160 = arith.addf %155, %159 : vector<8x32xf32>
    %161 = arith.addf %142, %160 : vector<8x32xf32>
    %cst_53 = arith.constant dense<0.000000e+00> : vector<8xf32>
    %162 = vector.multi_reduction <add>, %161, %cst_53 [1] : vector<8x32xf32> to vector<8xf32>
    %163 = vector.shape_cast %162 : vector<8xf32> to vector<8x1xf32>
    %cst_54 = arith.constant 3.200000e+01 : f32
    %164 = vector.broadcast %cst_54 : f32 to vector<8x1xf32>
    %165 = arith.divf %163, %164 : vector<8x1xf32>
    %166 = vector.broadcast %165 : vector<8x1xf32> to vector<8x32xf32>
    %167 = arith.subf %161, %166 : vector<8x32xf32>
    %168 = arith.mulf %167, %167 : vector<8x32xf32>
    %cst_55 = arith.constant dense<0.000000e+00> : vector<8xf32>
    %169 = vector.multi_reduction <add>, %168, %cst_55 [1] : vector<8x32xf32> to vector<8xf32>
    %170 = vector.shape_cast %169 : vector<8xf32> to vector<8x1xf32>
    %cst_56 = arith.constant 3.200000e+01 : f32
    %171 = vector.broadcast %cst_56 : f32 to vector<8x1xf32>
    %172 = arith.divf %170, %171 : vector<8x1xf32>
    %173 = vector.broadcast %165 : vector<8x1xf32> to vector<8x32xf32>
    %174 = arith.subf %161, %173 : vector<8x32xf32>
    %cst_57 = arith.constant 9.99999974E-6 : f32
    %175 = vector.broadcast %cst_57 : f32 to vector<8x1xf32>
    %176 = arith.addf %172, %175 : vector<8x1xf32>
    %177 = math.rsqrt %176 : vector<8x1xf32>
    %178 = vector.broadcast %177 : vector<8x1xf32> to vector<8x32xf32>
    %179 = arith.mulf %174, %178 : vector<8x32xf32>
    %c0_58 = arith.constant 0 : index
    %c0_59 = arith.constant 0 : index
    %180 = vector.load %arg15[%c0_58, %c0_59] : memref<1x32xf32, #tpu.memory_space<vmem>>, vector<1x32xf32>
    %181 = vector.shape_cast %180 : vector<1x32xf32> to vector<32xf32>
    %182 = vector.shape_cast %181 : vector<32xf32> to vector<1x32xf32>
    %183 = vector.broadcast %182 : vector<1x32xf32> to vector<8x32xf32>
    %184 = arith.mulf %179, %183 : vector<8x32xf32>
    %c0_60 = arith.constant 0 : index
    %c0_61 = arith.constant 0 : index
    %185 = vector.load %arg16[%c0_60, %c0_61] : memref<1x32xf32, #tpu.memory_space<vmem>>, vector<1x32xf32>
    %186 = vector.shape_cast %185 : vector<1x32xf32> to vector<32xf32>
    %187 = vector.shape_cast %186 : vector<32xf32> to vector<1x32xf32>
    %188 = vector.broadcast %187 : vector<1x32xf32> to vector<8x32xf32>
    %189 = arith.addf %184, %188 : vector<8x32xf32>
    %c0_62 = arith.constant 0 : index
    %c0_63 = arith.constant 0 : index
    %190 = vector.load %arg17[%c0_62, %c0_63] : memref<8x32xf32, #tpu.memory_space<vmem>>, vector<8x32xf32>
    tpu.vector_store %arg17[%c0_62, %c0_63], %189 {strides = array<i32>} : memref<8x32xf32, #tpu.memory_space<vmem>>, vector<8x32xf32>,
    return
  }
  func.func @transform_0(%arg0: i32) -> (i32, i32) {
    %c0_i32 = arith.constant 0 : i32
    %c0_i32_0 = arith.constant 0 : i32
    return %arg0, %c0_i32 : i32, i32
  }
  func.func @transform_1(%arg0: i32) -> (i32, i32) {
    %c0_i32 = arith.constant 0 : i32
    %c0_i32_0 = arith.constant 0 : i32
    return %arg0, %c0_i32 : i32, i32
  }
  func.func @transform_2(%arg0: i32) -> (i32, i32) {
    %c0_i32 = arith.constant 0 : i32
    %c0_i32_0 = arith.constant 0 : i32
    %c0_i32_1 = arith.constant 0 : i32
    return %c0_i32, %c0_i32_0 : i32, i32
  }
  func.func @transform_3(%arg0: i32) -> (i32, i32) {
    %c0_i32 = arith.constant 0 : i32
    %c0_i32_0 = arith.constant 0 : i32
    %c0_i32_1 = arith.constant 0 : i32
    return %c0_i32, %c0_i32_0 : i32, i32
  }
  func.func @transform_4(%arg0: i32) -> (i32, i32) {
    %c0_i32 = arith.constant 0 : i32
    %c0_i32_0 = arith.constant 0 : i32
    %c0_i32_1 = arith.constant 0 : i32
    return %c0_i32, %c0_i32_0 : i32, i32
  }
  func.func @transform_5(%arg0: i32) -> (i32, i32) {
    %c0_i32 = arith.constant 0 : i32
    %c0_i32_0 = arith.constant 0 : i32
    %c0_i32_1 = arith.constant 0 : i32
    return %c0_i32, %c0_i32_0 : i32, i32
  }
  func.func @transform_6(%arg0: i32) -> (i32, i32) {
    %c0_i32 = arith.constant 0 : i32
    %c0_i32_0 = arith.constant 0 : i32
    %c0_i32_1 = arith.constant 0 : i32
    return %c0_i32, %c0_i32_0 : i32, i32
  }
  func.func @transform_7(%arg0: i32) -> (i32, i32) {
    %c0_i32 = arith.constant 0 : i32
    %c0_i32_0 = arith.constant 0 : i32
    %c0_i32_1 = arith.constant 0 : i32
    return %c0_i32, %c0_i32_0 : i32, i32
  }
  func.func @transform_8(%arg0: i32) -> (i32, i32) {
    %c0_i32 = arith.constant 0 : i32
    %c0_i32_0 = arith.constant 0 : i32
    %c0_i32_1 = arith.constant 0 : i32
    return %c0_i32, %c0_i32_0 : i32, i32
  }
  func.func @transform_9(%arg0: i32) -> (i32, i32) {
    %c0_i32 = arith.constant 0 : i32
    %c0_i32_0 = arith.constant 0 : i32
    %c0_i32_1 = arith.constant 0 : i32
    return %c0_i32, %c0_i32_0 : i32, i32
  }
  func.func @transform_10(%arg0: i32) -> (i32, i32) {
    %c0_i32 = arith.constant 0 : i32
    %c0_i32_0 = arith.constant 0 : i32
    %c0_i32_1 = arith.constant 0 : i32
    return %c0_i32, %c0_i32_0 : i32, i32
  }
  func.func @transform_11(%arg0: i32) -> (i32, i32) {
    %c0_i32 = arith.constant 0 : i32
    %c0_i32_0 = arith.constant 0 : i32
    %c0_i32_1 = arith.constant 0 : i32
    return %c0_i32, %c0_i32_0 : i32, i32
  }
  func.func @transform_12(%arg0: i32) -> (i32, i32) {
    %c0_i32 = arith.constant 0 : i32
    %c0_i32_0 = arith.constant 0 : i32
    %c0_i32_1 = arith.constant 0 : i32
    return %c0_i32, %c0_i32_0 : i32, i32
  }
  func.func @transform_13(%arg0: i32) -> (i32, i32) {
    %c0_i32 = arith.constant 0 : i32
    %c0_i32_0 = arith.constant 0 : i32
    %c0_i32_1 = arith.constant 0 : i32
    return %c0_i32, %c0_i32_0 : i32, i32
  }
  func.func @transform_14(%arg0: i32) -> (i32, i32) {
    %c0_i32 = arith.constant 0 : i32
    %c0_i32_0 = arith.constant 0 : i32
    %c0_i32_1 = arith.constant 0 : i32
    return %c0_i32, %c0_i32_0 : i32, i32
  }
  func.func @transform_15(%arg0: i32) -> (i32, i32) {
    %c0_i32 = arith.constant 0 : i32
    %c0_i32_0 = arith.constant 0 : i32
    %c0_i32_1 = arith.constant 0 : i32
    return %c0_i32, %c0_i32_0 : i32, i32
  }
  func.func @transform_16(%arg0: i32) -> (i32, i32) {
    %c0_i32 = arith.constant 0 : i32
    %c0_i32_0 = arith.constant 0 : i32
    return %arg0, %c0_i32 : i32, i32
  }
}

</mosaic_0001>

<llo_original>
// kernel: tpu_custom_call.1
$region0: #{tpu_custom_call.1}
  #allocation0 [shape = 'u32[]', space=smem, size = 0x4, offset = 0x4, fixed_abs, tag = 'smem constant byte address 0x4 - core index']
  #allocation1 [shape = 'u32[144,128]{1,0:T(1,128)}', space=vmem, size = 0x12000, scoped, tag = 'internal scratch']
  %s0 = inlined_call_operand.vmem [shape: f32[16,32], index: 0, kind: input, shape index: {}]
  %s1 = inlined_call_operand.vmem [shape: f32[16,32], index: 1, kind: input, shape index: {}]
  %s2 = inlined_call_operand.vmem [shape: bf16[32,64], index: 2, kind: input, shape index: {}]
  %s3 = inlined_call_operand.vmem [shape: f32[1,64], index: 3, kind: input, shape index: {}]
  %s4 = inlined_call_operand.hbm [shape: bf16[32,32], index: 4, kind: input, shape index: {}]
  %s5 = inlined_call_operand.vmem [shape: f32[1,32], index: 5, kind: input, shape index: {}]
  %s6 = inlined_call_operand.hbm [shape: bf16[32,32], index: 6, kind: input, shape index: {}]
  %s7 = inlined_call_operand.hbm [shape: f32[1,32], index: 7, kind: input, shape index: {}]
  %s8 = inlined_call_operand.hbm [shape: f32[1,32], index: 8, kind: input, shape index: {}]
  %s9 = inlined_call_operand.hbm [shape: f32[1,32], index: 9, kind: input, shape index: {}]
  %s10 = inlined_call_operand.vmem [shape: bf16[32,64], index: 10, kind: input, shape index: {}]
  %s11 = inlined_call_operand.vmem [shape: f32[1,64], index: 11, kind: input, shape index: {}]
  %s12 = inlined_call_operand.vmem [shape: bf16[64,32], index: 12, kind: input, shape index: {}]
  %s13 = inlined_call_operand.vmem [shape: f32[1,32], index: 13, kind: input, shape index: {}]
  %s14 = inlined_call_operand.vmem [shape: f32[1,32], index: 14, kind: input, shape index: {}]
  %s15 = inlined_call_operand.vmem [shape: f32[1,32], index: 15, kind: input, shape index: {}]
  %s16 = inlined_call_operand.hbm [shape: f32[16,32], index: 16, kind: output, shape index: {}]
  %s17 = sld [smem:[#allocation0]]
  $region117: #{tpu_custom_call.1} parent=0
    _
  %s19 = ssub.s32 1, %s17
  %s20 = scalar_select 0, %s19, %s17
  $region1: #{tpu_custom_call.1} parent=0
    #allocation2 [shape = 'u8[8192]{0}', space=vmem, size = 0x2000, scoped, tag = 'input window, operand 4, single buffered']
    #allocation3 [shape = 's32[2]{0}', space=sflag, size = 0x8, scoped, tag = 'scoped memory for tpu_custom_call.1']
    #allocation4 [shape = 's32[2]{0}', space=sflag, size = 0x8, scoped, tag = 'scoped memory for tpu_custom_call.1']
    #allocation5 [shape = 'u8[8192]{0}', space=vmem, size = 0x2000, scoped, tag = 'input window, operand 6, single buffered']
    #allocation6 [shape = 's32[1]{0}', space=sflag, size = 0x4, scoped, tag = 'scoped memory for tpu_custom_call.1']
    #allocation7 [shape = 'u8[512]{0}', space=vmem, size = 0x400, scoped, tag = 'input window, operand 7, single buffered']
    #allocation8 [shape = 'u8[512]{0}', space=vmem, size = 0x400, scoped, tag = 'input window, operand 8, single buffered']
    #allocation9 [shape = 's32[1]{0}', space=sflag, size = 0x4, scoped, tag = 'scoped memory for tpu_custom_call.1']
    #allocation10 [shape = 'u8[512]{0}', space=vmem, size = 0x400, scoped, tag = 'input window, operand 9, single buffered']
    #allocation11 [shape = 'u8[8192]{0}', space=vmem, size = 0x2000, scoped, tag = 'output window, operand 0']
    %21 = vsyncpa [#allocation3], 0
    %22 = vsyncpa [#allocation6], 0
    %23 = vsyncpa [#allocation9], 0
    %24 = vsyncpa [#allocation4], 0
    %s25 = scalar_lea.sflag [#allocation4], 1
    %26 = vsyncpa %s25, 0
    loop: start=0, step=1, limit=4
    $region2: #{tpu_custom_call.1} parent=1 // loop_pre_header
      _
    $region3: #{tpu_custom_call.1} parent=1 // loop_header
      %s28 = sphi 0, %s32
      %p29 = scmp.ge.s32.totalorder %s28, 4
      %s38 = sphi 0, %s40
      %s41 = sphi 0, %s38
      %s42 = sphi 0, %s41
      %s58 = sphi 0, %s42
      %s64 = sphi 0, %s66
      %s67 = sphi 0, %s64
      %s68 = sphi 0, %s67
      %s84 = sphi 0, %s68
      %s88 = sphi 0, %s88
      %s90 = sphi 0, %s88
      %s91 = sphi 0, %s90
      %s105 = sphi 0, %s91
      %s109 = sphi 0, %s109
      %s111 = sphi 0, %s109
      %s112 = sphi 0, %s111
      %s126 = sphi 0, %s112
      %s130 = sphi 0, %s130
      %s132 = sphi 0, %s130
      %s133 = sphi 0, %s132
      %s147 = sphi 0, %s133
      %s151 = sphi 0, %s151
      %s153 = sphi 0, %s151
      %s154 = sphi 0, %s153
      %s168 = sphi 0, %s154
      %s172 = sphi 0, %s172
      %s174 = sphi 0, %s172
      %s175 = sphi 0, %s174
      %s189 = sphi 0, %s175
      %s193 = sphi 0, %s193
      %s195 = sphi 0, %s193
      %s196 = sphi 0, %s195
      %s210 = sphi 0, %s196
      %s214 = sphi 0, %s214
      %s216 = sphi 0, %s214
      %s217 = sphi 0, %s216
      %s231 = sphi 0, %s217
      %s235 = sphi 0, %s235
      %s237 = sphi 0, %s235
      %s238 = sphi 0, %s237
      %s252 = sphi 0, %s238
      %s256 = sphi 0, %s256
      %s258 = sphi 0, %s256
      %s259 = sphi 0, %s258
      %s273 = sphi 0, %s259
      %s277 = sphi 0, %s277
      %s279 = sphi 0, %s277
      %s280 = sphi 0, %s279
      %s294 = sphi 0, %s280
      %s298 = sphi 0, %s298
      %s300 = sphi 0, %s298
      %s301 = sphi 0, %s300
      %s315 = sphi 0, %s301
      %s319 = sphi 0, %s319
      %s321 = sphi 0, %s319
      %s322 = sphi 0, %s321
      %s336 = sphi 0, %s322
      %s340 = sphi 0, %s340
      %s342 = sphi 0, %s340
      %s343 = sphi 0, %s342
      %s357 = sphi 0, %s343
      %s361 = sphi 0, %s361
      %s363 = sphi 0, %s361
      %s364 = sphi 0, %s363
      %s378 = sphi 0, %s364
      %s384 = sphi 0, %s386
      %s387 = sphi 0, %s384
      %s388 = sphi 0, %s387
      %s404 = sphi 0, %s388
    $region4: #{tpu_custom_call.1} parent=1 // loop_header_branch
      %31 = sbr.rel (%p29) target = $region8
    $region5: #{tpu_custom_call.1} parent=1 // loop_body
      %s33 = ssub.s32 %s28, 1
      %s34 = ssub.s32 %s28, 2
      %s35 = sadd.s32 %s28, 1
      %s36 = ssub.s32 %s28, %s35
      %p37 = scmp.eq.s32.totalorder %s36, 0
      %s39 = sadd.s32 %s38, 1
      %s40 = scalar_select %p37, %s38, %s39
      %p43 = pneg %p37
      %p44 = scmp.eq.s32.totalorder %s28, 1
      %p45 = por %p43, %p44
      %p46 = scmp.ne.s32.totalorder %s38, %s41
      %p47 = scmp.eq.s32.totalorder %s28, 0
      %p48 = por %p46, %p47
      %p49 = scmp.ne.s32.totalorder %s38, %s41
      %p50 = scmp.eq.s32.totalorder %s33, 1
      %p51 = por %p49, %p50
      %p52 = scmp.ne.s32.totalorder %s41, %s42
      %p53 = scmp.eq.s32.totalorder %s33, 0
      %p54 = por %p52, %p53
      %p55 = scmp.ne.s32.totalorder %s41, %s42
      %p56 = scmp.eq.s32.totalorder %s34, 1
      %p57 = por %p55, %p56
      %p59 = scmp.ne.s32.totalorder %s42, %s58
      %p60 = scmp.eq.s32.totalorder %s34, 0
      %p61 = por %p59, %p60
      %s62 = ssub.s32 %s28, %s35
      %p63 = scmp.eq.s32.totalorder %s62, 0
      %s65 = sadd.s32 %s64, 1
      %s66 = scalar_select %p63, %s64, %s65
      %p69 = pneg %p63
      %p70 = scmp.eq.s32.totalorder %s28, 1
      %p71 = por %p69, %p70
      %p72 = scmp.ne.s32.totalorder %s64, %s67
      %p73 = scmp.eq.s32.totalorder %s28, 0
      %p74 = por %p72, %p73
      %p75 = scmp.ne.s32.totalorder %s64, %s67
      %p76 = scmp.eq.s32.totalorder %s33, 1
      %p77 = por %p75, %p76
      %p78 = scmp.ne.s32.totalorder %s67, %s68
      %p79 = scmp.eq.s32.totalorder %s33, 0
      %p80 = por %p78, %p79
      %p81 = scmp.ne.s32.totalorder %s67, %s68
      %p82 = scmp.eq.s32.totalorder %s34, 1
      %p83 = por %p81, %p82
      %p85 = scmp.ne.s32.totalorder %s68, %s84
      %p86 = scmp.eq.s32.totalorder %s34, 0
      %p87 = por %p85, %p86
      %s89 = sadd.s32 %s88, 1
      %p92 = scmp.eq.s32.totalorder %s28, 1
      %p93 = scmp.ne.s32.totalorder %s88, %s90
      %p94 = scmp.eq.s32.totalorder %s28, 0
      %p95 = por %p93, %p94
      %p96 = scmp.ne.s32.totalorder %s88, %s90
      %p97 = scmp.eq.s32.totalorder %s33, 1
      %p98 = por %p96, %p97
      %p99 = scmp.ne.s32.totalorder %s90, %s91
      %p100 = scmp.eq.s32.totalorder %s33, 0
      %p101 = por %p99, %p100
      %p102 = scmp.ne.s32.totalorder %s90, %s91
      %p103 = scmp.eq.s32.totalorder %s34, 1
      %p104 = por %p102, %p103
      %p106 = scmp.ne.s32.totalorder %s91, %s105
      %p107 = scmp.eq.s32.totalorder %s34, 0
      %p108 = por %p106, %p107
      %s110 = sadd.s32 %s109, 1
      %p113 = scmp.eq.s32.totalorder %s28, 1
      %p114 = scmp.ne.s32.totalorder %s109, %s111
      %p115 = scmp.eq.s32.totalorder %s28, 0
      %p116 = por %p114, %p115
      %p117 = scmp.ne.s32.totalorder %s109, %s111
      %p118 = scmp.eq.s32.totalorder %s33, 1
      %p119 = por %p117, %p118
      %p120 = scmp.ne.s32.totalorder %s111, %s112
      %p121 = scmp.eq.s32.totalorder %s33, 0
      %p122 = por %p120, %p121
      %p123 = scmp.ne.s32.totalorder %s111, %s112
      %p124 = scmp.eq.s32.totalorder %s34, 1
      %p125 = por %p123, %p124
      %p127 = scmp.ne.s32.totalorder %s112, %s126
      %p128 = scmp.eq.s32.totalorder %s34, 0
      %p129 = por %p127, %p128
      %s131 = sadd.s32 %s130, 1
      %p134 = scmp.eq.s32.totalorder %s28, 1
      %p135 = scmp.ne.s32.totalorder %s130, %s132
      %p136 = scmp.eq.s32.totalorder %s28, 0
      %p137 = por %p135, %p136
      %p138 = scmp.ne.s32.totalorder %s130, %s132
      %p139 = scmp.eq.s32.totalorder %s33, 1
      %p140 = por %p138, %p139
      %p141 = scmp.ne.s32.totalorder %s132, %s133
      %p142 = scmp.eq.s32.totalorder %s33, 0
      %p143 = por %p141, %p142
      %p144 = scmp.ne.s32.totalorder %s132, %s133
      %p145 = scmp.eq.s32.totalorder %s34, 1
      %p146 = por %p144, %p145
      %p148 = scmp.ne.s32.totalorder %s133, %s147
      %p149 = scmp.eq.s32.totalorder %s34, 0
      %p150 = por %p148, %p149
      %s152 = sadd.s32 %s151, 1
      %p155 = scmp.eq.s32.totalorder %s28, 1
      %p156 = scmp.ne.s32.totalorder %s151, %s153
      %p157 = scmp.eq.s32.totalorder %s28, 0
      %p158 = por %p156, %p157
      %p159 = scmp.ne.s32.totalorder %s151, %s153
      %p160 = scmp.eq.s32.totalorder %s33, 1
      %p161 = por %p159, %p160
      %p162 = scmp.ne.s32.totalorder %s153, %s154
      %p163 = scmp.eq.s32.totalorder %s33, 0
      %p164 = por %p162, %p163
      %p165 = scmp.ne.s32.totalorder %s153, %s154
      %p166 = scmp.eq.s32.totalorder %s34, 1
      %p167 = por %p165, %p166
      %p169 = scmp.ne.s32.totalorder %s154, %s168
      %p170 = scmp.eq.s32.totalorder %s34, 0
      %p171 = por %p169, %p170
      %s173 = sadd.s32 %s172, 1
      %p176 = scmp.eq.s32.totalorder %s28, 1
      %p177 = scmp.ne.s32.totalorder %s172, %s174
      %p178 = scmp.eq.s32.totalorder %s28, 0
      %p179 = por %p177, %p178
      %p180 = scmp.ne.s32.totalorder %s172, %s174
      %p181 = scmp.eq.s32.totalorder %s33, 1
      %p182 = por %p180, %p181
      %p183 = scmp.ne.s32.totalorder %s174, %s175
      %p184 = scmp.eq.s32.totalorder %s33, 0
      %p185 = por %p183, %p184
      %p186 = scmp.ne.s32.totalorder %s174, %s175
      %p187 = scmp.eq.s32.totalorder %s34, 1
      %p188 = por %p186, %p187
      %p190 = scmp.ne.s32.totalorder %s175, %s189
      %p191 = scmp.eq.s32.totalorder %s34, 0
      %p192 = por %p190, %p191
      %s194 = sadd.s32 %s193, 1
      %p197 = scmp.eq.s32.totalorder %s28, 1
      %p198 = scmp.ne.s32.totalorder %s193, %s195
      %p199 = scmp.eq.s32.totalorder %s28, 0
      %p200 = por %p198, %p199
      %p201 = scmp.ne.s32.totalorder %s193, %s195
      %p202 = scmp.eq.s32.totalorder %s33, 1
      %p203 = por %p201, %p202
      %p204 = scmp.ne.s32.totalorder %s195, %s196
      %p205 = scmp.eq.s32.totalorder %s33, 0
      %p206 = por %p204, %p205
      %p207 = scmp.ne.s32.totalorder %s195, %s196
      %p208 = scmp.eq.s32.totalorder %s34, 1
      %p209 = por %p207, %p208
      %p211 = scmp.ne.s32.totalorder %s196, %s210
      %p212 = scmp.eq.s32.totalorder %s34, 0
      %p213 = por %p211, %p212
      %s215 = sadd.s32 %s214, 1
      %p218 = scmp.eq.s32.totalorder %s28, 1
      %p219 = scmp.ne.s32.totalorder %s214, %s216
      %p220 = scmp.eq.s32.totalorder %s28, 0
      %p221 = por %p219, %p220
      %p222 = scmp.ne.s32.totalorder %s214, %s216
      %p223 = scmp.eq.s32.totalorder %s33, 1
      %p224 = por %p222, %p223
      %p225 = scmp.ne.s32.totalorder %s216, %s217
      %p226 = scmp.eq.s32.totalorder %s33, 0
      %p227 = por %p225, %p226
      %p228 = scmp.ne.s32.totalorder %s216, %s217
      %p229 = scmp.eq.s32.totalorder %s34, 1
      %p230 = por %p228, %p229
      %p232 = scmp.ne.s32.totalorder %s217, %s231
      %p233 = scmp.eq.s32.totalorder %s34, 0
      %p234 = por %p232, %p233
      %s236 = sadd.s32 %s235, 1
      %p239 = scmp.eq.s32.totalorder %s28, 1
      %p240 = scmp.ne.s32.totalorder %s235, %s237
      %p241 = scmp.eq.s32.totalorder %s28, 0
      %p242 = por %p240, %p241
      %p243 = scmp.ne.s32.totalorder %s235, %s237
      %p244 = scmp.eq.s32.totalorder %s33, 1
      %p245 = por %p243, %p244
      %p246 = scmp.ne.s32.totalorder %s237, %s238
      %p247 = scmp.eq.s32.totalorder %s33, 0
      %p248 = por %p246, %p247
      %p249 = scmp.ne.s32.totalorder %s237, %s238
      %p250 = scmp.eq.s32.totalorder %s34, 1
      %p251 = por %p249, %p250
      %p253 = scmp.ne.s32.totalorder %s238, %s252
      %p254 = scmp.eq.s32.totalorder %s34, 0
      %p255 = por %p253, %p254
      %s257 = sadd.s32 %s256, 1
      %p260 = scmp.eq.s32.totalorder %s28, 1
      %p261 = scmp.ne.s32.totalorder %s256, %s258
      %p262 = scmp.eq.s32.totalorder %s28, 0
      %p263 = por %p261, %p262
      %p264 = scmp.ne.s32.totalorder %s256, %s258
      %p265 = scmp.eq.s32.totalorder %s33, 1
      %p266 = por %p264, %p265
      %p267 = scmp.ne.s32.totalorder %s258, %s259
      %p268 = scmp.eq.s32.totalorder %s33, 0
      %p269 = por %p267, %p268
      %p270 = scmp.ne.s32.totalorder %s258, %s259
      %p271 = scmp.eq.s32.totalorder %s34, 1
      %p272 = por %p270, %p271
      %p274 = scmp.ne.s32.totalorder %s259, %s273
      %p275 = scmp.eq.s32.totalorder %s34, 0
      %p276 = por %p274, %p275
      %s278 = sadd.s32 %s277, 1
      %p281 = scmp.eq.s32.totalorder %s28, 1
      %p282 = scmp.ne.s32.totalorder %s277, %s279
      %p283 = scmp.eq.s32.totalorder %s28, 0
      %p284 = por %p282, %p283
      %p285 = scmp.ne.s32.totalorder %s277, %s279
      %p286 = scmp.eq.s32.totalorder %s33, 1
      %p287 = por %p285, %p286
      %p288 = scmp.ne.s32.totalorder %s279, %s280
      %p289 = scmp.eq.s32.totalorder %s33, 0
      %p290 = por %p288, %p289
      %p291 = scmp.ne.s32.totalorder %s279, %s280
      %p292 = scmp.eq.s32.totalorder %s34, 1
      %p293 = por %p291, %p292
      %p295 = scmp.ne.s32.totalorder %s280, %s294
      %p296 = scmp.eq.s32.totalorder %s34, 0
      %p297 = por %p295, %p296
      %s299 = sadd.s32 %s298, 1
      %p302 = scmp.eq.s32.totalorder %s28, 1
      %p303 = scmp.ne.s32.totalorder %s298, %s300
      %p304 = scmp.eq.s32.totalorder %s28, 0
      %p305 = por %p303, %p304
      %p306 = scmp.ne.s32.totalorder %s298, %s300
      %p307 = scmp.eq.s32.totalorder %s33, 1
      %p308 = por %p306, %p307
      %p309 = scmp.ne.s32.totalorder %s300, %s301
      %p310 = scmp.eq.s32.totalorder %s33, 0
      %p311 = por %p309, %p310
      %p312 = scmp.ne.s32.totalorder %s300, %s301
      %p313 = scmp.eq.s32.totalorder %s34, 1
      %p314 = por %p312, %p313
      %p316 = scmp.ne.s32.totalorder %s301, %s315
      %p317 = scmp.eq.s32.totalorder %s34, 0
      %p318 = por %p316, %p317
      %s320 = sadd.s32 %s319, 1
      %p323 = scmp.eq.s32.totalorder %s28, 1
      %p324 = scmp.ne.s32.totalorder %s319, %s321
      %p325 = scmp.eq.s32.totalorder %s28, 0
      %p326 = por %p324, %p325
      %p327 = scmp.ne.s32.totalorder %s319, %s321
      %p328 = scmp.eq.s32.totalorder %s33, 1
      %p329 = por %p327, %p328
      %p330 = scmp.ne.s32.totalorder %s321, %s322
      %p331 = scmp.eq.s32.totalorder %s33, 0
      %p332 = por %p330, %p331
      %p333 = scmp.ne.s32.totalorder %s321, %s322
      %p334 = scmp.eq.s32.totalorder %s34, 1
      %p335 = por %p333, %p334
      %p337 = scmp.ne.s32.totalorder %s322, %s336
      %p338 = scmp.eq.s32.totalorder %s34, 0
      %p339 = por %p337, %p338
      %s341 = sadd.s32 %s340, 1
      %p344 = scmp.eq.s32.totalorder %s28, 1
      %p345 = scmp.ne.s32.totalorder %s340, %s342
      %p346 = scmp.eq.s32.totalorder %s28, 0
      %p347 = por %p345, %p346
      %p348 = scmp.ne.s32.totalorder %s340, %s342
      %p349 = scmp.eq.s32.totalorder %s33, 1
      %p350 = por %p348, %p349
      %p351 = scmp.ne.s32.totalorder %s342, %s343
      %p352 = scmp.eq.s32.totalorder %s33, 0
      %p353 = por %p351, %p352
      %p354 = scmp.ne.s32.totalorder %s342, %s343
      %p355 = scmp.eq.s32.totalorder %s34, 1
      %p356 = por %p354, %p355
      %p358 = scmp.ne.s32.totalorder %s343, %s357
      %p359 = scmp.eq.s32.totalorder %s34, 0
      %p360 = por %p358, %p359
      %s362 = sadd.s32 %s361, 1
      %p365 = scmp.eq.s32.totalorder %s28, 1
      %p366 = scmp.ne.s32.totalorder %s361, %s363
      %p367 = scmp.eq.s32.totalorder %s28, 0
      %p368 = por %p366, %p367
      %p369 = scmp.ne.s32.totalorder %s361, %s363
      %p370 = scmp.eq.s32.totalorder %s33, 1
      %p371 = por %p369, %p370
      %p372 = scmp.ne.s32.totalorder %s363, %s364
      %p373 = scmp.eq.s32.totalorder %s33, 0
      %p374 = por %p372, %p373
      %p375 = scmp.ne.s32.totalorder %s363, %s364
      %p376 = scmp.eq.s32.totalorder %s34, 1
      %p377 = por %p375, %p376
      %p379 = scmp.ne.s32.totalorder %s364, %s378
      %p380 = scmp.eq.s32.totalorder %s34, 0
      %p381 = por %p379, %p380
      %s382 = ssub.s32 %s28, %s35
      %p383 = scmp.eq.s32.totalorder %s382, 0
      %s385 = sadd.s32 %s384, 1
      %s386 = scalar_select %p383, %s384, %s385
      %p389 = pneg %p383
      %p390 = scmp.eq.s32.totalorder %s28, 1
      %p391 = por %p389, %p390
      %p392 = scmp.ne.s32.totalorder %s384, %s387
      %p393 = scmp.eq.s32.totalorder %s28, 0
      %p394 = por %p392, %p393
      %p395 = scmp.ne.s32.totalorder %s384, %s387
      %p396 = scmp.eq.s32.totalorder %s33, 1
      %p397 = por %p395, %p396
      %p398 = scmp.ne.s32.totalorder %s387, %s388
      %p399 = scmp.eq.s32.totalorder %s33, 0
      %p400 = por %p398, %p399
      %p401 = scmp.ne.s32.totalorder %s387, %s388
      %p402 = scmp.eq.s32.totalorder %s34, 1
      %p403 = por %p401, %p402
      %p405 = scmp.ne.s32.totalorder %s388, %s404
      %p406 = scmp.eq.s32.totalorder %s34, 0
      %p407 = por %p405, %p406
      %p408 = scmp.le.s32.totalorder 1, %s28
      %p409 = scmp.lt.s32.totalorder %s28, 3
      %p410 = pnand %p408, %p409
      %p411 = pneg %p410
      // Predicated region
      $region9: #{tpu_custom_call.1} parent=5 // pred_check
        _
      $region10: #{tpu_custom_call.1} parent=5 // pred_check_branch
        %413 = sbr.rel (%p410) target = $region12
      $region11: #{tpu_custom_call.1} parent=5 // pred_region
        %s414 = ssub.s32 %s28, 1
        // Predicated region
        $region13: #{tpu_custom_call.1} parent=11 // pred_check
          %p415 = pneg %p101
        $region14: #{tpu_custom_call.1} parent=11 // pred_check_branch
          %417 = sbr.rel (%p415) target = $region16
        $region15: #{tpu_custom_call.1} parent=11 // pred_region
          _
        $region16: #{tpu_custom_call.1} parent=11 // pred_fallthru
          _
        // Predicated region
        $region17: #{tpu_custom_call.1} parent=11 // pred_check
          %p418 = pneg %p122
        $region18: #{tpu_custom_call.1} parent=11 // pred_check_branch
          %420 = sbr.rel (%p418) target = $region20
        $region19: #{tpu_custom_call.1} parent=11 // pred_region
          _
        $region20: #{tpu_custom_call.1} parent=11 // pred_fallthru
          _
        // Predicated region
        $region21: #{tpu_custom_call.1} parent=11 // pred_check
          %p421 = pneg %p143
        $region22: #{tpu_custom_call.1} parent=11 // pred_check_branch
          %423 = sbr.rel (%p421) target = $region24
        $region23: #{tpu_custom_call.1} parent=11 // pred_region
          %s425 = ssub.s32 256, 256
          %426 = vsyncadd [#allocation3], %s425
          %s427 = sshll.u32 [#allocation2], 4
          %s428 = int_to_ptr.vmem [resolvable:$true] %s427
          %433 = dma.hbm_to_vmem [thread:$0]  %s4, 256, %s428, [#allocation3], 64, 64, 4
        $region24: #{tpu_custom_call.1} parent=11 // pred_fallthru
          _
        // Predicated region
        $region25: #{tpu_custom_call.1} parent=11 // pred_check
          %p434 = pneg %p164
        $region26: #{tpu_custom_call.1} parent=11 // pred_check_branch
          %436 = sbr.rel (%p434) target = $region28
        $region27: #{tpu_custom_call.1} parent=11 // pred_region
          _
        $region28: #{tpu_custom_call.1} parent=11 // pred_fallthru
          _
        // Predicated region
        $region29: #{tpu_custom_call.1} parent=11 // pred_check
          %p437 = pneg %p185
        $region30: #{tpu_custom_call.1} parent=11 // pred_check_branch
          %439 = sbr.rel (%p437) target = $region32
        $region31: #{tpu_custom_call.1} parent=11 // pred_region
          %s441 = ssub.s32 256, 256
          %442 = vsyncadd [#allocation6], %s441
          %s443 = sshll.u32 [#allocation5], 4
          %s444 = int_to_ptr.vmem [resolvable:$true] %s443
          %449 = dma.hbm_to_vmem [thread:$0]  %s6, 256, %s444, [#allocation6], 64, 64, 4
        $region32: #{tpu_custom_call.1} parent=11 // pred_fallthru
          _
        // Predicated region
        $region33: #{tpu_custom_call.1} parent=11 // pred_check
          %p450 = pneg %p206
        $region34: #{tpu_custom_call.1} parent=11 // pred_check_branch
          %452 = sbr.rel (%p450) target = $region36
        $region35: #{tpu_custom_call.1} parent=11 // pred_region
          %s454 = ssub.s32 16, 16
          %455 = vsyncadd [#allocation6], %s454
          %s457 = sshll.u32 [#allocation7], 4
          %s458 = int_to_ptr.vmem [resolvable:$true] %s457
          %460 = dma.hbm_to_vmem [thread:$0]  %s7, 16, %s458, [#allocation6]
        $region36: #{tpu_custom_call.1} parent=11 // pred_fallthru
          _
        // Predicated region
        $region37: #{tpu_custom_call.1} parent=11 // pred_check
          %p461 = pneg %p227
        $region38: #{tpu_custom_call.1} parent=11 // pred_check_branch
          %463 = sbr.rel (%p461) target = $region40
        $region39: #{tpu_custom_call.1} parent=11 // pred_region
          %s465 = ssub.s32 16, 16
          %466 = vsyncadd [#allocation9], %s465
          %s468 = sshll.u32 [#allocation8], 4
          %s469 = int_to_ptr.vmem [resolvable:$true] %s468
          %471 = dma.hbm_to_vmem [thread:$0]  %s8, 16, %s469, [#allocation9]
        $region40: #{tpu_custom_call.1} parent=11 // pred_fallthru
          _
        // Predicated region
        $region41: #{tpu_custom_call.1} parent=11 // pred_check
          %p472 = pneg %p248
        $region42: #{tpu_custom_call.1} parent=11 // pred_check_branch
          %474 = sbr.rel (%p472) target = $region44
        $region43: #{tpu_custom_call.1} parent=11 // pred_region
          %s476 = ssub.s32 16, 16
          %477 = vsyncadd [#allocation9], %s476
          %s479 = sshll.u32 [#allocation10], 4
          %s480 = int_to_ptr.vmem [resolvable:$true] %s479
          %482 = dma.hbm_to_vmem [thread:$0]  %s9, 16, %s480, [#allocation9]
        $region44: #{tpu_custom_call.1} parent=11 // pred_fallthru
          _
        // Predicated region
        $region45: #{tpu_custom_call.1} parent=11 // pred_check
          %p483 = pneg %p269
        $region46: #{tpu_custom_call.1} parent=11 // pred_check_branch
          %485 = sbr.rel (%p483) target = $region48
        $region47: #{tpu_custom_call.1} parent=11 // pred_region
          _
        $region48: #{tpu_custom_call.1} parent=11 // pred_fallthru
          _
        // Predicated region
        $region49: #{tpu_custom_call.1} parent=11 // pred_check
          %p486 = pneg %p290
        $region50: #{tpu_custom_call.1} parent=11 // pred_check_branch
          %488 = sbr.rel (%p486) target = $region52
        $region51: #{tpu_custom_call.1} parent=11 // pred_region
          _
        $region52: #{tpu_custom_call.1} parent=11 // pred_fallthru
          _
        // Predicated region
        $region53: #{tpu_custom_call.1} parent=11 // pred_check
          %p489 = pneg %p311
        $region54: #{tpu_custom_call.1} parent=11 // pred_check_branch
          %491 = sbr.rel (%p489) target = $region56
        $region55: #{tpu_custom_call.1} parent=11 // pred_region
          _
        $region56: #{tpu_custom_call.1} parent=11 // pred_fallthru
          _
        // Predicated region
        $region57: #{tpu_custom_call.1} parent=11 // pred_check
          %p492 = pneg %p332
        $region58: #{tpu_custom_call.1} parent=11 // pred_check_branch
          %494 = sbr.rel (%p492) target = $region60
        $region59: #{tpu_custom_call.1} parent=11 // pred_region
          _
        $region60: #{tpu_custom_call.1} parent=11 // pred_fallthru
          _
        // Predicated region
        $region61: #{tpu_custom_call.1} parent=11 // pred_check
          %p495 = pneg %p353
        $region62: #{tpu_custom_call.1} parent=11 // pred_check_branch
          %497 = sbr.rel (%p495) target = $region64
        $region63: #{tpu_custom_call.1} parent=11 // pred_region
          _
        $region64: #{tpu_custom_call.1} parent=11 // pred_fallthru
          _
        // Predicated region
        $region65: #{tpu_custom_call.1} parent=11 // pred_check
          %p498 = pneg %p374
        $region66: #{tpu_custom_call.1} parent=11 // pred_check_branch
          %500 = sbr.rel (%p498) target = $region68
        $region67: #{tpu_custom_call.1} parent=11 // pred_region
          _
        $region68: #{tpu_custom_call.1} parent=11 // pred_fallthru
          _
      $region12: #{tpu_custom_call.1} parent=5 // pred_fallthru
        _
      %p501 = scmp.lt.s32.totalorder %s28, 2
      // Predicated region
      $region69: #{tpu_custom_call.1} parent=5 // pred_check
        %p502 = pneg %p501
      $region70: #{tpu_custom_call.1} parent=5 // pred_check_branch
        %504 = sbr.rel (%p502) target = $region72
      $region71: #{tpu_custom_call.1} parent=5 // pred_region
        // Predicated region
        $region73: #{tpu_custom_call.1} parent=71 // pred_check
          %p505 = pneg %p48
        $region74: #{tpu_custom_call.1} parent=71 // pred_check_branch
          %507 = sbr.rel (%p505) target = $region76
        $region75: #{tpu_custom_call.1} parent=71 // pred_region
          %p508 = scmp.lt.s32.totalorder %s28, 1
          %s509 = scalar_select %p508, %s28, 1
          %s510 = smul.addr %s509, 8
          %s511 = scalar_lea.vmem %s0, %s510
        $region76: #{tpu_custom_call.1} parent=71 // pred_fallthru
          _
        // Predicated region
        $region77: #{tpu_custom_call.1} parent=71 // pred_check
          %p512 = pneg %p74
        $region78: #{tpu_custom_call.1} parent=71 // pred_check_branch
          %514 = sbr.rel (%p512) target = $region80
        $region79: #{tpu_custom_call.1} parent=71 // pred_region
          %p515 = scmp.lt.s32.totalorder %s28, 1
          %s516 = scalar_select %p515, %s28, 1
          %s517 = smul.addr %s516, 8
          %s518 = scalar_lea.vmem %s1, %s517
        $region80: #{tpu_custom_call.1} parent=71 // pred_fallthru
          _
      $region72: #{tpu_custom_call.1} parent=5 // pred_fallthru
        _
      %p519 = scmp.le.s32.totalorder 1, %s28
      %p520 = scmp.lt.s32.totalorder %s28, 3
      %p521 = pnand %p519, %p520
      %p522 = pneg %p521
      // Predicated region
      $region81: #{tpu_custom_call.1} parent=5 // pred_check
        _
      $region82: #{tpu_custom_call.1} parent=5 // pred_check_branch
        %524 = sbr.rel (%p521) target = $region84
      $region83: #{tpu_custom_call.1} parent=5 // pred_region
        %s525 = ssub.s32 %s28, 1
        // Predicated region
        $region85: #{tpu_custom_call.1} parent=83 // pred_check
          %p526 = pneg %p143
        $region86: #{tpu_custom_call.1} parent=83 // pred_check_branch
          %528 = sbr.rel (%p526) target = $region88
        $region87: #{tpu_custom_call.1} parent=83 // pred_region
          %529 = dma.done [#allocation3], 256
        $region88: #{tpu_custom_call.1} parent=83 // pred_fallthru
          _
        // Predicated region
        $region89: #{tpu_custom_call.1} parent=83 // pred_check
          %p530 = pneg %p185
        $region90: #{tpu_custom_call.1} parent=83 // pred_check_branch
          %532 = sbr.rel (%p530) target = $region92
        $region91: #{tpu_custom_call.1} parent=83 // pred_region
          %533 = dma.done [#allocation6], 256
        $region92: #{tpu_custom_call.1} parent=83 // pred_fallthru
          _
        // Predicated region
        $region93: #{tpu_custom_call.1} parent=83 // pred_check
          %p534 = pneg %p206
        $region94: #{tpu_custom_call.1} parent=83 // pred_check_branch
          %536 = sbr.rel (%p534) target = $region96
        $region95: #{tpu_custom_call.1} parent=83 // pred_region
          %537 = dma.done [#allocation6], 16
        $region96: #{tpu_custom_call.1} parent=83 // pred_fallthru
          _
        // Predicated region
        $region97: #{tpu_custom_call.1} parent=83 // pred_check
          %p538 = pneg %p227
        $region98: #{tpu_custom_call.1} parent=83 // pred_check_branch
          %540 = sbr.rel (%p538) target = $region100
        $region99: #{tpu_custom_call.1} parent=83 // pred_region
          %541 = dma.done [#allocation9], 16
        $region100: #{tpu_custom_call.1} parent=83 // pred_fallthru
          _
        // Predicated region
        $region101: #{tpu_custom_call.1} parent=83 // pred_check
          %p542 = pneg %p248
        $region102: #{tpu_custom_call.1} parent=83 // pred_check_branch
          %544 = sbr.rel (%p542) target = $region104
        $region103: #{tpu_custom_call.1} parent=83 // pred_region
          %545 = dma.done [#allocation9], 16
        $region104: #{tpu_custom_call.1} parent=83 // pred_fallthru
          _
        %p546 = scmp.lt.s32.totalorder %s33, 1
        %s547 = scalar_select %p546, %s33, 1
        %s548 = smul.addr %s547, 8
        %s549 = scalar_lea.vmem %s0, %s548
        %p550 = pneg %p54
        %p551 = pneg %p51
        %p552 = scmp.lt.s32.totalorder %s33, 1
        %s553 = scalar_select %p552, %s33, 1
        %s554 = smul.addr %s553, 8
        %s555 = scalar_lea.vmem %s1, %s554
        %p556 = pneg %p80
        %p557 = pneg %p77
        %p558 = pneg %p101
        %p559 = pneg %p98
        %p560 = pneg %p122
        %p561 = pneg %p119
        %p562 = pneg %p143
        %p563 = pneg %p140
        %p564 = pneg %p164
        %p565 = pneg %p161
        %p566 = pneg %p185
        %p567 = pneg %p182
        %p568 = pneg %p206
        %p569 = pneg %p203
        %p570 = pneg %p227
        %p571 = pneg %p224
        %p572 = pneg %p248
        %p573 = pneg %p245
        %p574 = pneg %p269
        %p575 = pneg %p266
        %p576 = pneg %p290
        %p577 = pneg %p287
        %p578 = pneg %p311
        %p579 = pneg %p308
        %p580 = pneg %p332
        %p581 = pneg %p329
        %p582 = pneg %p353
        %p583 = pneg %p350
        %p584 = pneg %p374
        %p585 = pneg %p371
        %p586 = pneg %p400
        %p587 = pneg %p397
        %s588 = sand.u32 %s387, 1
        %s589 = scalar_lea.sflag [#allocation4], %s588
        %s590 = sand.u32 %s387, 1
        %s591 = smul.addr %s590, 8
        %s592 = scalar_lea.vmem [#allocation11], %s591
        %p593 = scmp.lt.s32.totalorder %s33, 1
        %s594 = scalar_select %p593, %s33, 1
        %s595 = smul.addr %s594, 8
        %s596 = scalar_lea.vmem %s0, %s595
        %p597 = scmp.lt.s32.totalorder %s33, 1
        %s598 = scalar_select %p597, %s33, 1
        %s599 = smul.addr %s598, 8
        %s600 = scalar_lea.vmem %s1, %s599
        %v602 = vld [vmem:[%s596] sm:$0xff]
        %v603 = vpack.c.bf16 %v602, %v602
        %v604 = vld [vmem:[%s600] sm:$0xff]
        %v605 = vpack.c.bf16 %v604, %v604
        %v606 = vadd.bf16 %v603, %v605
        %v607 = vld [vmem:[%s2] sm:$0xf]
        %v608 = vld [vmem:[%s2 + $0x4] sm:$0xf]
        %v609 = vld [vmem:[%s2 + $0x8] sm:$0xf]
        %v610 = vld [vmem:[%s2 + $0xc] sm:$0xf]
        %v611 = vld [vmem:[%s3] sm:$0x1]
        %v613 = vlaneseq
        %v614 = vshrl.u32 %v613, 7
        %v615 = vsub.s32 0, %v614
        %v616 = vrot.slane %v611, %v615
        %v622 = vunpack.c.l.b16 %v607
        %v623 = vunpack.c.l.b16 %v608
        %v624 = vunpack.c.l.b16 %v609
        %v625 = vunpack.c.l.b16 %v610
        %v626 = vpack.c.b16 %v623, %v622
        %v627 = vpack.c.b16 %v625, %v624
        %vm630 = vcmask 261120
        %v632 = vsel %vm630, %v606, 0
        %634 = vmatprep.subr.bf16.mxu0 0
        %635 = vmatpush1.bf16.msra.mxu0 %v626
        %636 = vmatprep.subr.bf16.mxu0 0
        %637 = vmatpush1.bf16.msra.mxu0 %v627
        %638 = vmatprep.subr.bf16.mxu0 0
        %639 = vmatpush1.bf16.msra.mxu0 0
        %640 = vmatprep.subr.bf16.mxu0 0
        %641 = vmatpush1.bf16.msra.mxu0 0
        %642 = vmatprep.subr.bf16.mxu0 0
        %643 = vmatpush1.bf16.msra.mxu0 0
        %644 = vmatprep.subr.bf16.mxu0 0
        %645 = vmatpush1.bf16.msra.mxu0 0
        %646 = vmatprep.subr.bf16.mxu0 0
        %647 = vmatpush1.bf16.msra.mxu0 0
        %648 = vmatprep.subr.bf16.mxu0 0
        %649 = vmatpush1.bf16.msra.mxu0 0
        %650 = vmatprep.subr.bf16.mxu0 0
        %651 = vmatpush1.bf16.msra.mxu0 0
        %652 = vmatprep.subr.bf16.mxu0 0
        %653 = vmatpush1.bf16.msra.mxu0 0
        %654 = vmatprep.subr.bf16.mxu0 0
        %655 = vmatpush1.bf16.msra.mxu0 0
        %656 = vmatprep.subr.bf16.mxu0 0
        %657 = vmatpush1.bf16.msra.mxu0 0
        %658 = vmatprep.subr.bf16.mxu0 0
        %659 = vmatpush1.bf16.msra.mxu0 0
        %660 = vmatprep.subr.bf16.mxu0 0
        %661 = vmatpush1.bf16.msra.mxu0 0
        %662 = vmatprep.subr.bf16.mxu0 0
        %663 = vmatpush1.bf16.msra.mxu0 0
        %664 = vmatprep.subr.bf16.mxu0 0
        %665 = vmatpush1.bf16.msra.mxu0 0
        %666 = vmatprep.mubr.bf16.mxu0 0
        %667 = vmatmul.mubr.bf16.gmra.mrb[0].mxu0 %v632
        %v668 = vpop.f32.mrb[0].mxu0
        %v669 = vadd.f32 %v616, %v668
        %v670 = vpop.f32.mrb[0].mxu0
        %v671 = vpop.f32.mrb[0].mxu0
        %v672 = vpop.f32.mrb[0].mxu0
        %673 = vdwg.mxu0
        %v674 = vld [vmem:[#allocation2] sm:$0xf]
        %v675 = vld [vmem:[#allocation2 + $0x4] sm:$0xf]
        %v676 = vld [vmem:[#allocation2 + $0x8] sm:$0xf]
        %v677 = vld [vmem:[#allocation2 + $0xc] sm:$0xf]
        %v678 = vld [vmem:[%s5] sm:$0x1]
        %v680 = vlaneseq
        %v681 = vshrl.u32 %v680, 7
        %v682 = vsub.s32 0, %v681
        %v683 = vrot.slane %v678, %v682
        %v689 = vunpack.c.l.b16 %v674
        %v690 = vunpack.c.l.b16 %v675
        %v691 = vunpack.c.l.b16 %v676
        %v692 = vunpack.c.l.b16 %v677
        %v693 = vpack.c.b16 %v690, %v689
        %v694 = vpack.c.b16 %v692, %v691
        %v698 = vsel %vm630, %v603, 0
        %700 = vmatprep.subr.bf16.mxu0 0
        %701 = vmatpush1.bf16.msra.mxu0 %v693
        %702 = vmatprep.subr.bf16.mxu0 0
        %703 = vmatpush1.bf16.msra.mxu0 %v694
        %704 = vmatprep.subr.bf16.mxu0 0
        %705 = vmatpush1.bf16.msra.mxu0 0
        %706 = vmatprep.subr.bf16.mxu0 0
        %707 = vmatpush1.bf16.msra.mxu0 0
        %708 = vmatprep.subr.bf16.mxu0 0
        %709 = vmatpush1.bf16.msra.mxu0 0
        %710 = vmatprep.subr.bf16.mxu0 0
        %711 = vmatpush1.bf16.msra.mxu0 0
        %712 = vmatprep.subr.bf16.mxu0 0
        %713 = vmatpush1.bf16.msra.mxu0 0
        %714 = vmatprep.subr.bf16.mxu0 0
        %715 = vmatpush1.bf16.msra.mxu0 0
        %716 = vmatprep.subr.bf16.mxu0 0
        %717 = vmatpush1.bf16.msra.mxu0 0
        %718 = vmatprep.subr.bf16.mxu0 0
        %719 = vmatpush1.bf16.msra.mxu0 0
        %720 = vmatprep.subr.bf16.mxu0 0
        %721 = vmatpush1.bf16.msra.mxu0 0
        %722 = vmatprep.subr.bf16.mxu0 0
        %723 = vmatpush1.bf16.msra.mxu0 0
        %724 = vmatprep.subr.bf16.mxu0 0
        %725 = vmatpush1.bf16.msra.mxu0 0
        %726 = vmatprep.subr.bf16.mxu0 0
        %727 = vmatpush1.bf16.msra.mxu0 0
        %728 = vmatprep.subr.bf16.mxu0 0
        %729 = vmatpush1.bf16.msra.mxu0 0
        %730 = vmatprep.subr.bf16.mxu0 0
        %731 = vmatpush1.bf16.msra.mxu0 0
        %732 = vmatprep.mubr.bf16.mxu0 0
        %733 = vmatmul.mubr.bf16.gmra.mrb[0].mxu0 %v698
        %v734 = vpop.f32.mrb[0].mxu0
        %v735 = vadd.f32 %v683, %v734
        %v736 = vpop.f32.mrb[0].mxu0
        %v737 = vpop.f32.mrb[0].mxu0
        %v738 = vpop.f32.mrb[0].mxu0
        %739 = vdwg.mxu0
        %v740 = vpack.c.bf16 %v669, %v669
        %v741 = vpack.c.bf16 %v735, %v735
        %743 = vrot.lane.b32.xlu0 %v740, 96
        %v744 = vpop.permute.xlu0 %743
        %vm745 = vcmask 64512
        %v747 = vsel %vm745, %v740, 0
        %v750 = vsel %vm745, %v744, 0
        %752 = vmatprep.subr.bf16.mxu0 0
        %753 = vmatpush1.bf16.xpose.msra.mxu0 %v750
        %754 = vmatprep.subr.bf16.mxu0 0
        %755 = vmatpush1.bf16.xpose.msra.mxu0 0
        %756 = vmatprep.subr.bf16.mxu0 0
        %757 = vmatpush1.bf16.xpose.msra.mxu0 0
        %758 = vmatprep.subr.bf16.mxu0 0
        %759 = vmatpush1.bf16.xpose.msra.mxu0 0
        %760 = vmatprep.subr.bf16.mxu0 0
        %761 = vmatpush1.bf16.xpose.msra.mxu0 0
        %762 = vmatprep.subr.bf16.mxu0 0
        %763 = vmatpush1.bf16.xpose.msra.mxu0 0
        %764 = vmatprep.subr.bf16.mxu0 0
        %765 = vmatpush1.bf16.xpose.msra.mxu0 0
        %766 = vmatprep.subr.bf16.mxu0 0
        %767 = vmatpush1.bf16.xpose.msra.mxu0 0
        %768 = vmatprep.subr.bf16.mxu0 0
        %769 = vmatpush1.bf16.xpose.msra.mxu0 0
        %770 = vmatprep.subr.bf16.mxu0 0
        %771 = vmatpush1.bf16.xpose.msra.mxu0 0
        %772 = vmatprep.subr.bf16.mxu0 0
        %773 = vmatpush1.bf16.xpose.msra.mxu0 0
        %774 = vmatprep.subr.bf16.mxu0 0
        %775 = vmatpush1.bf16.xpose.msra.mxu0 0
        %776 = vmatprep.subr.bf16.mxu0 0
        %777 = vmatpush1.bf16.xpose.msra.mxu0 0
        %778 = vmatprep.subr.bf16.mxu0 0
        %779 = vmatpush1.bf16.xpose.msra.mxu0 0
        %780 = vmatprep.subr.bf16.mxu0 0
        %781 = vmatpush1.bf16.xpose.msra.mxu0 0
        %782 = vmatprep.subr.bf16.mxu0 0
        %783 = vmatpush1.bf16.xpose.msra.mxu0 0
        %784 = vmatprep.mubr.bf16.mxu0 0
        %785 = vmatmul.mubr.bf16.gmra.mrb[0].mxu0 %v747
        %v786 = vpop.f32.mrb[0].mxu0
        %v787 = vadd.f32 0.0, %v786
        %v788 = vpop.f32.mrb[0].mxu0
        %v789 = vpop.f32.mrb[0].mxu0
        %v790 = vpop.f32.mrb[0].mxu0
        %791 = vdwg.mxu0
        %v792 = vsel %vm745, %v787, -inf
        %793 = vmax.xlane.f32.xlu0 %v792
        %v794 = vpop.xlane.xlu0 %793
        %v795 = vsub.f32 %v787, %v794
        %v796 = vmul.f32 %v795, 1.442695
        %v797 = vpow.pop %v796
        %v798 = vsel %vm745, %v797, 0.0
        %799 = vadd.xlane.f32.xlu0 %v798
        %v800 = vpop.xlane.xlu0 %799
        %v801 = vpack.c.bf16 %v797, %v797
        %v803 = vsel %vm745, %v801, 0
        %vm805 = vcmask 1043456
        %v807 = vsel %vm805, %v741, 0
        %809 = vmatprep.subr.bf16.mxu0 0
        %810 = vmatpush1.bf16.msra.mxu0 %v807
        %811 = vmatprep.subr.bf16.mxu0 0
        %812 = vmatpush1.bf16.msra.mxu0 0
        %813 = vmatprep.subr.bf16.mxu0 0
        %814 = vmatpush1.bf16.msra.mxu0 0
        %815 = vmatprep.subr.bf16.mxu0 0
        %816 = vmatpush1.bf16.msra.mxu0 0
        %817 = vmatprep.subr.bf16.mxu0 0
        %818 = vmatpush1.bf16.msra.mxu0 0
        %819 = vmatprep.subr.bf16.mxu0 0
        %820 = vmatpush1.bf16.msra.mxu0 0
        %821 = vmatprep.subr.bf16.mxu0 0
        %822 = vmatpush1.bf16.msra.mxu0 0
        %823 = vmatprep.subr.bf16.mxu0 0
        %824 = vmatpush1.bf16.msra.mxu0 0
        %825 = vmatprep.subr.bf16.mxu0 0
        %826 = vmatpush1.bf16.msra.mxu0 0
        %827 = vmatprep.subr.bf16.mxu0 0
        %828 = vmatpush1.bf16.msra.mxu0 0
        %829 = vmatprep.subr.bf16.mxu0 0
        %830 = vmatpush1.bf16.msra.mxu0 0
        %831 = vmatprep.subr.bf16.mxu0 0
        %832 = vmatpush1.bf16.msra.mxu0 0
        %833 = vmatprep.subr.bf16.mxu0 0
        %834 = vmatpush1.bf16.msra.mxu0 0
        %835 = vmatprep.subr.bf16.mxu0 0
        %836 = vmatpush1.bf16.msra.mxu0 0
        %837 = vmatprep.subr.bf16.mxu0 0
        %838 = vmatpush1.bf16.msra.mxu0 0
        %839 = vmatprep.subr.bf16.mxu0 0
        %840 = vmatpush1.bf16.msra.mxu0 0
        %841 = vmatprep.mubr.bf16.mxu0 0
        %842 = vmatmul.mubr.bf16.gmra.mrb[0].mxu0 %v803
        %v843 = vpop.f32.mrb[0].mxu0
        %v844 = vadd.f32 0.0, %v843
        %v845 = vpop.f32.mrb[0].mxu0
        %v846 = vpop.f32.mrb[0].mxu0
        %v847 = vpop.f32.mrb[0].mxu0
        %848 = vdwg.mxu0
        %v849 = vrcp.pop %v800
        %v850 = vmul.f32 %v844, %v849
        %851 = vrot.lane.b32.xlu0 %v740, 120
        %v852 = vpop.permute.xlu0 %851
        %853 = vrot.lane.b32.xlu0 %v740, 88
        %v854 = vpop.permute.xlu0 %853
        %v856 = vsel %vm745, %v852, 0
        %v859 = vsel %vm745, %v854, 0
        %861 = vmatprep.subr.bf16.mxu0 0
        %862 = vmatpush1.bf16.xpose.msra.mxu0 %v859
        %863 = vmatprep.subr.bf16.mxu0 0
        %864 = vmatpush1.bf16.xpose.msra.mxu0 0
        %865 = vmatprep.subr.bf16.mxu0 0
        %866 = vmatpush1.bf16.xpose.msra.mxu0 0
        %867 = vmatprep.subr.bf16.mxu0 0
        %868 = vmatpush1.bf16.xpose.msra.mxu0 0
        %869 = vmatprep.subr.bf16.mxu0 0
        %870 = vmatpush1.bf16.xpose.msra.mxu0 0
        %871 = vmatprep.subr.bf16.mxu0 0
        %872 = vmatpush1.bf16.xpose.msra.mxu0 0
        %873 = vmatprep.subr.bf16.mxu0 0
        %874 = vmatpush1.bf16.xpose.msra.mxu0 0
        %875 = vmatprep.subr.bf16.mxu0 0
        %876 = vmatpush1.bf16.xpose.msra.mxu0 0
        %877 = vmatprep.subr.bf16.mxu0 0
        %878 = vmatpush1.bf16.xpose.msra.mxu0 0
        %879 = vmatprep.subr.bf16.mxu0 0
        %880 = vmatpush1.bf16.xpose.msra.mxu0 0
        %881 = vmatprep.subr.bf16.mxu0 0
        %882 = vmatpush1.bf16.xpose.msra.mxu0 0
        %883 = vmatprep.subr.bf16.mxu0 0
        %884 = vmatpush1.bf16.xpose.msra.mxu0 0
        %885 = vmatprep.subr.bf16.mxu0 0
        %886 = vmatpush1.bf16.xpose.msra.mxu0 0
        %887 = vmatprep.subr.bf16.mxu0 0
        %888 = vmatpush1.bf16.xpose.msra.mxu0 0
        %889 = vmatprep.subr.bf16.mxu0 0
        %890 = vmatpush1.bf16.xpose.msra.mxu0 0
        %891 = vmatprep.subr.bf16.mxu0 0
        %892 = vmatpush1.bf16.xpose.msra.mxu0 0
        %893 = vmatprep.mubr.bf16.mxu0 0
        %894 = vmatmul.mubr.bf16.gmra.mrb[0].mxu0 %v856
        %v895 = vpop.f32.mrb[0].mxu0
        %v896 = vadd.f32 0.0, %v895
        %v897 = vpop.f32.mrb[0].mxu0
        %v898 = vpop.f32.mrb[0].mxu0
        %v899 = vpop.f32.mrb[0].mxu0
        %900 = vdwg.mxu0
        %v901 = vsel %vm745, %v896, -inf
        %902 = vmax.xlane.f32.xlu0 %v901
        %v903 = vpop.xlane.xlu0 %902
        %v904 = vsub.f32 %v896, %v903
        %v905 = vmul.f32 %v904, 1.442695
        %v906 = vpow.pop %v905
        %v907 = vsel %vm745, %v906, 0.0
        %908 = vadd.xlane.f32.xlu0 %v907
        %v909 = vpop.xlane.xlu0 %908
        %v910 = vpack.c.bf16 %v906, %v906
        %912 = vrot.lane.b32.xlu0 %v741, 120
        %v913 = vpop.permute.xlu0 %912
        %v915 = vsel %vm745, %v910, 0
        %v918 = vsel %vm805, %v913, 0
        %920 = vmatprep.subr.bf16.mxu0 0
        %921 = vmatpush1.bf16.msra.mxu0 %v918
        %922 = vmatprep.subr.bf16.mxu0 0
        %923 = vmatpush1.bf16.msra.mxu0 0
        %924 = vmatprep.subr.bf16.mxu0 0
        %925 = vmatpush1.bf16.msra.mxu0 0
        %926 = vmatprep.subr.bf16.mxu0 0
        %927 = vmatpush1.bf16.msra.mxu0 0
        %928 = vmatprep.subr.bf16.mxu0 0
        %929 = vmatpush1.bf16.msra.mxu0 0
        %930 = vmatprep.subr.bf16.mxu0 0
        %931 = vmatpush1.bf16.msra.mxu0 0
        %932 = vmatprep.subr.bf16.mxu0 0
        %933 = vmatpush1.bf16.msra.mxu0 0
        %934 = vmatprep.subr.bf16.mxu0 0
        %935 = vmatpush1.bf16.msra.mxu0 0
        %936 = vmatprep.subr.bf16.mxu0 0
        %937 = vmatpush1.bf16.msra.mxu0 0
        %938 = vmatprep.subr.bf16.mxu0 0
        %939 = vmatpush1.bf16.msra.mxu0 0
        %940 = vmatprep.subr.bf16.mxu0 0
        %941 = vmatpush1.bf16.msra.mxu0 0
        %942 = vmatprep.subr.bf16.mxu0 0
        %943 = vmatpush1.bf16.msra.mxu0 0
        %944 = vmatprep.subr.bf16.mxu0 0
        %945 = vmatpush1.bf16.msra.mxu0 0
        %946 = vmatprep.subr.bf16.mxu0 0
        %947 = vmatpush1.bf16.msra.mxu0 0
        %948 = vmatprep.subr.bf16.mxu0 0
        %949 = vmatpush1.bf16.msra.mxu0 0
        %950 = vmatprep.subr.bf16.mxu0 0
        %951 = vmatpush1.bf16.msra.mxu0 0
        %952 = vmatprep.mubr.bf16.mxu0 0
        %953 = vmatmul.mubr.bf16.gmra.mrb[0].mxu0 %v915
        %v954 = vpop.f32.mrb[0].mxu0
        %v955 = vadd.f32 0.0, %v954
        %v956 = vpop.f32.mrb[0].mxu0
        %v957 = vpop.f32.mrb[0].mxu0
        %v958 = vpop.f32.mrb[0].mxu0
        %959 = vdwg.mxu0
        %v960 = vrcp.pop %v909
        %v961 = vmul.f32 %v955, %v960
        %962 = vrot.lane.b32.xlu0 %v740, 112
        %v963 = vpop.permute.xlu0 %962
        %964 = vrot.lane.b32.xlu0 %v740, 80
        %v965 = vpop.permute.xlu0 %964
        %v967 = vsel %vm745, %v963, 0
        %v970 = vsel %vm745, %v965, 0
        %972 = vmatprep.subr.bf16.mxu0 0
        %973 = vmatpush1.bf16.xpose.msra.mxu0 %v970
        %974 = vmatprep.subr.bf16.mxu0 0
        %975 = vmatpush1.bf16.xpose.msra.mxu0 0
        %976 = vmatprep.subr.bf16.mxu0 0
        %977 = vmatpush1.bf16.xpose.msra.mxu0 0
        %978 = vmatprep.subr.bf16.mxu0 0
        %979 = vmatpush1.bf16.xpose.msra.mxu0 0
        %980 = vmatprep.subr.bf16.mxu0 0
        %981 = vmatpush1.bf16.xpose.msra.mxu0 0
        %982 = vmatprep.subr.bf16.mxu0 0
        %983 = vmatpush1.bf16.xpose.msra.mxu0 0
        %984 = vmatprep.subr.bf16.mxu0 0
        %985 = vmatpush1.bf16.xpose.msra.mxu0 0
        %986 = vmatprep.subr.bf16.mxu0 0
        %987 = vmatpush1.bf16.xpose.msra.mxu0 0
        %988 = vmatprep.subr.bf16.mxu0 0
        %989 = vmatpush1.bf16.xpose.msra.mxu0 0
        %990 = vmatprep.subr.bf16.mxu0 0
        %991 = vmatpush1.bf16.xpose.msra.mxu0 0
        %992 = vmatprep.subr.bf16.mxu0 0
        %993 = vmatpush1.bf16.xpose.msra.mxu0 0
        %994 = vmatprep.subr.bf16.mxu0 0
        %995 = vmatpush1.bf16.xpose.msra.mxu0 0
        %996 = vmatprep.subr.bf16.mxu0 0
        %997 = vmatpush1.bf16.xpose.msra.mxu0 0
        %998 = vmatprep.subr.bf16.mxu0 0
        %999 = vmatpush1.bf16.xpose.msra.mxu0 0
        %1000 = vmatprep.subr.bf16.mxu0 0
        %1001 = vmatpush1.bf16.xpose.msra.mxu0 0
        %1002 = vmatprep.subr.bf16.mxu0 0
        %1003 = vmatpush1.bf16.xpose.msra.mxu0 0
        %1004 = vmatprep.mubr.bf16.mxu0 0
        %1005 = vmatmul.mubr.bf16.gmra.mrb[0].mxu0 %v967
        %v1006 = vpop.f32.mrb[0].mxu0
        %v1007 = vadd.f32 0.0, %v1006
        %v1008 = vpop.f32.mrb[0].mxu0
        %v1009 = vpop.f32.mrb[0].mxu0
        %v1010 = vpop.f32.mrb[0].mxu0
        %1011 = vdwg.mxu0
        %v1012 = vsel %vm745, %v1007, -inf
        %1013 = vmax.xlane.f32.xlu0 %v1012
        %v1014 = vpop.xlane.xlu0 %1013
        %v1015 = vsub.f32 %v1007, %v1014
        %v1016 = vmul.f32 %v1015, 1.442695
        %v1017 = vpow.pop %v1016
        %v1018 = vsel %vm745, %v1017, 0.0
        %1019 = vadd.xlane.f32.xlu0 %v1018
        %v1020 = vpop.xlane.xlu0 %1019
        %v1021 = vpack.c.bf16 %v1017, %v1017
        %1022 = vrot.lane.b32.xlu0 %v741, 112
        %v1023 = vpop.permute.xlu0 %1022
        %v1025 = vsel %vm745, %v1021, 0
        %v1028 = vsel %vm805, %v1023, 0
        %1030 = vmatprep.subr.bf16.mxu0 0
        %1031 = vmatpush1.bf16.msra.mxu0 %v1028
        %1032 = vmatprep.subr.bf16.mxu0 0
        %1033 = vmatpush1.bf16.msra.mxu0 0
        %1034 = vmatprep.subr.bf16.mxu0 0
        %1035 = vmatpush1.bf16.msra.mxu0 0
        %1036 = vmatprep.subr.bf16.mxu0 0
        %1037 = vmatpush1.bf16.msra.mxu0 0
        %1038 = vmatprep.subr.bf16.mxu0 0
        %1039 = vmatpush1.bf16.msra.mxu0 0
        %1040 = vmatprep.subr.bf16.mxu0 0
        %1041 = vmatpush1.bf16.msra.mxu0 0
        %1042 = vmatprep.subr.bf16.mxu0 0
        %1043 = vmatpush1.bf16.msra.mxu0 0
        %1044 = vmatprep.subr.bf16.mxu0 0
        %1045 = vmatpush1.bf16.msra.mxu0 0
        %1046 = vmatprep.subr.bf16.mxu0 0
        %1047 = vmatpush1.bf16.msra.mxu0 0
        %1048 = vmatprep.subr.bf16.mxu0 0
        %1049 = vmatpush1.bf16.msra.mxu0 0
        %1050 = vmatprep.subr.bf16.mxu0 0
        %1051 = vmatpush1.bf16.msra.mxu0 0
        %1052 = vmatprep.subr.bf16.mxu0 0
        %1053 = vmatpush1.bf16.msra.mxu0 0
        %1054 = vmatprep.subr.bf16.mxu0 0
        %1055 = vmatpush1.bf16.msra.mxu0 0
        %1056 = vmatprep.subr.bf16.mxu0 0
        %1057 = vmatpush1.bf16.msra.mxu0 0
        %1058 = vmatprep.subr.bf16.mxu0 0
        %1059 = vmatpush1.bf16.msra.mxu0 0
        %1060 = vmatprep.subr.bf16.mxu0 0
        %1061 = vmatpush1.bf16.msra.mxu0 0
        %1062 = vmatprep.mubr.bf16.mxu0 0
        %1063 = vmatmul.mubr.bf16.gmra.mrb[0].mxu0 %v1025
        %v1064 = vpop.f32.mrb[0].mxu0
        %v1065 = vadd.f32 0.0, %v1064
        %v1066 = vpop.f32.mrb[0].mxu0
        %v1067 = vpop.f32.mrb[0].mxu0
        %v1068 = vpop.f32.mrb[0].mxu0
        %1069 = vdwg.mxu0
        %v1070 = vrcp.pop %v1020
        %v1071 = vmul.f32 %v1065, %v1070
        %1072 = vrot.lane.b32.xlu0 %v740, 104
        %v1073 = vpop.permute.xlu0 %1072
        %1074 = vrot.lane.b32.xlu0 %v740, 72
        %v1075 = vpop.permute.xlu0 %1074
        %v1077 = vsel %vm745, %v1073, 0
        %v1080 = vsel %vm745, %v1075, 0
        %1082 = vmatprep.subr.bf16.mxu0 0
        %1083 = vmatpush1.bf16.xpose.msra.mxu0 %v1080
        %1084 = vmatprep.subr.bf16.mxu0 0
        %1085 = vmatpush1.bf16.xpose.msra.mxu0 0
        %1086 = vmatprep.subr.bf16.mxu0 0
        %1087 = vmatpush1.bf16.xpose.msra.mxu0 0
        %1088 = vmatprep.subr.bf16.mxu0 0
        %1089 = vmatpush1.bf16.xpose.msra.mxu0 0
        %1090 = vmatprep.subr.bf16.mxu0 0
        %1091 = vmatpush1.bf16.xpose.msra.mxu0 0
        %1092 = vmatprep.subr.bf16.mxu0 0
        %1093 = vmatpush1.bf16.xpose.msra.mxu0 0
        %1094 = vmatprep.subr.bf16.mxu0 0
        %1095 = vmatpush1.bf16.xpose.msra.mxu0 0
        %1096 = vmatprep.subr.bf16.mxu0 0
        %1097 = vmatpush1.bf16.xpose.msra.mxu0 0
        %1098 = vmatprep.subr.bf16.mxu0 0
        %1099 = vmatpush1.bf16.xpose.msra.mxu0 0
        %1100 = vmatprep.subr.bf16.mxu0 0
        %1101 = vmatpush1.bf16.xpose.msra.mxu0 0
        %1102 = vmatprep.subr.bf16.mxu0 0
        %1103 = vmatpush1.bf16.xpose.msra.mxu0 0
        %1104 = vmatprep.subr.bf16.mxu0 0
        %1105 = vmatpush1.bf16.xpose.msra.mxu0 0
        %1106 = vmatprep.subr.bf16.mxu0 0
        %1107 = vmatpush1.bf16.xpose.msra.mxu0 0
        %1108 = vmatprep.subr.bf16.mxu0 0
        %1109 = vmatpush1.bf16.xpose.msra.mxu0 0
        %1110 = vmatprep.subr.bf16.mxu0 0
        %1111 = vmatpush1.bf16.xpose.msra.mxu0 0
        %1112 = vmatprep.subr.bf16.mxu0 0
        %1113 = vmatpush1.bf16.xpose.msra.mxu0 0
        %1114 = vmatprep.mubr.bf16.mxu0 0
        %1115 = vmatmul.mubr.bf16.gmra.mrb[0].mxu0 %v1077
        %v1116 = vpop.f32.mrb[0].mxu0
        %v1117 = vadd.f32 0.0, %v1116
        %v1118 = vpop.f32.mrb[0].mxu0
        %v1119 = vpop.f32.mrb[0].mxu0
        %v1120 = vpop.f32.mrb[0].mxu0
        %1121 = vdwg.mxu0
        %v1122 = vsel %vm745, %v1117, -inf
        %1123 = vmax.xlane.f32.xlu0 %v1122
        %v1124 = vpop.xlane.xlu0 %1123
        %v1125 = vsub.f32 %v1117, %v1124
        %v1126 = vmul.f32 %v1125, 1.442695
        %v1127 = vpow.pop %v1126
        %v1128 = vsel %vm745, %v1127, 0.0
        %1129 = vadd.xlane.f32.xlu0 %v1128
        %v1130 = vpop.xlane.xlu0 %1129
        %v1131 = vpack.c.bf16 %v1127, %v1127
        %1132 = vrot.lane.b32.xlu0 %v741, 104
        %v1133 = vpop.permute.xlu0 %1132
        %v1135 = vsel %vm745, %v1131, 0
        %v1138 = vsel %vm805, %v1133, 0
        %1140 = vmatprep.subr.bf16.mxu0 0
        %1141 = vmatpush1.bf16.msra.mxu0 %v1138
        %1142 = vmatprep.subr.bf16.mxu0 0
        %1143 = vmatpush1.bf16.msra.mxu0 0
        %1144 = vmatprep.subr.bf16.mxu0 0
        %1145 = vmatpush1.bf16.msra.mxu0 0
        %1146 = vmatprep.subr.bf16.mxu0 0
        %1147 = vmatpush1.bf16.msra.mxu0 0
        %1148 = vmatprep.subr.bf16.mxu0 0
        %1149 = vmatpush1.bf16.msra.mxu0 0
        %1150 = vmatprep.subr.bf16.mxu0 0
        %1151 = vmatpush1.bf16.msra.mxu0 0
        %1152 = vmatprep.subr.bf16.mxu0 0
        %1153 = vmatpush1.bf16.msra.mxu0 0
        %1154 = vmatprep.subr.bf16.mxu0 0
        %1155 = vmatpush1.bf16.msra.mxu0 0
        %1156 = vmatprep.subr.bf16.mxu0 0
        %1157 = vmatpush1.bf16.msra.mxu0 0
        %1158 = vmatprep.subr.bf16.mxu0 0
        %1159 = vmatpush1.bf16.msra.mxu0 0
        %1160 = vmatprep.subr.bf16.mxu0 0
        %1161 = vmatpush1.bf16.msra.mxu0 0
        %1162 = vmatprep.subr.bf16.mxu0 0
        %1163 = vmatpush1.bf16.msra.mxu0 0
        %1164 = vmatprep.subr.bf16.mxu0 0
        %1165 = vmatpush1.bf16.msra.mxu0 0
        %1166 = vmatprep.subr.bf16.mxu0 0
        %1167 = vmatpush1.bf16.msra.mxu0 0
        %1168 = vmatprep.subr.bf16.mxu0 0
        %1169 = vmatpush1.bf16.msra.mxu0 0
        %1170 = vmatprep.subr.bf16.mxu0 0
        %1171 = vmatpush1.bf16.msra.mxu0 0
        %1172 = vmatprep.mubr.bf16.mxu0 0
        %1173 = vmatmul.mubr.bf16.gmra.mrb[0].mxu0 %v1135
        %v1174 = vpop.f32.mrb[0].mxu0
        %v1175 = vadd.f32 0.0, %v1174
        %v1176 = vpop.f32.mrb[0].mxu0
        %v1177 = vpop.f32.mrb[0].mxu0
        %v1178 = vpop.f32.mrb[0].mxu0
        %1179 = vdwg.mxu0
        %v1180 = vrcp.pop %v1130
        %v1181 = vmul.f32 %v1175, %v1180
        %1183 = vrot.lane.b32.xlu0 %v961, 8
        %v1184 = vpop.permute.xlu0 %1183
        %1187 = vrot.lane.b32.xlu0 %v1071, 16
        %v1188 = vpop.permute.xlu0 %1187
        %1191 = vrot.lane.b32.xlu0 %v1181, 24
        %v1192 = vpop.permute.xlu0 %1191
        %v1194 = vsel %vm745, %v850, %v1184
        %vm1195 = vcmask 130048
        %v1196 = vsel %vm1195, %v1194, %v1188
        %vm1197 = vcmask 195584
        %v1198 = vsel %vm1197, %v1196, %v1192
        %v1199 = vpack.c.bf16 %v1198, %v1198
        %v1200 = vld [vmem:[#allocation5] sm:$0xf]
        %v1201 = vld [vmem:[#allocation5 + $0x4] sm:$0xf]
        %v1202 = vld [vmem:[#allocation5 + $0x8] sm:$0xf]
        %v1203 = vld [vmem:[#allocation5 + $0xc] sm:$0xf]
        %v1204 = vld [vmem:[#allocation7] sm:$0x1]
        %v1206 = vlaneseq
        %v1207 = vshrl.u32 %v1206, 7
        %v1208 = vsub.s32 0, %v1207
        %v1209 = vrot.slane %v1204, %v1208
        %v1215 = vunpack.c.l.b16 %v1200
        %v1216 = vunpack.c.l.b16 %v1201
        %v1217 = vunpack.c.l.b16 %v1202
        %v1218 = vunpack.c.l.b16 %v1203
        %v1219 = vpack.c.b16 %v1216, %v1215
        %v1220 = vpack.c.b16 %v1218, %v1217
        %v1224 = vsel %vm630, %v1199, 0
        %1226 = vmatprep.subr.bf16.mxu0 0
        %1227 = vmatpush1.bf16.msra.mxu0 %v1219
        %1228 = vmatprep.subr.bf16.mxu0 0
        %1229 = vmatpush1.bf16.msra.mxu0 %v1220
        %1230 = vmatprep.subr.bf16.mxu0 0
        %1231 = vmatpush1.bf16.msra.mxu0 0
        %1232 = vmatprep.subr.bf16.mxu0 0
        %1233 = vmatpush1.bf16.msra.mxu0 0
        %1234 = vmatprep.subr.bf16.mxu0 0
        %1235 = vmatpush1.bf16.msra.mxu0 0
        %1236 = vmatprep.subr.bf16.mxu0 0
        %1237 = vmatpush1.bf16.msra.mxu0 0
        %1238 = vmatprep.subr.bf16.mxu0 0
        %1239 = vmatpush1.bf16.msra.mxu0 0
        %1240 = vmatprep.subr.bf16.mxu0 0
        %1241 = vmatpush1.bf16.msra.mxu0 0
        %1242 = vmatprep.subr.bf16.mxu0 0
        %1243 = vmatpush1.bf16.msra.mxu0 0
        %1244 = vmatprep.subr.bf16.mxu0 0
        %1245 = vmatpush1.bf16.msra.mxu0 0
        %1246 = vmatprep.subr.bf16.mxu0 0
        %1247 = vmatpush1.bf16.msra.mxu0 0
        %1248 = vmatprep.subr.bf16.mxu0 0
        %1249 = vmatpush1.bf16.msra.mxu0 0
        %1250 = vmatprep.subr.bf16.mxu0 0
        %1251 = vmatpush1.bf16.msra.mxu0 0
        %1252 = vmatprep.subr.bf16.mxu0 0
        %1253 = vmatpush1.bf16.msra.mxu0 0
        %1254 = vmatprep.subr.bf16.mxu0 0
        %1255 = vmatpush1.bf16.msra.mxu0 0
        %1256 = vmatprep.subr.bf16.mxu0 0
        %1257 = vmatpush1.bf16.msra.mxu0 0
        %1258 = vmatprep.mubr.bf16.mxu0 0
        %1259 = vmatmul.mubr.bf16.gmra.mrb[0].mxu0 %v1224
        %v1260 = vpop.f32.mrb[0].mxu0
        %v1261 = vadd.f32 %v1209, %v1260
        %v1262 = vpop.f32.mrb[0].mxu0
        %v1263 = vpop.f32.mrb[0].mxu0
        %v1264 = vpop.f32.mrb[0].mxu0
        %1265 = vdwg.mxu0
        %v1266 = vadd.f32 %v602, %v1261
        %v1267 = vsel %vm630, %v1266, 0.0
        %1268 = vadd.xlane.f32.xlu0 %v1267
        %v1269 = vpop.xlane.xlu0 %1268
        %v1270 = vrcp.pop 32.0
        %v1271 = vmul.f32 %v1269, %v1270
        %v1272 = vsub.f32 %v1266, %v1271
        %v1273 = vmul.f32 %v1272, %v1272
        %v1274 = vsel %vm630, %v1273, 0.0
        %1275 = vadd.xlane.f32.xlu0 %v1274
        %v1276 = vpop.xlane.xlu0 %1275
        %v1277 = vmul.f32 %v1276, %v1270
        %v1278 = vadd.f32 %v1277, 1e-05
        %v1279 = vrsqrt.pop %v1278
        %v1280 = vmul.f32 %v1272, %v1279
        %v1281 = vld [vmem:[#allocation8] sm:$0x1]
        %v1283 = vlaneseq
        %v1284 = vshrl.u32 %v1283, 7
        %v1285 = vsub.s32 0, %v1284
        %v1286 = vrot.slane %v1281, %v1285
        %v1288 = vmul.f32 %v1280, %v1286
        %v1289 = vld [vmem:[#allocation10] sm:$0x1]
        %v1291 = vlaneseq
        %v1292 = vshrl.u32 %v1291, 7
        %v1293 = vsub.s32 0, %v1292
        %v1294 = vrot.slane %v1289, %v1293
        %v1296 = vadd.f32 %v1288, %v1294
        %v1297 = vpack.c.bf16 %v1296, %v1296
        %v1298 = vld [vmem:[%s10] sm:$0xf]
        %v1299 = vld [vmem:[%s10 + $0x4] sm:$0xf]
        %v1300 = vld [vmem:[%s10 + $0x8] sm:$0xf]
        %v1301 = vld [vmem:[%s10 + $0xc] sm:$0xf]
        %v1302 = vld [vmem:[%s11] sm:$0x1]
        %v1304 = vlaneseq
        %v1305 = vshrl.u32 %v1304, 7
        %v1306 = vsub.s32 0, %v1305
        %v1307 = vrot.slane %v1302, %v1306
        %v1313 = vunpack.c.l.b16 %v1298
        %v1314 = vunpack.c.l.b16 %v1299
        %v1315 = vunpack.c.l.b16 %v1300
        %v1316 = vunpack.c.l.b16 %v1301
        %v1317 = vpack.c.b16 %v1314, %v1313
        %v1318 = vpack.c.b16 %v1316, %v1315
        %v1322 = vsel %vm630, %v1297, 0
        %1324 = vmatprep.subr.bf16.mxu0 0
        %1325 = vmatpush1.bf16.msra.mxu0 %v1317
        %1326 = vmatprep.subr.bf16.mxu0 0
        %1327 = vmatpush1.bf16.msra.mxu0 %v1318
        %1328 = vmatprep.subr.bf16.mxu0 0
        %1329 = vmatpush1.bf16.msra.mxu0 0
        %1330 = vmatprep.subr.bf16.mxu0 0
        %1331 = vmatpush1.bf16.msra.mxu0 0
        %1332 = vmatprep.subr.bf16.mxu0 0
        %1333 = vmatpush1.bf16.msra.mxu0 0
        %1334 = vmatprep.subr.bf16.mxu0 0
        %1335 = vmatpush1.bf16.msra.mxu0 0
        %1336 = vmatprep.subr.bf16.mxu0 0
        %1337 = vmatpush1.bf16.msra.mxu0 0
        %1338 = vmatprep.subr.bf16.mxu0 0
        %1339 = vmatpush1.bf16.msra.mxu0 0
        %1340 = vmatprep.subr.bf16.mxu0 0
        %1341 = vmatpush1.bf16.msra.mxu0 0
        %1342 = vmatprep.subr.bf16.mxu0 0
        %1343 = vmatpush1.bf16.msra.mxu0 0
        %1344 = vmatprep.subr.bf16.mxu0 0
        %1345 = vmatpush1.bf16.msra.mxu0 0
        %1346 = vmatprep.subr.bf16.mxu0 0
        %1347 = vmatpush1.bf16.msra.mxu0 0
        %1348 = vmatprep.subr.bf16.mxu0 0
        %1349 = vmatpush1.bf16.msra.mxu0 0
        %1350 = vmatprep.subr.bf16.mxu0 0
        %1351 = vmatpush1.bf16.msra.mxu0 0
        %1352 = vmatprep.subr.bf16.mxu0 0
        %1353 = vmatpush1.bf16.msra.mxu0 0
        %1354 = vmatprep.subr.bf16.mxu0 0
        %1355 = vmatpush1.bf16.msra.mxu0 0
        %1356 = vmatprep.mubr.bf16.mxu0 0
        %1357 = vmatmul.mubr.bf16.gmra.mrb[0].mxu0 %v1322
        %v1358 = vpop.f32.mrb[0].mxu0
        %v1359 = vadd.f32 %v1307, %v1358
        %v1360 = vpop.f32.mrb[0].mxu0
        %v1361 = vpop.f32.mrb[0].mxu0
        %v1362 = vpop.f32.mrb[0].mxu0
        %1363 = vdwg.mxu0
        %v1364 = vmax.f32 %v1359, 0.0
        %v1365 = vpack.c.bf16 %v1364, %v1364
        %v1366 = vld [vmem:[%s12] sm:$0xf]
        %v1367 = vld [vmem:[%s12 + $0x4] sm:$0xf]
        %v1368 = vld [vmem:[%s12 + $0x8] sm:$0xf]
        %v1369 = vld [vmem:[%s12 + $0xc] sm:$0xf]
        %v1370 = vld [vmem:[%s12 + $0x10] sm:$0xf]
        %v1371 = vld [vmem:[%s12 + $0x14] sm:$0xf]
        %v1372 = vld [vmem:[%s12 + $0x18] sm:$0xf]
        %v1373 = vld [vmem:[%s12 + $0x1c] sm:$0xf]
        %v1374 = vld [vmem:[%s13] sm:$0x1]
        %v1376 = vlaneseq
        %v1377 = vshrl.u32 %v1376, 7
        %v1378 = vsub.s32 0, %v1377
        %v1379 = vrot.slane %v1374, %v1378
        %v1389 = vunpack.c.l.b16 %v1366
        %v1390 = vunpack.c.l.b16 %v1367
        %v1391 = vunpack.c.l.b16 %v1368
        %v1392 = vunpack.c.l.b16 %v1369
        %v1393 = vunpack.c.l.b16 %v1370
        %v1394 = vunpack.c.l.b16 %v1371
        %v1395 = vunpack.c.l.b16 %v1372
        %v1396 = vunpack.c.l.b16 %v1373
        %v1397 = vpack.c.b16 %v1390, %v1389
        %v1398 = vpack.c.b16 %v1392, %v1391
        %v1399 = vpack.c.b16 %v1394, %v1393
        %v1400 = vpack.c.b16 %v1396, %v1395
        %vm1405 = vcmask 523264
        %v1407 = vsel %vm1405, %v1365, 0
        %1409 = vmatprep.subr.bf16.mxu0 0
        %1410 = vmatpush1.bf16.msra.mxu0 %v1397
        %1411 = vmatprep.subr.bf16.mxu0 0
        %1412 = vmatpush1.bf16.msra.mxu0 %v1398
        %1413 = vmatprep.subr.bf16.mxu0 0
        %1414 = vmatpush1.bf16.msra.mxu0 %v1399
        %1415 = vmatprep.subr.bf16.mxu0 0
        %1416 = vmatpush1.bf16.msra.mxu0 %v1400
        %1417 = vmatprep.subr.bf16.mxu0 0
        %1418 = vmatpush1.bf16.msra.mxu0 0
        %1419 = vmatprep.subr.bf16.mxu0 0
        %1420 = vmatpush1.bf16.msra.mxu0 0
        %1421 = vmatprep.subr.bf16.mxu0 0
        %1422 = vmatpush1.bf16.msra.mxu0 0
        %1423 = vmatprep.subr.bf16.mxu0 0
        %1424 = vmatpush1.bf16.msra.mxu0 0
        %1425 = vmatprep.subr.bf16.mxu0 0
        %1426 = vmatpush1.bf16.msra.mxu0 0
        %1427 = vmatprep.subr.bf16.mxu0 0
        %1428 = vmatpush1.bf16.msra.mxu0 0
        %1429 = vmatprep.subr.bf16.mxu0 0
        %1430 = vmatpush1.bf16.msra.mxu0 0
        %1431 = vmatprep.subr.bf16.mxu0 0
        %1432 = vmatpush1.bf16.msra.mxu0 0
        %1433 = vmatprep.subr.bf16.mxu0 0
        %1434 = vmatpush1.bf16.msra.mxu0 0
        %1435 = vmatprep.subr.bf16.mxu0 0
        %1436 = vmatpush1.bf16.msra.mxu0 0
        %1437 = vmatprep.subr.bf16.mxu0 0
        %1438 = vmatpush1.bf16.msra.mxu0 0
        %1439 = vmatprep.subr.bf16.mxu0 0
        %1440 = vmatpush1.bf16.msra.mxu0 0
        %1441 = vmatprep.mubr.bf16.mxu0 0
        %1442 = vmatmul.mubr.bf16.gmra.mrb[0].mxu0 %v1407
        %v1443 = vpop.f32.mrb[0].mxu0
        %v1444 = vadd.f32 %v1379, %v1443
        %v1445 = vpop.f32.mrb[0].mxu0
        %v1446 = vpop.f32.mrb[0].mxu0
        %v1447 = vpop.f32.mrb[0].mxu0
        %1448 = vdwg.mxu0
        %v1449 = vadd.f32 %v1296, %v1444
        %v1450 = vsel %vm630, %v1449, 0.0
        %1451 = vadd.xlane.f32.xlu0 %v1450
        %v1452 = vpop.xlane.xlu0 %1451
        %v1453 = vmul.f32 %v1452, %v1270
        %v1454 = vsub.f32 %v1449, %v1453
        %v1455 = vmul.f32 %v1454, %v1454
        %v1456 = vsel %vm630, %v1455, 0.0
        %1457 = vadd.xlane.f32.xlu0 %v1456
        %v1458 = vpop.xlane.xlu0 %1457
        %v1459 = vmul.f32 %v1458, %v1270
        %v1460 = vadd.f32 %v1459, 1e-05
        %v1461 = vrsqrt.pop %v1460
        %v1462 = vmul.f32 %v1454, %v1461
        %v1463 = vld [vmem:[%s14] sm:$0x1]
        %v1465 = vlaneseq
        %v1466 = vshrl.u32 %v1465, 7
        %v1467 = vsub.s32 0, %v1466
        %v1468 = vrot.slane %v1463, %v1467
        %v1470 = vmul.f32 %v1462, %v1468
        %v1471 = vld [vmem:[%s15] sm:$0x1]
        %v1473 = vlaneseq
        %v1474 = vshrl.u32 %v1473, 7
        %v1475 = vsub.s32 0, %v1474
        %v1476 = vrot.slane %v1471, %v1475
        %v1478 = vadd.f32 %v1470, %v1476
        %1479 = vst.msk [vmem:[%s592] sm:$0xff] %vm630, %v1478
        %s1480 = sand.u32 %s387, 1
        %s1481 = scalar_lea.sflag [#allocation4], %s1480
        %s1482 = sand.u32 %s387, 1
        %s1483 = smul.addr %s1482, 8
        %s1484 = scalar_lea.vmem [#allocation11], %s1483
        // Predicated region
        $region105: #{tpu_custom_call.1} parent=83 // pred_check
          %p1485 = pneg %p397
        $region106: #{tpu_custom_call.1} parent=83 // pred_check_branch
          %1487 = sbr.rel (%p1485) target = $region108
        $region107: #{tpu_custom_call.1} parent=83 // pred_region
          %s1489 = ssub.s32 128, 128
          %1490 = vsyncadd %s1481, %s1489
          %s1491 = smul.addr %s33, 128
          %s1492 = scalar_lea.hbm %s16, %s1491
          %s1494 = sshll.u32 %s1484, 4
          %s1495 = int_to_ptr.vmem [resolvable:$true] %s1494
          %1497 = dma.vmem_to_hbm [thread:$0]  %s1495, 128, %s1492, %s1481
        $region108: #{tpu_custom_call.1} parent=83 // pred_fallthru
          _
      $region84: #{tpu_custom_call.1} parent=5 // pred_fallthru
        _
      %p1498 = scmp.le.s32.totalorder 2, %s28
      // Predicated region
      $region109: #{tpu_custom_call.1} parent=5 // pred_check
        %p1499 = pneg %p1498
      $region110: #{tpu_custom_call.1} parent=5 // pred_check_branch
        %1501 = sbr.rel (%p1499) target = $region112
      $region111: #{tpu_custom_call.1} parent=5 // pred_region
        %s1502 = ssub.s32 %s28, 2
        // Predicated region
        $region113: #{tpu_custom_call.1} parent=111 // pred_check
          %p1503 = pneg %p403
        $region114: #{tpu_custom_call.1} parent=111 // pred_check_branch
          %1505 = sbr.rel (%p1503) target = $region116
        $region115: #{tpu_custom_call.1} parent=111 // pred_region
          %s1506 = sand.u32 %s388, 1
          %s1507 = scalar_lea.sflag [#allocation4], %s1506
          %s1508 = sand.u32 %s388, 1
          %s1509 = smul.addr %s1508, 8
          %s1510 = scalar_lea.vmem [#allocation11], %s1509
          %1511 = dma.done %s1507, 128
        $region116: #{tpu_custom_call.1} parent=111 // pred_fallthru
          _
      $region112: #{tpu_custom_call.1} parent=5 // pred_fallthru
        _
    $region6: #{tpu_custom_call.1} parent=1 // loop_footer
      %s32 = sadd.s32 1, %s28
    $region7: #{tpu_custom_call.1} parent=1 // loop_footer_branch
      %27 = sbr.rel target = $region3
    $region8: #{tpu_custom_call.1} parent=1 // loop_exit
      _
    %1512 = vsyncpa [#allocation3], 1
    %s1513 = scalar_lea.sflag [#allocation3], 1
    %1514 = vsyncpa %s1513, 1
    %1515 = vsyncpa [#allocation6], 1
    %1516 = vsyncpa [#allocation9], 1
    %1517 = vsyncpa [#allocation4], 1
    %s1518 = scalar_lea.sflag [#allocation4], 1
    %1519 = vsyncpa %s1518, 1

// kernel: tpu_custom_call.1
$region0: #{tpu_custom_call.1}
  #allocation0 [shape = 'u32[]', space=smem, size = 0x4, offset = 0x4, fixed_abs, tag = 'smem constant byte address 0x4 - core index']
  #allocation1 [shape = 'u32[144,128]{1,0:T(1,128)}', space=vmem, size = 0x12000, scoped, tag = 'internal scratch']
  %s0 = inlined_call_operand.vmem [shape: f32[16,32], index: 0, kind: input, shape index: {}]
  %s1 = inlined_call_operand.vmem [shape: f32[16,32], index: 1, kind: input, shape index: {}]
  %s2 = inlined_call_operand.vmem [shape: bf16[32,64], index: 2, kind: input, shape index: {}]
  %s3 = inlined_call_operand.vmem [shape: f32[1,64], index: 3, kind: input, shape index: {}]
  %s4 = inlined_call_operand.hbm [shape: bf16[32,32], index: 4, kind: input, shape index: {}]
  %s5 = inlined_call_operand.vmem [shape: f32[1,32], index: 5, kind: input, shape index: {}]
  %s6 = inlined_call_operand.hbm [shape: bf16[32,32], index: 6, kind: input, shape index: {}]
  %s7 = inlined_call_operand.hbm [shape: f32[1,32], index: 7, kind: input, shape index: {}]
  %s8 = inlined_call_operand.hbm [shape: f32[1,32], index: 8, kind: input, shape index: {}]
  %s9 = inlined_call_operand.hbm [shape: f32[1,32], index: 9, kind: input, shape index: {}]
  %s10 = inlined_call_operand.vmem [shape: bf16[32,64], index: 10, kind: input, shape index: {}]
  %s11 = inlined_call_operand.vmem [shape: f32[1,64], index: 11, kind: input, shape index: {}]
  %s12 = inlined_call_operand.vmem [shape: bf16[64,32], index: 12, kind: input, shape index: {}]
  %s13 = inlined_call_operand.vmem [shape: f32[1,32], index: 13, kind: input, shape index: {}]
  %s14 = inlined_call_operand.vmem [shape: f32[1,32], index: 14, kind: input, shape index: {}]
  %s15 = inlined_call_operand.vmem [shape: f32[1,32], index: 15, kind: input, shape index: {}]
  %s16 = inlined_call_operand.hbm [shape: f32[16,32], index: 16, kind: output, shape index: {}]
  %s17 = sld [smem:[#allocation0]]
  $region117: #{tpu_custom_call.1} parent=0
    _
  %s19 = ssub.s32 1, %s17
  %s20 = scalar_select 0, %s19, %s17
  $region1: #{tpu_custom_call.1} parent=0
    #allocation2 [shape = 'u8[8192]{0}', space=vmem, size = 0x2000, scoped, tag = 'input window, operand 4, single buffered']
    #allocation3 [shape = 's32[2]{0}', space=sflag, size = 0x8, scoped, tag = 'scoped memory for tpu_custom_call.1']
    #allocation4 [shape = 's32[2]{0}', space=sflag, size = 0x8, scoped, tag = 'scoped memory for tpu_custom_call.1']
    #allocation5 [shape = 'u8[8192]{0}', space=vmem, size = 0x2000, scoped, tag = 'input window, operand 6, single buffered']
    #allocation6 [shape = 's32[1]{0}', space=sflag, size = 0x4, scoped, tag = 'scoped memory for tpu_custom_call.1']
    #allocation7 [shape = 'u8[512]{0}', space=vmem, size = 0x400, scoped, tag = 'input window, operand 7, single buffered']
    #allocation8 [shape = 'u8[512]{0}', space=vmem, size = 0x400, scoped, tag = 'input window, operand 8, single buffered']
    #allocation9 [shape = 's32[1]{0}', space=sflag, size = 0x4, scoped, tag = 'scoped memory for tpu_custom_call.1']
    #allocation10 [shape = 'u8[512]{0}', space=vmem, size = 0x400, scoped, tag = 'input window, operand 9, single buffered']
    #allocation11 [shape = 'u8[8192]{0}', space=vmem, size = 0x2000, scoped, tag = 'output window, operand 0']
    %21 = vsyncpa [#allocation3], 0
    %22 = vsyncpa [#allocation6], 0
    %23 = vsyncpa [#allocation9], 0
    %24 = vsyncpa [#allocation4], 0
    %s25 = scalar_lea.sflag [#allocation4], 1
    %26 = vsyncpa %s25, 0
    loop: start=0, step=1, limit=4
    $region2: #{tpu_custom_call.1} parent=1 // loop_pre_header
      _
    $region3: #{tpu_custom_call.1} parent=1 // loop_header
      %s28 = sphi 0, %s32
      %p29 = scmp.ge.s32.totalorder %s28, 4
      %s38 = sphi 0, %s40
      %s41 = sphi 0, %s38
      %s42 = sphi 0, %s41
      %s58 = sphi 0, %s42
      %s64 = sphi 0, %s66
      %s67 = sphi 0, %s64
      %s68 = sphi 0, %s67
      %s84 = sphi 0, %s68
      %s88 = sphi 0, %s88
      %s90 = sphi 0, %s88
      %s91 = sphi 0, %s90
      %s105 = sphi 0, %s91
      %s109 = sphi 0, %s109
      %s111 = sphi 0, %s109
      %s112 = sphi 0, %s111
      %s126 = sphi 0, %s112
      %s130 = sphi 0, %s130
      %s132 = sphi 0, %s130
      %s133 = sphi 0, %s132
      %s147 = sphi 0, %s133
      %s151 = sphi 0, %s151
      %s153 = sphi 0, %s151
      %s154 = sphi 0, %s153
      %s168 = sphi 0, %s154
      %s172 = sphi 0, %s172
      %s174 = sphi 0, %s172
      %s175 = sphi 0, %s174
      %s189 = sphi 0, %s175
      %s193 = sphi 0, %s193
      %s195 = sphi 0, %s193
      %s196 = sphi 0, %s195
      %s210 = sphi 0, %s196
      %s214 = sphi 0, %s214
      %s216 = sphi 0, %s214
      %s217 = sphi 0, %s216
      %s231 = sphi 0, %s217
      %s235 = sphi 0, %s235
      %s237 = sphi 0, %s235
      %s238 = sphi 0, %s237
      %s252 = sphi 0, %s238
      %s256 = sphi 0, %s256
      %s258 = sphi 0, %s256
      %s259 = sphi 0, %s258
      %s273 = sphi 0, %s259
      %s277 = sphi 0, %s277
      %s279 = sphi 0, %s277
      %s280 = sphi 0, %s279
      %s294 = sphi 0, %s280
      %s298 = sphi 0, %s298
      %s300 = sphi 0, %s298
      %s301 = sphi 0, %s300
      %s315 = sphi 0, %s301
      %s319 = sphi 0, %s319
      %s321 = sphi 0, %s319
      %s322 = sphi 0, %s321
      %s336 = sphi 0, %s322
      %s340 = sphi 0, %s340
      %s342 = sphi 0, %s340
      %s343 = sphi 0, %s342
      %s357 = sphi 0, %s343
      %s361 = sphi 0, %s361
      %s363 = sphi 0, %s361
      %s364 = sphi 0, %s363
      %s378 = sphi 0, %s364
      %s384 = sphi 0, %s386
      %s387 = sphi 0, %s384
      %s388 = sphi 0, %s387
      %s404 = sphi 0, %s388
    $region4: #{tpu_custom_call.1} parent=1 // loop_header_branch
      %31 = sbr.rel (%p29) target = $region8
    $region5: #{tpu_custom_call.1} parent=1 // loop_body
      %s33 = ssub.s32 %s28, 1
      %s34 = ssub.s32 %s28, 2
      %s35 = sadd.s32 %s28, 1
      %s36 = ssub.s32 %s28, %s35
      %p37 = scmp.eq.s32.totalorder %s36, 0
      %s39 = sadd.s32 %s38, 1
      %s40 = scalar_select %p37, %s38, %s39
      %p43 = pneg %p37
      %p44 = scmp.eq.s32.totalorder %s28, 1
      %p45 = por %p43, %p44
      %p46 = scmp.ne.s32.totalorder %s38, %s41
      %p47 = scmp.eq.s32.totalorder %s28, 0
      %p48 = por %p46, %p47
      %p49 = scmp.ne.s32.totalorder %s38, %s41
      %p50 = scmp.eq.s32.totalorder %s33, 1
      %p51 = por %p49, %p50
      %p52 = scmp.ne.s32.totalorder %s41, %s42
      %p53 = scmp.eq.s32.totalorder %s33, 0
      %p54 = por %p52, %p53
      %p55 = scmp.ne.s32.totalorder %s41, %s42
      %p56 = scmp.eq.s32.totalorder %s34, 1
      %p57 = por %p55, %p56
      %p59 = scmp.ne.s32.totalorder %s42, %s58
      %p60 = scmp.eq.s32.totalorder %s34, 0
      %p61 = por %p59, %p60
      %s62 = ssub.s32 %s28, %s35
      %p63 = scmp.eq.s32.totalorder %s62, 0
      %s65 = sadd.s32 %s64, 1
      %s66 = scalar_select %p63, %s64, %s65
      %p69 = pneg %p63
      %p70 = scmp.eq.s32.totalorder %s28, 1
      %p71 = por %p69, %p70
      %p72 = scmp.ne.s32.totalorder %s64, %s67
      %p73 = scmp.eq.s32.totalorder %s28, 0
      %p74 = por %p72, %p73
      %p75 = scmp.ne.s32.totalorder %s64, %s67
      %p76 = scmp.eq.s32.totalorder %s33, 1
      %p77 = por %p75, %p76
      %p78 = scmp.ne.s32.totalorder %s67, %s68
      %p79 = scmp.eq.s32.totalorder %s33, 0
      %p80 = por %p78, %p79
      %p81 = scmp.ne.s32.totalorder %s67, %s68
      %p82 = scmp.eq.s32.totalorder %s34, 1
      %p83 = por %p81, %p82
      %p85 = scmp.ne.s32.totalorder %s68, %s84
      %p86 = scmp.eq.s32.totalorder %s34, 0
      %p87 = por %p85, %p86
      %s89 = sadd.s32 %s88, 1
      %p92 = scmp.eq.s32.totalorder %s28, 1
      %p93 = scmp.ne.s32.totalorder %s88, %s90
      %p94 = scmp.eq.s32.totalorder %s28, 0
      %p95 = por %p93, %p94
      %p96 = scmp.ne.s32.totalorder %s88, %s90
      %p97 = scmp.eq.s32.totalorder %s33, 1
      %p98 = por %p96, %p97
      %p99 = scmp.ne.s32.totalorder %s90, %s91
      %p100 = scmp.eq.s32.totalorder %s33, 0
      %p101 = por %p99, %p100
      %p102 = scmp.ne.s32.totalorder %s90, %s91
      %p103 = scmp.eq.s32.totalorder %s34, 1
      %p104 = por %p102, %p103
      %p106 = scmp.ne.s32.totalorder %s91, %s105
      %p107 = scmp.eq.s32.totalorder %s34, 0
      %p108 = por %p106, %p107
      %s110 = sadd.s32 %s109, 1
      %p113 = scmp.eq.s32.totalorder %s28, 1
      %p114 = scmp.ne.s32.totalorder %s109, %s111
      %p115 = scmp.eq.s32.totalorder %s28, 0
      %p116 = por %p114, %p115
      %p117 = scmp.ne.s32.totalorder %s109, %s111
      %p118 = scmp.eq.s32.totalorder %s33, 1
      %p119 = por %p117, %p118
      %p120 = scmp.ne.s32.totalorder %s111, %s112
      %p121 = scmp.eq.s32.totalorder %s33, 0
      %p122 = por %p120, %p121
      %p123 = scmp.ne.s32.totalorder %s111, %s112
      %p124 = scmp.eq.s32.totalorder %s34, 1
      %p125 = por %p123, %p124
      %p127 = scmp.ne.s32.totalorder %s112, %s126
      %p128 = scmp.eq.s32.totalorder %s34, 0
      %p129 = por %p127, %p128
      %s131 = sadd.s32 %s130, 1
      %p134 = scmp.eq.s32.totalorder %s28, 1
      %p135 = scmp.ne.s32.totalorder %s130, %s132
      %p136 = scmp.eq.s32.totalorder %s28, 0
      %p137 = por %p135, %p136
      %p138 = scmp.ne.s32.totalorder %s130, %s132
      %p139 = scmp.eq.s32.totalorder %s33, 1
      %p140 = por %p138, %p139
      %p141 = scmp.ne.s32.totalorder %s132, %s133
      %p142 = scmp.eq.s32.totalorder %s33, 0
      %p143 = por %p141, %p142
      %p144 = scmp.ne.s32.totalorder %s132, %s133
      %p145 = scmp.eq.s32.totalorder %s34, 1
      %p146 = por %p144, %p145
      %p148 = scmp.ne.s32.totalorder %s133, %s147
      %p149 = scmp.eq.s32.totalorder %s34, 0
      %p150 = por %p148, %p149
      %s152 = sadd.s32 %s151, 1
      %p155 = scmp.eq.s32.totalorder %s28, 1
      %p156 = scmp.ne.s32.totalorder %s151, %s153
      %p157 = scmp.eq.s32.totalorder %s28, 0
      %p158 = por %p156, %p157
      %p159 = scmp.ne.s32.totalorder %s151, %s153
      %p160 = scmp.eq.s32.totalorder %s33, 1
      %p161 = por %p159, %p160
      %p162 = scmp.ne.s32.totalorder %s153, %s154
      %p163 = scmp.eq.s32.totalorder %s33, 0
      %p164 = por %p162, %p163
      %p165 = scmp.ne.s32.totalorder %s153, %s154
      %p166 = scmp.eq.s32.totalorder %s34, 1
      %p167 = por %p165, %p166
      %p169 = scmp.ne.s32.totalorder %s154, %s168
      %p170 = scmp.eq.s32.totalorder %s34, 0
      %p171 = por %p169, %p170
      %s173 = sadd.s32 %s172, 1
      %p176 = scmp.eq.s32.totalorder %s28, 1
      %p177 = scmp.ne.s32.totalorder %s172, %s174
      %p178 = scmp.eq.s32.totalorder %s28, 0
      %p179 = por %p177, %p178
      %p180 = scmp.ne.s32.totalorder %s172, %s174
      %p181 = scmp.eq.s32.totalorder %s33, 1
      %p182 = por %p180, %p181
      %p183 = scmp.ne.s32.totalorder %s174, %s175
      %p184 = scmp.eq.s32.totalorder %s33, 0
      %p185 = por %p183, %p184
      %p186 = scmp.ne.s32.totalorder %s174, %s175
      %p187 = scmp.eq.s32.totalorder %s34, 1
      %p188 = por %p186, %p187
      %p190 = scmp.ne.s32.totalorder %s175, %s189
      %p191 = scmp.eq.s32.totalorder %s34, 0
      %p192 = por %p190, %p191
      %s194 = sadd.s32 %s193, 1
      %p197 = scmp.eq.s32.totalorder %s28, 1
      %p198 = scmp.ne.s32.totalorder %s193, %s195
      %p199 = scmp.eq.s32.totalorder %s28, 0
      %p200 = por %p198, %p199
      %p201 = scmp.ne.s32.totalorder %s193, %s195
      %p202 = scmp.eq.s32.totalorder %s33, 1
      %p203 = por %p201, %p202
      %p204 = scmp.ne.s32.totalorder %s195, %s196
      %p205 = scmp.eq.s32.totalorder %s33, 0
      %p206 = por %p204, %p205
      %p207 = scmp.ne.s32.totalorder %s195, %s196
      %p208 = scmp.eq.s32.totalorder %s34, 1
      %p209 = por %p207, %p208
      %p211 = scmp.ne.s32.totalorder %s196, %s210
      %p212 = scmp.eq.s32.totalorder %s34, 0
      %p213 = por %p211, %p212
      %s215 = sadd.s32 %s214, 1
      %p218 = scmp.eq.s32.totalorder %s28, 1
      %p219 = scmp.ne.s32.totalorder %s214, %s216
      %p220 = scmp.eq.s32.totalorder %s28, 0
      %p221 = por %p219, %p220
      %p222 = scmp.ne.s32.totalorder %s214, %s216
      %p223 = scmp.eq.s32.totalorder %s33, 1
      %p224 = por %p222, %p223
      %p225 = scmp.ne.s32.totalorder %s216, %s217
      %p226 = scmp.eq.s32.totalorder %s33, 0
      %p227 = por %p225, %p226
      %p228 = scmp.ne.s32.totalorder %s216, %s217
      %p229 = scmp.eq.s32.totalorder %s34, 1
      %p230 = por %p228, %p229
      %p232 = scmp.ne.s32.totalorder %s217, %s231
      %p233 = scmp.eq.s32.totalorder %s34, 0
      %p234 = por %p232, %p233
      %s236 = sadd.s32 %s235, 1
      %p239 = scmp.eq.s32.totalorder %s28, 1
      %p240 = scmp.ne.s32.totalorder %s235, %s237
      %p241 = scmp.eq.s32.totalorder %s28, 0
      %p242 = por %p240, %p241
      %p243 = scmp.ne.s32.totalorder %s235, %s237
      %p244 = scmp.eq.s32.totalorder %s33, 1
      %p245 = por %p243, %p244
      %p246 = scmp.ne.s32.totalorder %s237, %s238
      %p247 = scmp.eq.s32.totalorder %s33, 0
      %p248 = por %p246, %p247
      %p249 = scmp.ne.s32.totalorder %s237, %s238
      %p250 = scmp.eq.s32.totalorder %s34, 1
      %p251 = por %p249, %p250
      %p253 = scmp.ne.s32.totalorder %s238, %s252
      %p254 = scmp.eq.s32.totalorder %s34, 0
      %p255 = por %p253, %p254
      %s257 = sadd.s32 %s256, 1
      %p260 = scmp.eq.s32.totalorder %s28, 1
      %p261 = scmp.ne.s32.totalorder %s256, %s258
      %p262 = scmp.eq.s32.totalorder %s28, 0
      %p263 = por %p261, %p262
      %p264 = scmp.ne.s32.totalorder %s256, %s258
      %p265 = scmp.eq.s32.totalorder %s33, 1
      %p266 = por %p264, %p265
      %p267 = scmp.ne.s32.totalorder %s258, %s259
      %p268 = scmp.eq.s32.totalorder %s33, 0
      %p269 = por %p267, %p268
      %p270 = scmp.ne.s32.totalorder %s258, %s259
      %p271 = scmp.eq.s32.totalorder %s34, 1
      %p272 = por %p270, %p271
      %p274 = scmp.ne.s32.totalorder %s259, %s273
      %p275 = scmp.eq.s32.totalorder %s34, 0
      %p276 = por %p274, %p275
      %s278 = sadd.s32 %s277, 1
      %p281 = scmp.eq.s32.totalorder %s28, 1
      %p282 = scmp.ne.s32.totalorder %s277, %s279
      %p283 = scmp.eq.s32.totalorder %s28, 0
      %p284 = por %p282, %p283
      %p285 = scmp.ne.s32.totalorder %s277, %s279
      %p286 = scmp.eq.s32.totalorder %s33, 1
      %p287 = por %p285, %p286
      %p288 = scmp.ne.s32.totalorder %s279, %s280
      %p289 = scmp.eq.s32.totalorder %s33, 0
      %p290 = por %p288, %p289
      %p291 = scmp.ne.s32.totalorder %s279, %s280
      %p292 = scmp.eq.s32.totalorder %s34, 1
      %p293 = por %p291, %p292
      %p295 = scmp.ne.s32.totalorder %s280, %s294
      %p296 = scmp.eq.s32.totalorder %s34, 0
      %p297 = por %p295, %p296
      %s299 = sadd.s32 %s298, 1
      %p302 = scmp.eq.s32.totalorder %s28, 1
      %p303 = scmp.ne.s32.totalorder %s298, %s300
      %p304 = scmp.eq.s32.totalorder %s28, 0
      %p305 = por %p303, %p304
      %p306 = scmp.ne.s32.totalorder %s298, %s300
      %p307 = scmp.eq.s32.totalorder %s33, 1
      %p308 = por %p306, %p307
      %p309 = scmp.ne.s32.totalorder %s300, %s301
      %p310 = scmp.eq.s32.totalorder %s33, 0
      %p311 = por %p309, %p310
      %p312 = scmp.ne.s32.totalorder %s300, %s301
      %p313 = scmp.eq.s32.totalorder %s34, 1
      %p314 = por %p312, %p313
      %p316 = scmp.ne.s32.totalorder %s301, %s315
      %p317 = scmp.eq.s32.totalorder %s34, 0
      %p318 = por %p316, %p317
      %s320 = sadd.s32 %s319, 1
      %p323 = scmp.eq.s32.totalorder %s28, 1
      %p324 = scmp.ne.s32.totalorder %s319, %s321
      %p325 = scmp.eq.s32.totalorder %s28, 0
      %p326 = por %p324, %p325
      %p327 = scmp.ne.s32.totalorder %s319, %s321
      %p328 = scmp.eq.s32.totalorder %s33, 1
      %p329 = por %p327, %p328
      %p330 = scmp.ne.s32.totalorder %s321, %s322
      %p331 = scmp.eq.s32.totalorder %s33, 0
      %p332 = por %p330, %p331
      %p333 = scmp.ne.s32.totalorder %s321, %s322
      %p334 = scmp.eq.s32.totalorder %s34, 1
      %p335 = por %p333, %p334
      %p337 = scmp.ne.s32.totalorder %s322, %s336
      %p338 = scmp.eq.s32.totalorder %s34, 0
      %p339 = por %p337, %p338
      %s341 = sadd.s32 %s340, 1
      %p344 = scmp.eq.s32.totalorder %s28, 1
      %p345 = scmp.ne.s32.totalorder %s340, %s342
      %p346 = scmp.eq.s32.totalorder %s28, 0
      %p347 = por %p345, %p346
      %p348 = scmp.ne.s32.totalorder %s340, %s342
      %p349 = scmp.eq.s32.totalorder %s33, 1
      %p350 = por %p348, %p349
      %p351 = scmp.ne.s32.totalorder %s342, %s343
      %p352 = scmp.eq.s32.totalorder %s33, 0
      %p353 = por %p351, %p352
      %p354 = scmp.ne.s32.totalorder %s342, %s343
      %p355 = scmp.eq.s32.totalorder %s34, 1
      %p356 = por %p354, %p355
      %p358 = scmp.ne.s32.totalorder %s343, %s357
      %p359 = scmp.eq.s32.totalorder %s34, 0
      %p360 = por %p358, %p359
      %s362 = sadd.s32 %s361, 1
      %p365 = scmp.eq.s32.totalorder %s28, 1
      %p366 = scmp.ne.s32.totalorder %s361, %s363
      %p367 = scmp.eq.s32.totalorder %s28, 0
      %p368 = por %p366, %p367
      %p369 = scmp.ne.s32.totalorder %s361, %s363
      %p370 = scmp.eq.s32.totalorder %s33, 1
      %p371 = por %p369, %p370
      %p372 = scmp.ne.s32.totalorder %s363, %s364
      %p373 = scmp.eq.s32.totalorder %s33, 0
      %p374 = por %p372, %p373
      %p375 = scmp.ne.s32.totalorder %s363, %s364
      %p376 = scmp.eq.s32.totalorder %s34, 1
      %p377 = por %p375, %p376
      %p379 = scmp.ne.s32.totalorder %s364, %s378
      %p380 = scmp.eq.s32.totalorder %s34, 0
      %p381 = por %p379, %p380
      %s382 = ssub.s32 %s28, %s35
      %p383 = scmp.eq.s32.totalorder %s382, 0
      %s385 = sadd.s32 %s384, 1
      %s386 = scalar_select %p383, %s384, %s385
      %p389 = pneg %p383
      %p390 = scmp.eq.s32.totalorder %s28, 1
      %p391 = por %p389, %p390
      %p392 = scmp.ne.s32.totalorder %s384, %s387
      %p393 = scmp.eq.s32.totalorder %s28, 0
      %p394 = por %p392, %p393
      %p395 = scmp.ne.s32.totalorder %s384, %s387
      %p396 = scmp.eq.s32.totalorder %s33, 1
      %p397 = por %p395, %p396
      %p398 = scmp.ne.s32.totalorder %s387, %s388
      %p399 = scmp.eq.s32.totalorder %s33, 0
      %p400 = por %p398, %p399
      %p401 = scmp.ne.s32.totalorder %s387, %s388
      %p402 = scmp.eq.s32.totalorder %s34, 1
      %p403 = por %p401, %p402
      %p405 = scmp.ne.s32.totalorder %s388, %s404
      %p406 = scmp.eq.s32.totalorder %s34, 0
      %p407 = por %p405, %p406
      %p408 = scmp.le.s32.totalorder 1, %s28
      %p409 = scmp.lt.s32.totalorder %s28, 3
      %p410 = pnand %p408, %p409
      %p411 = pneg %p410
      // Predicated region
      $region9: #{tpu_custom_call.1} parent=5 // pred_check
        _
      $region10: #{tpu_custom_call.1} parent=5 // pred_check_branch
        %413 = sbr.rel (%p410) target = $region12
      $region11: #{tpu_custom_call.1} parent=5 // pred_region
        %s414 = ssub.s32 %s28, 1
        // Predicated region
        $region13: #{tpu_custom_call.1} parent=11 // pred_check
          %p415 = pneg %p101
        $region14: #{tpu_custom_call.1} parent=11 // pred_check_branch
          %417 = sbr.rel (%p415) target = $region16
        $region15: #{tpu_custom_call.1} parent=11 // pred_region
          _
        $region16: #{tpu_custom_call.1} parent=11 // pred_fallthru
          _
        // Predicated region
        $region17: #{tpu_custom_call.1} parent=11 // pred_check
          %p418 = pneg %p122
        $region18: #{tpu_custom_call.1} parent=11 // pred_check_branch
          %420 = sbr.rel (%p418) target = $region20
        $region19: #{tpu_custom_call.1} parent=11 // pred_region
          _
        $region20: #{tpu_custom_call.1} parent=11 // pred_fallthru
          _
        // Predicated region
        $region21: #{tpu_custom_call.1} parent=11 // pred_check
          %p421 = pneg %p143
        $region22: #{tpu_custom_call.1} parent=11 // pred_check_branch
          %423 = sbr.rel (%p421) target = $region24
        $region23: #{tpu_custom_call.1} parent=11 // pred_region
          %s425 = ssub.s32 256, 256
          %426 = vsyncadd [#allocation3], %s425
          %s427 = sshll.u32 [#allocation2], 4
          %s428 = int_to_ptr.vmem [resolvable:$true] %s427
          %433 = dma.hbm_to_vmem [thread:$0]  %s4, 256, %s428, [#allocation3], 64, 64, 4
        $region24: #{tpu_custom_call.1} parent=11 // pred_fallthru
          _
        // Predicated region
        $region25: #{tpu_custom_call.1} parent=11 // pred_check
          %p434 = pneg %p164
        $region26: #{tpu_custom_call.1} parent=11 // pred_check_branch
          %436 = sbr.rel (%p434) target = $region28
        $region27: #{tpu_custom_call.1} parent=11 // pred_region
          _
        $region28: #{tpu_custom_call.1} parent=11 // pred_fallthru
          _
        // Predicated region
        $region29: #{tpu_custom_call.1} parent=11 // pred_check
          %p437 = pneg %p185
        $region30: #{tpu_custom_call.1} parent=11 // pred_check_branch
          %439 = sbr.rel (%p437) target = $region32
        $region31: #{tpu_custom_call.1} parent=11 // pred_region
          %s441 = ssub.s32 256, 256
          %442 = vsyncadd [#allocation6], %s441
          %s443 = sshll.u32 [#allocation5], 4
          %s444 = int_to_ptr.vmem [resolvable:$true] %s443
          %449 = dma.hbm_to_vmem [thread:$0]  %s6, 256, %s444, [#allocation6], 64, 64, 4
        $region32: #{tpu_custom_call.1} parent=11 // pred_fallthru
          _
        // Predicated region
        $region33: #{tpu_custom_call.1} parent=11 // pred_check
          %p450 = pneg %p206
        $region34: #{tpu_custom_call.1} parent=11 // pred_check_branch
          %452 = sbr.rel (%p450) target = $region36
        $region35: #{tpu_custom_call.1} parent=11 // pred_region
          %s454 = ssub.s32 16, 16
          %455 = vsyncadd [#allocation6], %s454
          %s457 = sshll.u32 [#allocation7], 4
          %s458 = int_to_ptr.vmem [resolvable:$true] %s457
          %460 = dma.hbm_to_vmem [thread:$0]  %s7, 16, %s458, [#allocation6]
        $region36: #{tpu_custom_call.1} parent=11 // pred_fallthru
          _
        // Predicated region
        $region37: #{tpu_custom_call.1} parent=11 // pred_check
          %p461 = pneg %p227
        $region38: #{tpu_custom_call.1} parent=11 // pred_check_branch
          %463 = sbr.rel (%p461) target = $region40
        $region39: #{tpu_custom_call.1} parent=11 // pred_region
          %s465 = ssub.s32 16, 16
          %466 = vsyncadd [#allocation9], %s465
          %s468 = sshll.u32 [#allocation8], 4
          %s469 = int_to_ptr.vmem [resolvable:$true] %s468
          %471 = dma.hbm_to_vmem [thread:$0]  %s8, 16, %s469, [#allocation9]
        $region40: #{tpu_custom_call.1} parent=11 // pred_fallthru
          _
        // Predicated region
        $region41: #{tpu_custom_call.1} parent=11 // pred_check
          %p472 = pneg %p248
        $region42: #{tpu_custom_call.1} parent=11 // pred_check_branch
          %474 = sbr.rel (%p472) target = $region44
        $region43: #{tpu_custom_call.1} parent=11 // pred_region
          %s476 = ssub.s32 16, 16
          %477 = vsyncadd [#allocation9], %s476
          %s479 = sshll.u32 [#allocation10], 4
          %s480 = int_to_ptr.vmem [resolvable:$true] %s479
          %482 = dma.hbm_to_vmem [thread:$0]  %s9, 16, %s480, [#allocation9]
        $region44: #{tpu_custom_call.1} parent=11 // pred_fallthru
          _
        // Predicated region
        $region45: #{tpu_custom_call.1} parent=11 // pred_check
          %p483 = pneg %p269
        $region46: #{tpu_custom_call.1} parent=11 // pred_check_branch
          %485 = sbr.rel (%p483) target = $region48
        $region47: #{tpu_custom_call.1} parent=11 // pred_region
          _
        $region48: #{tpu_custom_call.1} parent=11 // pred_fallthru
          _
        // Predicated region
        $region49: #{tpu_custom_call.1} parent=11 // pred_check
          %p486 = pneg %p290
        $region50: #{tpu_custom_call.1} parent=11 // pred_check_branch
          %488 = sbr.rel (%p486) target = $region52
        $region51: #{tpu_custom_call.1} parent=11 // pred_region
          _
        $region52: #{tpu_custom_call.1} parent=11 // pred_fallthru
          _
        // Predicated region
        $region53: #{tpu_custom_call.1} parent=11 // pred_check
          %p489 = pneg %p311
        $region54: #{tpu_custom_call.1} parent=11 // pred_check_branch
          %491 = sbr.rel (%p489) target = $region56
        $region55: #{tpu_custom_call.1} parent=11 // pred_region
          _
        $region56: #{tpu_custom_call.1} parent=11 // pred_fallthru
          _
        // Predicated region
        $region57: #{tpu_custom_call.1} parent=11 // pred_check
          %p492 = pneg %p332
        $region58: #{tpu_custom_call.1} parent=11 // pred_check_branch
          %494 = sbr.rel (%p492) target = $region60
        $region59: #{tpu_custom_call.1} parent=11 // pred_region
          _
        $region60: #{tpu_custom_call.1} parent=11 // pred_fallthru
          _
        // Predicated region
        $region61: #{tpu_custom_call.1} parent=11 // pred_check
          %p495 = pneg %p353
        $region62: #{tpu_custom_call.1} parent=11 // pred_check_branch
          %497 = sbr.rel (%p495) target = $region64
        $region63: #{tpu_custom_call.1} parent=11 // pred_region
          _
        $region64: #{tpu_custom_call.1} parent=11 // pred_fallthru
          _
        // Predicated region
        $region65: #{tpu_custom_call.1} parent=11 // pred_check
          %p498 = pneg %p374
        $region66: #{tpu_custom_call.1} parent=11 // pred_check_branch
          %500 = sbr.rel (%p498) target = $region68
        $region67: #{tpu_custom_call.1} parent=11 // pred_region
          _
        $region68: #{tpu_custom_call.1} parent=11 // pred_fallthru
          _
      $region12: #{tpu_custom_call.1} parent=5 // pred_fallthru
        _
      %p501 = scmp.lt.s32.totalorder %s28, 2
      // Predicated region
      $region69: #{tpu_custom_call.1} parent=5 // pred_check
        %p502 = pneg %p501
      $region70: #{tpu_custom_call.1} parent=5 // pred_check_branch
        %504 = sbr.rel (%p502) target = $region72
      $region71: #{tpu_custom_call.1} parent=5 // pred_region
        // Predicated region
        $region73: #{tpu_custom_call.1} parent=71 // pred_check
          %p505 = pneg %p48
        $region74: #{tpu_custom_call.1} parent=71 // pred_check_branch
          %507 = sbr.rel (%p505) target = $region76
        $region75: #{tpu_custom_call.1} parent=71 // pred_region
          %p508 = scmp.lt.s32.totalorder %s28, 1
          %s509 = scalar_select %p508, %s28, 1
          %s510 = smul.addr %s509, 8
          %s511 = scalar_lea.vmem %s0, %s510
        $region76: #{tpu_custom_call.1} parent=71 // pred_fallthru
          _
        // Predicated region
        $region77: #{tpu_custom_call.1} parent=71 // pred_check
          %p512 = pneg %p74
        $region78: #{tpu_custom_call.1} parent=71 // pred_check_branch
          %514 = sbr.rel (%p512) target = $region80
        $region79: #{tpu_custom_call.1} parent=71 // pred_region
          %p515 = scmp.lt.s32.totalorder %s28, 1
          %s516 = scalar_select %p515, %s28, 1
          %s517 = smul.addr %s516, 8
          %s518 = scalar_lea.vmem %s1, %s517
        $region80: #{tpu_custom_call.1} parent=71 // pred_fallthru
          _
      $region72: #{tpu_custom_call.1} parent=5 // pred_fallthru
        _
      %p519 = scmp.le.s32.totalorder 1, %s28
      %p520 = scmp.lt.s32.totalorder %s28, 3
      %p521 = pnand %p519, %p520
      %p522 = pneg %p521
      // Predicated region
      $region81: #{tpu_custom_call.1} parent=5 // pred_check
        _
      $region82: #{tpu_custom_call.1} parent=5 // pred_check_branch
        %524 = sbr.rel (%p521) target = $region84
      $region83: #{tpu_custom_call.1} parent=5 // pred_region
        %s525 = ssub.s32 %s28, 1
        // Predicated region
        $region85: #{tpu_custom_call.1} parent=83 // pred_check
          %p526 = pneg %p143
        $region86: #{tpu_custom_call.1} parent=83 // pred_check_branch
          %528 = sbr.rel (%p526) target = $region88
        $region87: #{tpu_custom_call.1} parent=83 // pred_region
          %529 = dma.done [#allocation3], 256
        $region88: #{tpu_custom_call.1} parent=83 // pred_fallthru
          _
        // Predicated region
        $region89: #{tpu_custom_call.1} parent=83 // pred_check
          %p530 = pneg %p185
        $region90: #{tpu_custom_call.1} parent=83 // pred_check_branch
          %532 = sbr.rel (%p530) target = $region92
        $region91: #{tpu_custom_call.1} parent=83 // pred_region
          %533 = dma.done [#allocation6], 256
        $region92: #{tpu_custom_call.1} parent=83 // pred_fallthru
          _
        // Predicated region
        $region93: #{tpu_custom_call.1} parent=83 // pred_check
          %p534 = pneg %p206
        $region94: #{tpu_custom_call.1} parent=83 // pred_check_branch
          %536 = sbr.rel (%p534) target = $region96
        $region95: #{tpu_custom_call.1} parent=83 // pred_region
          %537 = dma.done [#allocation6], 16
        $region96: #{tpu_custom_call.1} parent=83 // pred_fallthru
          _
        // Predicated region
        $region97: #{tpu_custom_call.1} parent=83 // pred_check
          %p538 = pneg %p227
        $region98: #{tpu_custom_call.1} parent=83 // pred_check_branch
          %540 = sbr.rel (%p538) target = $region100
        $region99: #{tpu_custom_call.1} parent=83 // pred_region
          %541 = dma.done [#allocation9], 16
        $region100: #{tpu_custom_call.1} parent=83 // pred_fallthru
          _
        // Predicated region
        $region101: #{tpu_custom_call.1} parent=83 // pred_check
          %p542 = pneg %p248
        $region102: #{tpu_custom_call.1} parent=83 // pred_check_branch
          %544 = sbr.rel (%p542) target = $region104
        $region103: #{tpu_custom_call.1} parent=83 // pred_region
          %545 = dma.done [#allocation9], 16
        $region104: #{tpu_custom_call.1} parent=83 // pred_fallthru
          _
        %p546 = scmp.lt.s32.totalorder %s33, 1
        %s547 = scalar_select %p546, %s33, 1
        %s548 = smul.addr %s547, 8
        %s549 = scalar_lea.vmem %s0, %s548
        %p550 = pneg %p54
        %p551 = pneg %p51
        %p552 = scmp.lt.s32.totalorder %s33, 1
        %s553 = scalar_select %p552, %s33, 1
        %s554 = smul.addr %s553, 8
        %s555 = scalar_lea.vmem %s1, %s554
        %p556 = pneg %p80
        %p557 = pneg %p77
        %p558 = pneg %p101
        %p559 = pneg %p98
        %p560 = pneg %p122
        %p561 = pneg %p119
        %p562 = pneg %p143
        %p563 = pneg %p140
        %p564 = pneg %p164
        %p565 = pneg %p161
        %p566 = pneg %p185
        %p567 = pneg %p182
        %p568 = pneg %p206
        %p569 = pneg %p203
        %p570 = pneg %p227
        %p571 = pneg %p224
        %p572 = pneg %p248
        %p573 = pneg %p245
        %p574 = pneg %p269
        %p575 = pneg %p266
        %p576 = pneg %p290
        %p577 = pneg %p287
        %p578 = pneg %p311
        %p579 = pneg %p308
        %p580 = pneg %p332
        %p581 = pneg %p329
        %p582 = pneg %p353
        %p583 = pneg %p350
        %p584 = pneg %p374
        %p585 = pneg %p371
        %p586 = pneg %p400
        %p587 = pneg %p397
        %s588 = sand.u32 %s387, 1
        %s589 = scalar_lea.sflag [#allocation4], %s588
        %s590 = sand.u32 %s387, 1
        %s591 = smul.addr %s590, 8
        %s592 = scalar_lea.vmem [#allocation11], %s591
        %p593 = scmp.lt.s32.totalorder %s33, 1
        %s594 = scalar_select %p593, %s33, 1
        %s595 = smul.addr %s594, 8
        %s596 = scalar_lea.vmem %s0, %s595
        %p597 = scmp.lt.s32.totalorder %s33, 1
        %s598 = scalar_select %p597, %s33, 1
        %s599 = smul.addr %s598, 8
        %s600 = scalar_lea.vmem %s1, %s599
        %v602 = vld [vmem:[%s596] sm:$0xff]
        %v603 = vpack.c.bf16 %v602, %v602
        %v604 = vld [vmem:[%s600] sm:$0xff]
        %v605 = vpack.c.bf16 %v604, %v604
        %v606 = vadd.bf16 %v603, %v605
        %v607 = vld [vmem:[%s2] sm:$0xf]
        %v608 = vld [vmem:[%s2 + $0x4] sm:$0xf]
        %v609 = vld [vmem:[%s2 + $0x8] sm:$0xf]
        %v610 = vld [vmem:[%s2 + $0xc] sm:$0xf]
        %v611 = vld [vmem:[%s3] sm:$0x1]
        %v613 = vlaneseq
        %v614 = vshrl.u32 %v613, 7
        %v615 = vsub.s32 0, %v614
        %v616 = vrot.slane %v611, %v615
        %v622 = vunpack.c.l.b16 %v607
        %v623 = vunpack.c.l.b16 %v608
        %v624 = vunpack.c.l.b16 %v609
        %v625 = vunpack.c.l.b16 %v610
        %v626 = vpack.c.b16 %v623, %v622
        %v627 = vpack.c.b16 %v625, %v624
        %vm630 = vcmask 261120
        %v632 = vsel %vm630, %v606, 0
        %634 = vmatprep.subr.bf16.mxu0 0
        %635 = vmatpush1.bf16.msra.mxu0 %v626
        %636 = vmatprep.subr.bf16.mxu0 0
        %637 = vmatpush1.bf16.msra.mxu0 %v627
        %638 = vmatprep.subr.bf16.mxu0 0
        %639 = vmatpush1.bf16.msra.mxu0 0
        %640 = vmatprep.subr.bf16.mxu0 0
        %641 = vmatpush1.bf16.msra.mxu0 0
        %642 = vmatprep.subr.bf16.mxu0 0
        %643 = vmatpush1.bf16.msra.mxu0 0
        %644 = vmatprep.subr.bf16.mxu0 0
        %645 = vmatpush1.bf16.msra.mxu0 0
        %646 = vmatprep.subr.bf16.mxu0 0
        %647 = vmatpush1.bf16.msra.mxu0 0
        %648 = vmatprep.subr.bf16.mxu0 0
        %649 = vmatpush1.bf16.msra.mxu0 0
        %650 = vmatprep.subr.bf16.mxu0 0
        %651 = vmatpush1.bf16.msra.mxu0 0
        %652 = vmatprep.subr.bf16.mxu0 0
        %653 = vmatpush1.bf16.msra.mxu0 0
        %654 = vmatprep.subr.bf16.mxu0 0
        %655 = vmatpush1.bf16.msra.mxu0 0
        %656 = vmatprep.subr.bf16.mxu0 0
        %657 = vmatpush1.bf16.msra.mxu0 0
        %658 = vmatprep.subr.bf16.mxu0 0
        %659 = vmatpush1.bf16.msra.mxu0 0
        %660 = vmatprep.subr.bf16.mxu0 0
        %661 = vmatpush1.bf16.msra.mxu0 0
        %662 = vmatprep.subr.bf16.mxu0 0
        %663 = vmatpush1.bf16.msra.mxu0 0
        %664 = vmatprep.subr.bf16.mxu0 0
        %665 = vmatpush1.bf16.msra.mxu0 0
        %666 = vmatprep.mubr.bf16.mxu0 0
        %667 = vmatmul.mubr.bf16.gmra.mrb[0].mxu0 %v632
        %v668 = vpop.f32.mrb[0].mxu0
        %v669 = vadd.f32 %v616, %v668
        %v670 = vpop.f32.mrb[0].mxu0
        %v671 = vpop.f32.mrb[0].mxu0
        %v672 = vpop.f32.mrb[0].mxu0
        %673 = vdwg.mxu0
        %v674 = vld [vmem:[#allocation2] sm:$0xf]
        %v675 = vld [vmem:[#allocation2 + $0x4] sm:$0xf]
        %v676 = vld [vmem:[#allocation2 + $0x8] sm:$0xf]
        %v677 = vld [vmem:[#allocation2 + $0xc] sm:$0xf]
        %v678 = vld [vmem:[%s5] sm:$0x1]
        %v680 = vlaneseq
        %v681 = vshrl.u32 %v680, 7
        %v682 = vsub.s32 0, %v681
        %v683 = vrot.slane %v678, %v682
        %v689 = vunpack.c.l.b16 %v674
        %v690 = vunpack.c.l.b16 %v675
        %v691 = vunpack.c.l.b16 %v676
        %v692 = vunpack.c.l.b16 %v677
        %v693 = vpack.c.b16 %v690, %v689
        %v694 = vpack.c.b16 %v692, %v691
        %v698 = vsel %vm630, %v603, 0
        %700 = vmatprep.subr.bf16.mxu0 0
        %701 = vmatpush1.bf16.msra.mxu0 %v693
        %702 = vmatprep.subr.bf16.mxu0 0
        %703 = vmatpush1.bf16.msra.mxu0 %v694
        %704 = vmatprep.subr.bf16.mxu0 0
        %705 = vmatpush1.bf16.msra.mxu0 0
        %706 = vmatprep.subr.bf16.mxu0 0
        %707 = vmatpush1.bf16.msra.mxu0 0
        %708 = vmatprep.subr.bf16.mxu0 0
        %709 = vmatpush1.bf16.msra.mxu0 0
        %710 = vmatprep.subr.bf16.mxu0 0
        %711 = vmatpush1.bf16.msra.mxu0 0
        %712 = vmatprep.subr.bf16.mxu0 0
        %713 = vmatpush1.bf16.msra.mxu0 0
        %714 = vmatprep.subr.bf16.mxu0 0
        %715 = vmatpush1.bf16.msra.mxu0 0
        %716 = vmatprep.subr.bf16.mxu0 0
        %717 = vmatpush1.bf16.msra.mxu0 0
        %718 = vmatprep.subr.bf16.mxu0 0
        %719 = vmatpush1.bf16.msra.mxu0 0
        %720 = vmatprep.subr.bf16.mxu0 0
        %721 = vmatpush1.bf16.msra.mxu0 0
        %722 = vmatprep.subr.bf16.mxu0 0
        %723 = vmatpush1.bf16.msra.mxu0 0
        %724 = vmatprep.subr.bf16.mxu0 0
        %725 = vmatpush1.bf16.msra.mxu0 0
        %726 = vmatprep.subr.bf16.mxu0 0
        %727 = vmatpush1.bf16.msra.mxu0 0
        %728 = vmatprep.subr.bf16.mxu0 0
        %729 = vmatpush1.bf16.msra.mxu0 0
        %730 = vmatprep.subr.bf16.mxu0 0
        %731 = vmatpush1.bf16.msra.mxu0 0
        %732 = vmatprep.mubr.bf16.mxu0 0
        %733 = vmatmul.mubr.bf16.gmra.mrb[0].mxu0 %v698
        %v734 = vpop.f32.mrb[0].mxu0
        %v735 = vadd.f32 %v683, %v734
        %v736 = vpop.f32.mrb[0].mxu0
        %v737 = vpop.f32.mrb[0].mxu0
        %v738 = vpop.f32.mrb[0].mxu0
        %739 = vdwg.mxu0
        %v740 = vpack.c.bf16 %v669, %v669
        %v741 = vpack.c.bf16 %v735, %v735
        %743 = vrot.lane.b32.xlu0 %v740, 96
        %v744 = vpop.permute.xlu0 %743
        %vm745 = vcmask 64512
        %v747 = vsel %vm745, %v740, 0
        %v750 = vsel %vm745, %v744, 0
        %752 = vmatprep.subr.bf16.mxu0 0
        %753 = vmatpush1.bf16.xpose.msra.mxu0 %v750
        %754 = vmatprep.subr.bf16.mxu0 0
        %755 = vmatpush1.bf16.xpose.msra.mxu0 0
        %756 = vmatprep.subr.bf16.mxu0 0
        %757 = vmatpush1.bf16.xpose.msra.mxu0 0
        %758 = vmatprep.subr.bf16.mxu0 0
        %759 = vmatpush1.bf16.xpose.msra.mxu0 0
        %760 = vmatprep.subr.bf16.mxu0 0
        %761 = vmatpush1.bf16.xpose.msra.mxu0 0
        %762 = vmatprep.subr.bf16.mxu0 0
        %763 = vmatpush1.bf16.xpose.msra.mxu0 0
        %764 = vmatprep.subr.bf16.mxu0 0
        %765 = vmatpush1.bf16.xpose.msra.mxu0 0
        %766 = vmatprep.subr.bf16.mxu0 0
        %767 = vmatpush1.bf16.xpose.msra.mxu0 0
        %768 = vmatprep.subr.bf16.mxu0 0
        %769 = vmatpush1.bf16.xpose.msra.mxu0 0
        %770 = vmatprep.subr.bf16.mxu0 0
        %771 = vmatpush1.bf16.xpose.msra.mxu0 0
        %772 = vmatprep.subr.bf16.mxu0 0
        %773 = vmatpush1.bf16.xpose.msra.mxu0 0
        %774 = vmatprep.subr.bf16.mxu0 0
        %775 = vmatpush1.bf16.xpose.msra.mxu0 0
        %776 = vmatprep.subr.bf16.mxu0 0
        %777 = vmatpush1.bf16.xpose.msra.mxu0 0
        %778 = vmatprep.subr.bf16.mxu0 0
        %779 = vmatpush1.bf16.xpose.msra.mxu0 0
        %780 = vmatprep.subr.bf16.mxu0 0
        %781 = vmatpush1.bf16.xpose.msra.mxu0 0
        %782 = vmatprep.subr.bf16.mxu0 0
        %783 = vmatpush1.bf16.xpose.msra.mxu0 0
        %784 = vmatprep.mubr.bf16.mxu0 0
        %785 = vmatmul.mubr.bf16.gmra.mrb[0].mxu0 %v747
        %v786 = vpop.f32.mrb[0].mxu0
        %v787 = vadd.f32 0.0, %v786
        %v788 = vpop.f32.mrb[0].mxu0
        %v789 = vpop.f32.mrb[0].mxu0
        %v790 = vpop.f32.mrb[0].mxu0
        %791 = vdwg.mxu0
        %v792 = vsel %vm745, %v787, -inf
        %793 = vmax.xlane.f32.xlu0 %v792
        %v794 = vpop.xlane.xlu0 %793
        %v795 = vsub.f32 %v787, %v794
        %v796 = vmul.f32 %v795, 1.442695
        %v797 = vpow.pop %v796
        %v798 = vsel %vm745, %v797, 0.0
        %799 = vadd.xlane.f32.xlu0 %v798
        %v800 = vpop.xlane.xlu0 %799
        %v801 = vpack.c.bf16 %v797, %v797
        %v803 = vsel %vm745, %v801, 0
        %vm805 = vcmask 1043456
        %v807 = vsel %vm805, %v741, 0
        %809 = vmatprep.subr.bf16.mxu0 0
        %810 = vmatpush1.bf16.msra.mxu0 %v807
        %811 = vmatprep.subr.bf16.mxu0 0
        %812 = vmatpush1.bf16.msra.mxu0 0
        %813 = vmatprep.subr.bf16.mxu0 0
        %814 = vmatpush1.bf16.msra.mxu0 0
        %815 = vmatprep.subr.bf16.mxu0 0
        %816 = vmatpush1.bf16.msra.mxu0 0
        %817 = vmatprep.subr.bf16.mxu0 0
        %818 = vmatpush1.bf16.msra.mxu0 0
        %819 = vmatprep.subr.bf16.mxu0 0
        %820 = vmatpush1.bf16.msra.mxu0 0
        %821 = vmatprep.subr.bf16.mxu0 0
        %822 = vmatpush1.bf16.msra.mxu0 0
        %823 = vmatprep.subr.bf16.mxu0 0
        %824 = vmatpush1.bf16.msra.mxu0 0
        %825 = vmatprep.subr.bf16.mxu0 0
        %826 = vmatpush1.bf16.msra.mxu0 0
        %827 = vmatprep.subr.bf16.mxu0 0
        %828 = vmatpush1.bf16.msra.mxu0 0
        %829 = vmatprep.subr.bf16.mxu0 0
        %830 = vmatpush1.bf16.msra.mxu0 0
        %831 = vmatprep.subr.bf16.mxu0 0
        %832 = vmatpush1.bf16.msra.mxu0 0
        %833 = vmatprep.subr.bf16.mxu0 0
        %834 = vmatpush1.bf16.msra.mxu0 0
        %835 = vmatprep.subr.bf16.mxu0 0
        %836 = vmatpush1.bf16.msra.mxu0 0
        %837 = vmatprep.subr.bf16.mxu0 0
        %838 = vmatpush1.bf16.msra.mxu0 0
        %839 = vmatprep.subr.bf16.mxu0 0
        %840 = vmatpush1.bf16.msra.mxu0 0
        %841 = vmatprep.mubr.bf16.mxu0 0
        %842 = vmatmul.mubr.bf16.gmra.mrb[0].mxu0 %v803
        %v843 = vpop.f32.mrb[0].mxu0
        %v844 = vadd.f32 0.0, %v843
        %v845 = vpop.f32.mrb[0].mxu0
        %v846 = vpop.f32.mrb[0].mxu0
        %v847 = vpop.f32.mrb[0].mxu0
        %848 = vdwg.mxu0
        %v849 = vrcp.pop %v800
        %v850 = vmul.f32 %v844, %v849
        %851 = vrot.lane.b32.xlu0 %v740, 120
        %v852 = vpop.permute.xlu0 %851
        %853 = vrot.lane.b32.xlu0 %v740, 88
        %v854 = vpop.permute.xlu0 %853
        %v856 = vsel %vm745, %v852, 0
        %v859 = vsel %vm745, %v854, 0
        %861 = vmatprep.subr.bf16.mxu0 0
        %862 = vmatpush1.bf16.xpose.msra.mxu0 %v859
        %863 = vmatprep.subr.bf16.mxu0 0
        %864 = vmatpush1.bf16.xpose.msra.mxu0 0
        %865 = vmatprep.subr.bf16.mxu0 0
        %866 = vmatpush1.bf16.xpose.msra.mxu0 0
        %867 = vmatprep.subr.bf16.mxu0 0
        %868 = vmatpush1.bf16.xpose.msra.mxu0 0
        %869 = vmatprep.subr.bf16.mxu0 0
        %870 = vmatpush1.bf16.xpose.msra.mxu0 0
        %871 = vmatprep.subr.bf16.mxu0 0
        %872 = vmatpush1.bf16.xpose.msra.mxu0 0
        %873 = vmatprep.subr.bf16.mxu0 0
        %874 = vmatpush1.bf16.xpose.msra.mxu0 0
        %875 = vmatprep.subr.bf16.mxu0 0
        %876 = vmatpush1.bf16.xpose.msra.mxu0 0
        %877 = vmatprep.subr.bf16.mxu0 0
        %878 = vmatpush1.bf16.xpose.msra.mxu0 0
        %879 = vmatprep.subr.bf16.mxu0 0
        %880 = vmatpush1.bf16.xpose.msra.mxu0 0
        %881 = vmatprep.subr.bf16.mxu0 0
        %882 = vmatpush1.bf16.xpose.msra.mxu0 0
        %883 = vmatprep.subr.bf16.mxu0 0
        %884 = vmatpush1.bf16.xpose.msra.mxu0 0
        %885 = vmatprep.subr.bf16.mxu0 0
        %886 = vmatpush1.bf16.xpose.msra.mxu0 0
        %887 = vmatprep.subr.bf16.mxu0 0
        %888 = vmatpush1.bf16.xpose.msra.mxu0 0
        %889 = vmatprep.subr.bf16.mxu0 0
        %890 = vmatpush1.bf16.xpose.msra.mxu0 0
        %891 = vmatprep.subr.bf16.mxu0 0
        %892 = vmatpush1.bf16.xpose.msra.mxu0 0
        %893 = vmatprep.mubr.bf16.mxu0 0
        %894 = vmatmul.mubr.bf16.gmra.mrb[0].mxu0 %v856
        %v895 = vpop.f32.mrb[0].mxu0
        %v896 = vadd.f32 0.0, %v895
        %v897 = vpop.f32.mrb[0].mxu0
        %v898 = vpop.f32.mrb[0].mxu0
        %v899 = vpop.f32.mrb[0].mxu0
        %900 = vdwg.mxu0
        %v901 = vsel %vm745, %v896, -inf
        %902 = vmax.xlane.f32.xlu0 %v901
        %v903 = vpop.xlane.xlu0 %902
        %v904 = vsub.f32 %v896, %v903
        %v905 = vmul.f32 %v904, 1.442695
        %v906 = vpow.pop %v905
        %v907 = vsel %vm745, %v906, 0.0
        %908 = vadd.xlane.f32.xlu0 %v907
        %v909 = vpop.xlane.xlu0 %908
        %v910 = vpack.c.bf16 %v906, %v906
        %912 = vrot.lane.b32.xlu0 %v741, 120
        %v913 = vpop.permute.xlu0 %912
        %v915 = vsel %vm745, %v910, 0
        %v918 = vsel %vm805, %v913, 0
        %920 = vmatprep.subr.bf16.mxu0 0
        %921 = vmatpush1.bf16.msra.mxu0 %v918
        %922 = vmatprep.subr.bf16.mxu0 0
        %923 = vmatpush1.bf16.msra.mxu0 0
        %924 = vmatprep.subr.bf16.mxu0 0
        %925 = vmatpush1.bf16.msra.mxu0 0
        %926 = vmatprep.subr.bf16.mxu0 0
        %927 = vmatpush1.bf16.msra.mxu0 0
        %928 = vmatprep.subr.bf16.mxu0 0
        %929 = vmatpush1.bf16.msra.mxu0 0
        %930 = vmatprep.subr.bf16.mxu0 0
        %931 = vmatpush1.bf16.msra.mxu0 0
        %932 = vmatprep.subr.bf16.mxu0 0
        %933 = vmatpush1.bf16.msra.mxu0 0
        %934 = vmatprep.subr.bf16.mxu0 0
        %935 = vmatpush1.bf16.msra.mxu0 0
        %936 = vmatprep.subr.bf16.mxu0 0
        %937 = vmatpush1.bf16.msra.mxu0 0
        %938 = vmatprep.subr.bf16.mxu0 0
        %939 = vmatpush1.bf16.msra.mxu0 0
        %940 = vmatprep.subr.bf16.mxu0 0
        %941 = vmatpush1.bf16.msra.mxu0 0
        %942 = vmatprep.subr.bf16.mxu0 0
        %943 = vmatpush1.bf16.msra.mxu0 0
        %944 = vmatprep.subr.bf16.mxu0 0
        %945 = vmatpush1.bf16.msra.mxu0 0
        %946 = vmatprep.subr.bf16.mxu0 0
        %947 = vmatpush1.bf16.msra.mxu0 0
        %948 = vmatprep.subr.bf16.mxu0 0
        %949 = vmatpush1.bf16.msra.mxu0 0
        %950 = vmatprep.subr.bf16.mxu0 0
        %951 = vmatpush1.bf16.msra.mxu0 0
        %952 = vmatprep.mubr.bf16.mxu0 0
        %953 = vmatmul.mubr.bf16.gmra.mrb[0].mxu0 %v915
        %v954 = vpop.f32.mrb[0].mxu0
        %v955 = vadd.f32 0.0, %v954
        %v956 = vpop.f32.mrb[0].mxu0
        %v957 = vpop.f32.mrb[0].mxu0
        %v958 = vpop.f32.mrb[0].mxu0
        %959 = vdwg.mxu0
        %v960 = vrcp.pop %v909
        %v961 = vmul.f32 %v955, %v960
        %962 = vrot.lane.b32.xlu0 %v740, 112
        %v963 = vpop.permute.xlu0 %962
        %964 = vrot.lane.b32.xlu0 %v740, 80
        %v965 = vpop.permute.xlu0 %964
        %v967 = vsel %vm745, %v963, 0
        %v970 = vsel %vm745, %v965, 0
        %972 = vmatprep.subr.bf16.mxu0 0
        %973 = vmatpush1.bf16.xpose.msra.mxu0 %v970
        %974 = vmatprep.subr.bf16.mxu0 0
        %975 = vmatpush1.bf16.xpose.msra.mxu0 0
        %976 = vmatprep.subr.bf16.mxu0 0
        %977 = vmatpush1.bf16.xpose.msra.mxu0 0
        %978 = vmatprep.subr.bf16.mxu0 0
        %979 = vmatpush1.bf16.xpose.msra.mxu0 0
        %980 = vmatprep.subr.bf16.mxu0 0
        %981 = vmatpush1.bf16.xpose.msra.mxu0 0
        %982 = vmatprep.subr.bf16.mxu0 0
        %983 = vmatpush1.bf16.xpose.msra.mxu0 0
        %984 = vmatprep.subr.bf16.mxu0 0
        %985 = vmatpush1.bf16.xpose.msra.mxu0 0
        %986 = vmatprep.subr.bf16.mxu0 0
        %987 = vmatpush1.bf16.xpose.msra.mxu0 0
        %988 = vmatprep.subr.bf16.mxu0 0
        %989 = vmatpush1.bf16.xpose.msra.mxu0 0
        %990 = vmatprep.subr.bf16.mxu0 0
        %991 = vmatpush1.bf16.xpose.msra.mxu0 0
        %992 = vmatprep.subr.bf16.mxu0 0
        %993 = vmatpush1.bf16.xpose.msra.mxu0 0
        %994 = vmatprep.subr.bf16.mxu0 0
        %995 = vmatpush1.bf16.xpose.msra.mxu0 0
        %996 = vmatprep.subr.bf16.mxu0 0
        %997 = vmatpush1.bf16.xpose.msra.mxu0 0
        %998 = vmatprep.subr.bf16.mxu0 0
        %999 = vmatpush1.bf16.xpose.msra.mxu0 0
        %1000 = vmatprep.subr.bf16.mxu0 0
        %1001 = vmatpush1.bf16.xpose.msra.mxu0 0
        %1002 = vmatprep.subr.bf16.mxu0 0
        %1003 = vmatpush1.bf16.xpose.msra.mxu0 0
        %1004 = vmatprep.mubr.bf16.mxu0 0
        %1005 = vmatmul.mubr.bf16.gmra.mrb[0].mxu0 %v967
        %v1006 = vpop.f32.mrb[0].mxu0
        %v1007 = vadd.f32 0.0, %v1006
        %v1008 = vpop.f32.mrb[0].mxu0
        %v1009 = vpop.f32.mrb[0].mxu0
        %v1010 = vpop.f32.mrb[0].mxu0
        %1011 = vdwg.mxu0
        %v1012 = vsel %vm745, %v1007, -inf
        %1013 = vmax.xlane.f32.xlu0 %v1012
        %v1014 = vpop.xlane.xlu0 %1013
        %v1015 = vsub.f32 %v1007, %v1014
        %v1016 = vmul.f32 %v1015, 1.442695
        %v1017 = vpow.pop %v1016
        %v1018 = vsel %vm745, %v1017, 0.0
        %1019 = vadd.xlane.f32.xlu0 %v1018
        %v1020 = vpop.xlane.xlu0 %1019
        %v1021 = vpack.c.bf16 %v1017, %v1017
        %1022 = vrot.lane.b32.xlu0 %v741, 112
        %v1023 = vpop.permute.xlu0 %1022
        %v1025 = vsel %vm745, %v1021, 0
        %v1028 = vsel %vm805, %v1023, 0
        %1030 = vmatprep.subr.bf16.mxu0 0
        %1031 = vmatpush1.bf16.msra.mxu0 %v1028
        %1032 = vmatprep.subr.bf16.mxu0 0
        %1033 = vmatpush1.bf16.msra.mxu0 0
        %1034 = vmatprep.subr.bf16.mxu0 0
        %1035 = vmatpush1.bf16.msra.mxu0 0
        %1036 = vmatprep.subr.bf16.mxu0 0
        %1037 = vmatpush1.bf16.msra.mxu0 0
        %1038 = vmatprep.subr.bf16.mxu0 0
        %1039 = vmatpush1.bf16.msra.mxu0 0
        %1040 = vmatprep.subr.bf16.mxu0 0
        %1041 = vmatpush1.bf16.msra.mxu0 0
        %1042 = vmatprep.subr.bf16.mxu0 0
        %1043 = vmatpush1.bf16.msra.mxu0 0
        %1044 = vmatprep.subr.bf16.mxu0 0
        %1045 = vmatpush1.bf16.msra.mxu0 0
        %1046 = vmatprep.subr.bf16.mxu0 0
        %1047 = vmatpush1.bf16.msra.mxu0 0
        %1048 = vmatprep.subr.bf16.mxu0 0
        %1049 = vmatpush1.bf16.msra.mxu0 0
        %1050 = vmatprep.subr.bf16.mxu0 0
        %1051 = vmatpush1.bf16.msra.mxu0 0
        %1052 = vmatprep.subr.bf16.mxu0 0
        %1053 = vmatpush1.bf16.msra.mxu0 0
        %1054 = vmatprep.subr.bf16.mxu0 0
        %1055 = vmatpush1.bf16.msra.mxu0 0
        %1056 = vmatprep.subr.bf16.mxu0 0
        %1057 = vmatpush1.bf16.msra.mxu0 0
        %1058 = vmatprep.subr.bf16.mxu0 0
        %1059 = vmatpush1.bf16.msra.mxu0 0
        %1060 = vmatprep.subr.bf16.mxu0 0
        %1061 = vmatpush1.bf16.msra.mxu0 0
        %1062 = vmatprep.mubr.bf16.mxu0 0
        %1063 = vmatmul.mubr.bf16.gmra.mrb[0].mxu0 %v1025
        %v1064 = vpop.f32.mrb[0].mxu0
        %v1065 = vadd.f32 0.0, %v1064
        %v1066 = vpop.f32.mrb[0].mxu0
        %v1067 = vpop.f32.mrb[0].mxu0
        %v1068 = vpop.f32.mrb[0].mxu0
        %1069 = vdwg.mxu0
        %v1070 = vrcp.pop %v1020
        %v1071 = vmul.f32 %v1065, %v1070
        %1072 = vrot.lane.b32.xlu0 %v740, 104
        %v1073 = vpop.permute.xlu0 %1072
        %1074 = vrot.lane.b32.xlu0 %v740, 72
        %v1075 = vpop.permute.xlu0 %1074
        %v1077 = vsel %vm745, %v1073, 0
        %v1080 = vsel %vm745, %v1075, 0
        %1082 = vmatprep.subr.bf16.mxu0 0
        %1083 = vmatpush1.bf16.xpose.msra.mxu0 %v1080
        %1084 = vmatprep.subr.bf16.mxu0 0
        %1085 = vmatpush1.bf16.xpose.msra.mxu0 0
        %1086 = vmatprep.subr.bf16.mxu0 0
        %1087 = vmatpush1.bf16.xpose.msra.mxu0 0
        %1088 = vmatprep.subr.bf16.mxu0 0
        %1089 = vmatpush1.bf16.xpose.msra.mxu0 0
        %1090 = vmatprep.subr.bf16.mxu0 0
        %1091 = vmatpush1.bf16.xpose.msra.mxu0 0
        %1092 = vmatprep.subr.bf16.mxu0 0
        %1093 = vmatpush1.bf16.xpose.msra.mxu0 0
        %1094 = vmatprep.subr.bf16.mxu0 0
        %1095 = vmatpush1.bf16.xpose.msra.mxu0 0
        %1096 = vmatprep.subr.bf16.mxu0 0
        %1097 = vmatpush1.bf16.xpose.msra.mxu0 0
        %1098 = vmatprep.subr.bf16.mxu0 0
        %1099 = vmatpush1.bf16.xpose.msra.mxu0 0
        %1100 = vmatprep.subr.bf16.mxu0 0
        %1101 = vmatpush1.bf16.xpose.msra.mxu0 0
        %1102 = vmatprep.subr.bf16.mxu0 0
        %1103 = vmatpush1.bf16.xpose.msra.mxu0 0
        %1104 = vmatprep.subr.bf16.mxu0 0
        %1105 = vmatpush1.bf16.xpose.msra.mxu0 0
        %1106 = vmatprep.subr.bf16.mxu0 0
        %1107 = vmatpush1.bf16.xpose.msra.mxu0 0
        %1108 = vmatprep.subr.bf16.mxu0 0
        %1109 = vmatpush1.bf16.xpose.msra.mxu0 0
        %1110 = vmatprep.subr.bf16.mxu0 0
        %1111 = vmatpush1.bf16.xpose.msra.mxu0 0
        %1112 = vmatprep.subr.bf16.mxu0 0
        %1113 = vmatpush1.bf16.xpose.msra.mxu0 0
        %1114 = vmatprep.mubr.bf16.mxu0 0
        %1115 = vmatmul.mubr.bf16.gmra.mrb[0].mxu0 %v1077
        %v1116 = vpop.f32.mrb[0].mxu0
        %v1117 = vadd.f32 0.0, %v1116
        %v1118 = vpop.f32.mrb[0].mxu0
        %v1119 = vpop.f32.mrb[0].mxu0
        %v1120 = vpop.f32.mrb[0].mxu0
        %1121 = vdwg.mxu0
        %v1122 = vsel %vm745, %v1117, -inf
        %1123 = vmax.xlane.f32.xlu0 %v1122
        %v1124 = vpop.xlane.xlu0 %1123
        %v1125 = vsub.f32 %v1117, %v1124
        %v1126 = vmul.f32 %v1125, 1.442695
        %v1127 = vpow.pop %v1126
        %v1128 = vsel %vm745, %v1127, 0.0
        %1129 = vadd.xlane.f32.xlu0 %v1128
        %v1130 = vpop.xlane.xlu0 %1129
        %v1131 = vpack.c.bf16 %v1127, %v1127
        %1132 = vrot.lane.b32.xlu0 %v741, 104
        %v1133 = vpop.permute.xlu0 %1132
        %v1135 = vsel %vm745, %v1131, 0
        %v1138 = vsel %vm805, %v1133, 0
        %1140 = vmatprep.subr.bf16.mxu0 0
        %1141 = vmatpush1.bf16.msra.mxu0 %v1138
        %1142 = vmatprep.subr.bf16.mxu0 0
        %1143 = vmatpush1.bf16.msra.mxu0 0
        %1144 = vmatprep.subr.bf16.mxu0 0
        %1145 = vmatpush1.bf16.msra.mxu0 0
        %1146 = vmatprep.subr.bf16.mxu0 0
        %1147 = vmatpush1.bf16.msra.mxu0 0
        %1148 = vmatprep.subr.bf16.mxu0 0
        %1149 = vmatpush1.bf16.msra.mxu0 0
        %1150 = vmatprep.subr.bf16.mxu0 0
        %1151 = vmatpush1.bf16.msra.mxu0 0
        %1152 = vmatprep.subr.bf16.mxu0 0
        %1153 = vmatpush1.bf16.msra.mxu0 0
        %1154 = vmatprep.subr.bf16.mxu0 0
        %1155 = vmatpush1.bf16.msra.mxu0 0
        %1156 = vmatprep.subr.bf16.mxu0 0
        %1157 = vmatpush1.bf16.msra.mxu0 0
        %1158 = vmatprep.subr.bf16.mxu0 0
        %1159 = vmatpush1.bf16.msra.mxu0 0
        %1160 = vmatprep.subr.bf16.mxu0 0
        %1161 = vmatpush1.bf16.msra.mxu0 0
        %1162 = vmatprep.subr.bf16.mxu0 0
        %1163 = vmatpush1.bf16.msra.mxu0 0
        %1164 = vmatprep.subr.bf16.mxu0 0
        %1165 = vmatpush1.bf16.msra.mxu0 0
        %1166 = vmatprep.subr.bf16.mxu0 0
        %1167 = vmatpush1.bf16.msra.mxu0 0
        %1168 = vmatprep.subr.bf16.mxu0 0
        %1169 = vmatpush1.bf16.msra.mxu0 0
        %1170 = vmatprep.subr.bf16.mxu0 0
        %1171 = vmatpush1.bf16.msra.mxu0 0
        %1172 = vmatprep.mubr.bf16.mxu0 0
        %1173 = vmatmul.mubr.bf16.gmra.mrb[0].mxu0 %v1135
        %v1174 = vpop.f32.mrb[0].mxu0
        %v1175 = vadd.f32 0.0, %v1174
        %v1176 = vpop.f32.mrb[0].mxu0
        %v1177 = vpop.f32.mrb[0].mxu0
        %v1178 = vpop.f32.mrb[0].mxu0
        %1179 = vdwg.mxu0
        %v1180 = vrcp.pop %v1130
        %v1181 = vmul.f32 %v1175, %v1180
        %1183 = vrot.lane.b32.xlu0 %v961, 8
        %v1184 = vpop.permute.xlu0 %1183
        %1187 = vrot.lane.b32.xlu0 %v1071, 16
        %v1188 = vpop.permute.xlu0 %1187
        %1191 = vrot.lane.b32.xlu0 %v1181, 24
        %v1192 = vpop.permute.xlu0 %1191
        %v1194 = vsel %vm745, %v850, %v1184
        %vm1195 = vcmask 130048
        %v1196 = vsel %vm1195, %v1194, %v1188
        %vm1197 = vcmask 195584
        %v1198 = vsel %vm1197, %v1196, %v1192
        %v1199 = vpack.c.bf16 %v1198, %v1198
        %v1200 = vld [vmem:[#allocation5] sm:$0xf]
        %v1201 = vld [vmem:[#allocation5 + $0x4] sm:$0xf]
        %v1202 = vld [vmem:[#allocation5 + $0x8] sm:$0xf]
        %v1203 = vld [vmem:[#allocation5 + $0xc] sm:$0xf]
        %v1204 = vld [vmem:[#allocation7] sm:$0x1]
        %v1206 = vlaneseq
        %v1207 = vshrl.u32 %v1206, 7
        %v1208 = vsub.s32 0, %v1207
        %v1209 = vrot.slane %v1204, %v1208
        %v1215 = vunpack.c.l.b16 %v1200
        %v1216 = vunpack.c.l.b16 %v1201
        %v1217 = vunpack.c.l.b16 %v1202
        %v1218 = vunpack.c.l.b16 %v1203
        %v1219 = vpack.c.b16 %v1216, %v1215
        %v1220 = vpack.c.b16 %v1218, %v1217
        %v1224 = vsel %vm630, %v1199, 0
        %1226 = vmatprep.subr.bf16.mxu0 0
        %1227 = vmatpush1.bf16.msra.mxu0 %v1219
        %1228 = vmatprep.subr.bf16.mxu0 0
        %1229 = vmatpush1.bf16.msra.mxu0 %v1220
        %1230 = vmatprep.subr.bf16.mxu0 0
        %1231 = vmatpush1.bf16.msra.mxu0 0
        %1232 = vmatprep.subr.bf16.mxu0 0
        %1233 = vmatpush1.bf16.msra.mxu0 0
        %1234 = vmatprep.subr.bf16.mxu0 0
        %1235 = vmatpush1.bf16.msra.mxu0 0
        %1236 = vmatprep.subr.bf16.mxu0 0
        %1237 = vmatpush1.bf16.msra.mxu0 0
        %1238 = vmatprep.subr.bf16.mxu0 0
        %1239 = vmatpush1.bf16.msra.mxu0 0
        %1240 = vmatprep.subr.bf16.mxu0 0
        %1241 = vmatpush1.bf16.msra.mxu0 0
        %1242 = vmatprep.subr.bf16.mxu0 0
        %1243 = vmatpush1.bf16.msra.mxu0 0
        %1244 = vmatprep.subr.bf16.mxu0 0
        %1245 = vmatpush1.bf16.msra.mxu0 0
        %1246 = vmatprep.subr.bf16.mxu0 0
        %1247 = vmatpush1.bf16.msra.mxu0 0
        %1248 = vmatprep.subr.bf16.mxu0 0
        %1249 = vmatpush1.bf16.msra.mxu0 0
        %1250 = vmatprep.subr.bf16.mxu0 0
        %1251 = vmatpush1.bf16.msra.mxu0 0
        %1252 = vmatprep.subr.bf16.mxu0 0
        %1253 = vmatpush1.bf16.msra.mxu0 0
        %1254 = vmatprep.subr.bf16.mxu0 0
        %1255 = vmatpush1.bf16.msra.mxu0 0
        %1256 = vmatprep.subr.bf16.mxu0 0
        %1257 = vmatpush1.bf16.msra.mxu0 0
        %1258 = vmatprep.mubr.bf16.mxu0 0
        %1259 = vmatmul.mubr.bf16.gmra.mrb[0].mxu0 %v1224
        %v1260 = vpop.f32.mrb[0].mxu0
        %v1261 = vadd.f32 %v1209, %v1260
        %v1262 = vpop.f32.mrb[0].mxu0
        %v1263 = vpop.f32.mrb[0].mxu0
        %v1264 = vpop.f32.mrb[0].mxu0
        %1265 = vdwg.mxu0
        %v1266 = vadd.f32 %v602, %v1261
        %v1267 = vsel %vm630, %v1266, 0.0
        %1268 = vadd.xlane.f32.xlu0 %v1267
        %v1269 = vpop.xlane.xlu0 %1268
        %v1270 = vrcp.pop 32.0
        %v1271 = vmul.f32 %v1269, %v1270
        %v1272 = vsub.f32 %v1266, %v1271
        %v1273 = vmul.f32 %v1272, %v1272
        %v1274 = vsel %vm630, %v1273, 0.0
        %1275 = vadd.xlane.f32.xlu0 %v1274
        %v1276 = vpop.xlane.xlu0 %1275
        %v1277 = vmul.f32 %v1276, %v1270
        %v1278 = vadd.f32 %v1277, 1e-05
        %v1279 = vrsqrt.pop %v1278
        %v1280 = vmul.f32 %v1272, %v1279
        %v1281 = vld [vmem:[#allocation8] sm:$0x1]
        %v1283 = vlaneseq
        %v1284 = vshrl.u32 %v1283, 7
        %v1285 = vsub.s32 0, %v1284
        %v1286 = vrot.slane %v1281, %v1285
        %v1288 = vmul.f32 %v1280, %v1286
        %v1289 = vld [vmem:[#allocation10] sm:$0x1]
        %v1291 = vlaneseq
        %v1292 = vshrl.u32 %v1291, 7
        %v1293 = vsub.s32 0, %v1292
        %v1294 = vrot.slane %v1289, %v1293
        %v1296 = vadd.f32 %v1288, %v1294
        %v1297 = vpack.c.bf16 %v1296, %v1296
        %v1298 = vld [vmem:[%s10] sm:$0xf]
        %v1299 = vld [vmem:[%s10 + $0x4] sm:$0xf]
        %v1300 = vld [vmem:[%s10 + $0x8] sm:$0xf]
        %v1301 = vld [vmem:[%s10 + $0xc] sm:$0xf]
        %v1302 = vld [vmem:[%s11] sm:$0x1]
        %v1304 = vlaneseq
        %v1305 = vshrl.u32 %v1304, 7
        %v1306 = vsub.s32 0, %v1305
        %v1307 = vrot.slane %v1302, %v1306
        %v1313 = vunpack.c.l.b16 %v1298
        %v1314 = vunpack.c.l.b16 %v1299
        %v1315 = vunpack.c.l.b16 %v1300
        %v1316 = vunpack.c.l.b16 %v1301
        %v1317 = vpack.c.b16 %v1314, %v1313
        %v1318 = vpack.c.b16 %v1316, %v1315
        %v1322 = vsel %vm630, %v1297, 0
        %1324 = vmatprep.subr.bf16.mxu0 0
        %1325 = vmatpush1.bf16.msra.mxu0 %v1317
        %1326 = vmatprep.subr.bf16.mxu0 0
        %1327 = vmatpush1.bf16.msra.mxu0 %v1318
        %1328 = vmatprep.subr.bf16.mxu0 0
        %1329 = vmatpush1.bf16.msra.mxu0 0
        %1330 = vmatprep.subr.bf16.mxu0 0
        %1331 = vmatpush1.bf16.msra.mxu0 0
        %1332 = vmatprep.subr.bf16.mxu0 0
        %1333 = vmatpush1.bf16.msra.mxu0 0
        %1334 = vmatprep.subr.bf16.mxu0 0
        %1335 = vmatpush1.bf16.msra.mxu0 0
        %1336 = vmatprep.subr.bf16.mxu0 0
        %1337 = vmatpush1.bf16.msra.mxu0 0
        %1338 = vmatprep.subr.bf16.mxu0 0
        %1339 = vmatpush1.bf16.msra.mxu0 0
        %1340 = vmatprep.subr.bf16.mxu0 0
        %1341 = vmatpush1.bf16.msra.mxu0 0
        %1342 = vmatprep.subr.bf16.mxu0 0
        %1343 = vmatpush1.bf16.msra.mxu0 0
        %1344 = vmatprep.subr.bf16.mxu0 0
        %1345 = vmatpush1.bf16.msra.mxu0 0
        %1346 = vmatprep.subr.bf16.mxu0 0
        %1347 = vmatpush1.bf16.msra.mxu0 0
        %1348 = vmatprep.subr.bf16.mxu0 0
        %1349 = vmatpush1.bf16.msra.mxu0 0
        %1350 = vmatprep.subr.bf16.mxu0 0
        %1351 = vmatpush1.bf16.msra.mxu0 0
        %1352 = vmatprep.subr.bf16.mxu0 0
        %1353 = vmatpush1.bf16.msra.mxu0 0
        %1354 = vmatprep.subr.bf16.mxu0 0
        %1355 = vmatpush1.bf16.msra.mxu0 0
        %1356 = vmatprep.mubr.bf16.mxu0 0
        %1357 = vmatmul.mubr.bf16.gmra.mrb[0].mxu0 %v1322
        %v1358 = vpop.f32.mrb[0].mxu0
        %v1359 = vadd.f32 %v1307, %v1358
        %v1360 = vpop.f32.mrb[0].mxu0
        %v1361 = vpop.f32.mrb[0].mxu0
        %v1362 = vpop.f32.mrb[0].mxu0
        %1363 = vdwg.mxu0
        %v1364 = vmax.f32 %v1359, 0.0
        %v1365 = vpack.c.bf16 %v1364, %v1364
        %v1366 = vld [vmem:[%s12] sm:$0xf]
        %v1367 = vld [vmem:[%s12 + $0x4] sm:$0xf]
        %v1368 = vld [vmem:[%s12 + $0x8] sm:$0xf]
        %v1369 = vld [vmem:[%s12 + $0xc] sm:$0xf]
        %v1370 = vld [vmem:[%s12 + $0x10] sm:$0xf]
        %v1371 = vld [vmem:[%s12 + $0x14] sm:$0xf]
        %v1372 = vld [vmem:[%s12 + $0x18] sm:$0xf]
        %v1373 = vld [vmem:[%s12 + $0x1c] sm:$0xf]
        %v1374 = vld [vmem:[%s13] sm:$0x1]
        %v1376 = vlaneseq
        %v1377 = vshrl.u32 %v1376, 7
        %v1378 = vsub.s32 0, %v1377
        %v1379 = vrot.slane %v1374, %v1378
        %v1389 = vunpack.c.l.b16 %v1366
        %v1390 = vunpack.c.l.b16 %v1367
        %v1391 = vunpack.c.l.b16 %v1368
        %v1392 = vunpack.c.l.b16 %v1369
        %v1393 = vunpack.c.l.b16 %v1370
        %v1394 = vunpack.c.l.b16 %v1371
        %v1395 = vunpack.c.l.b16 %v1372
        %v1396 = vunpack.c.l.b16 %v1373
        %v1397 = vpack.c.b16 %v1390, %v1389
        %v1398 = vpack.c.b16 %v1392, %v1391
        %v1399 = vpack.c.b16 %v1394, %v1393
        %v1400 = vpack.c.b16 %v1396, %v1395
        %vm1405 = vcmask 523264
        %v1407 = vsel %vm1405, %v1365, 0
        %1409 = vmatprep.subr.bf16.mxu0 0
        %1410 = vmatpush1.bf16.msra.mxu0 %v1397
        %1411 = vmatprep.subr.bf16.mxu0 0
        %1412 = vmatpush1.bf16.msra.mxu0 %v1398
        %1413 = vmatprep.subr.bf16.mxu0 0
        %1414 = vmatpush1.bf16.msra.mxu0 %v1399
        %1415 = vmatprep.subr.bf16.mxu0 0
        %1416 = vmatpush1.bf16.msra.mxu0 %v1400
        %1417 = vmatprep.subr.bf16.mxu0 0
        %1418 = vmatpush1.bf16.msra.mxu0 0
        %1419 = vmatprep.subr.bf16.mxu0 0
        %1420 = vmatpush1.bf16.msra.mxu0 0
        %1421 = vmatprep.subr.bf16.mxu0 0
        %1422 = vmatpush1.bf16.msra.mxu0 0
        %1423 = vmatprep.subr.bf16.mxu0 0
        %1424 = vmatpush1.bf16.msra.mxu0 0
        %1425 = vmatprep.subr.bf16.mxu0 0
        %1426 = vmatpush1.bf16.msra.mxu0 0
        %1427 = vmatprep.subr.bf16.mxu0 0
        %1428 = vmatpush1.bf16.msra.mxu0 0
        %1429 = vmatprep.subr.bf16.mxu0 0
        %1430 = vmatpush1.bf16.msra.mxu0 0
        %1431 = vmatprep.subr.bf16.mxu0 0
        %1432 = vmatpush1.bf16.msra.mxu0 0
        %1433 = vmatprep.subr.bf16.mxu0 0
        %1434 = vmatpush1.bf16.msra.mxu0 0
        %1435 = vmatprep.subr.bf16.mxu0 0
        %1436 = vmatpush1.bf16.msra.mxu0 0
        %1437 = vmatprep.subr.bf16.mxu0 0
        %1438 = vmatpush1.bf16.msra.mxu0 0
        %1439 = vmatprep.subr.bf16.mxu0 0
        %1440 = vmatpush1.bf16.msra.mxu0 0
        %1441 = vmatprep.mubr.bf16.mxu0 0
        %1442 = vmatmul.mubr.bf16.gmra.mrb[0].mxu0 %v1407
        %v1443 = vpop.f32.mrb[0].mxu0
        %v1444 = vadd.f32 %v1379, %v1443
        %v1445 = vpop.f32.mrb[0].mxu0
        %v1446 = vpop.f32.mrb[0].mxu0
        %v1447 = vpop.f32.mrb[0].mxu0
        %1448 = vdwg.mxu0
        %v1449 = vadd.f32 %v1296, %v1444
        %v1450 = vsel %vm630, %v1449, 0.0
        %1451 = vadd.xlane.f32.xlu0 %v1450
        %v1452 = vpop.xlane.xlu0 %1451
        %v1453 = vmul.f32 %v1452, %v1270
        %v1454 = vsub.f32 %v1449, %v1453
        %v1455 = vmul.f32 %v1454, %v1454
        %v1456 = vsel %vm630, %v1455, 0.0
        %1457 = vadd.xlane.f32.xlu0 %v1456
        %v1458 = vpop.xlane.xlu0 %1457
        %v1459 = vmul.f32 %v1458, %v1270
        %v1460 = vadd.f32 %v1459, 1e-05
        %v1461 = vrsqrt.pop %v1460
        %v1462 = vmul.f32 %v1454, %v1461
        %v1463 = vld [vmem:[%s14] sm:$0x1]
        %v1465 = vlaneseq
        %v1466 = vshrl.u32 %v1465, 7
        %v1467 = vsub.s32 0, %v1466
        %v1468 = vrot.slane %v1463, %v1467
        %v1470 = vmul.f32 %v1462, %v1468
        %v1471 = vld [vmem:[%s15] sm:$0x1]
        %v1473 = vlaneseq
        %v1474 = vshrl.u32 %v1473, 7
        %v1475 = vsub.s32 0, %v1474
        %v1476 = vrot.slane %v1471, %v1475
        %v1478 = vadd.f32 %v1470, %v1476
        %1479 = vst.msk [vmem:[%s592] sm:$0xff] %vm630, %v1478
        %s1480 = sand.u32 %s387, 1
        %s1481 = scalar_lea.sflag [#allocation4], %s1480
        %s1482 = sand.u32 %s387, 1
        %s1483 = smul.addr %s1482, 8
        %s1484 = scalar_lea.vmem [#allocation11], %s1483
        // Predicated region
        $region105: #{tpu_custom_call.1} parent=83 // pred_check
          %p1485 = pneg %p397
        $region106: #{tpu_custom_call.1} parent=83 // pred_check_branch
          %1487 = sbr.rel (%p1485) target = $region108
        $region107: #{tpu_custom_call.1} parent=83 // pred_region
          %s1489 = ssub.s32 128, 128
          %1490 = vsyncadd %s1481, %s1489
          %s1491 = smul.addr %s33, 128
          %s1492 = scalar_lea.hbm %s16, %s1491
          %s1494 = sshll.u32 %s1484, 4
          %s1495 = int_to_ptr.vmem [resolvable:$true] %s1494
          %1497 = dma.vmem_to_hbm [thread:$0]  %s1495, 128, %s1492, %s1481
        $region108: #{tpu_custom_call.1} parent=83 // pred_fallthru
          _
      $region84: #{tpu_custom_call.1} parent=5 // pred_fallthru
        _
      %p1498 = scmp.le.s32.totalorder 2, %s28
      // Predicated region
      $region109: #{tpu_custom_call.1} parent=5 // pred_check
        %p1499 = pneg %p1498
      $region110: #{tpu_custom_call.1} parent=5 // pred_check_branch
        %1501 = sbr.rel (%p1499) target = $region112
      $region111: #{tpu_custom_call.1} parent=5 // pred_region
        %s1502 = ssub.s32 %s28, 2
        // Predicated region
        $region113: #{tpu_custom_call.1} parent=111 // pred_check
          %p1503 = pneg %p403
        $region114: #{tpu_custom_call.1} parent=111 // pred_check_branch
          %1505 = sbr.rel (%p1503) target = $region116
        $region115: #{tpu_custom_call.1} parent=111 // pred_region
          %s1506 = sand.u32 %s388, 1
          %s1507 = scalar_lea.sflag [#allocation4], %s1506
          %s1508 = sand.u32 %s388, 1
          %s1509 = smul.addr %s1508, 8
          %s1510 = scalar_lea.vmem [#allocation11], %s1509
          %1511 = dma.done %s1507, 128
        $region116: #{tpu_custom_call.1} parent=111 // pred_fallthru
          _
      $region112: #{tpu_custom_call.1} parent=5 // pred_fallthru
        _
    $region6: #{tpu_custom_call.1} parent=1 // loop_footer
      %s32 = sadd.s32 1, %s28
    $region7: #{tpu_custom_call.1} parent=1 // loop_footer_branch
      %27 = sbr.rel target = $region3
    $region8: #{tpu_custom_call.1} parent=1 // loop_exit
      _
    %1512 = vsyncpa [#allocation3], 1
    %s1513 = scalar_lea.sflag [#allocation3], 1
    %1514 = vsyncpa %s1513, 1
    %1515 = vsyncpa [#allocation6], 1
    %1516 = vsyncpa [#allocation9], 1
    %1517 = vsyncpa [#allocation4], 1
    %s1518 = scalar_lea.sflag [#allocation4], 1
    %1519 = vsyncpa %s1518, 1

</llo_original>
